<compile_context>
chip_gen: v5e
topology: v5e:2x2
jax: 0.10.0
libtpu: 0.0.40
codegen_flags: <defaults>
</compile_context>

<pallas_src>
import math

import jax
import jax.numpy as jnp
from jax.experimental import pallas as pl
from jax.experimental.pallas import tpu as pltpu

# ----------------------------- model hyper-parameters -----------------------------
IN_CH = 8                 # in_channels
GCN_CH = [16, 16]         # gcn_channels
GCN_HEADS = [2, 2]        # gcn_heads
DENSE = [32, 32]          # dense_channels
OUT_CH = 4                # out_channels
N_NODES = 16

NEG_SLOPE = 0.2           # GATv2Conv default negative_slope
SQRT_EPS = math.sqrt(1e-5)


# ----------------------------- in-kernel helpers (traced) -----------------------------
def _aggr5(v, inv_n):
    """['sum','mean','std','min','max'] over nodes (axis 0).  Returns list of [1, F] values."""
    s = jnp.sum(v, axis=0, keepdims=True)
    mean = s * inv_n
    mean2 = jnp.sum(v * v, axis=0, keepdims=True) * inv_n
    var = mean2 - mean * mean
    std = jnp.sqrt(jnp.maximum(var, 1e-5))
    std = jnp.where(std <= SQRT_EPS, 0.0, std)          # PyG StdAggregation semantics
    vmin = jnp.min(v, axis=0, keepdims=True)
    vmax = jnp.max(v, axis=0, keepdims=True)
    return [s, mean, std, vmin, vmax]


# ----------------------------- fused forward kernel -----------------------------
def _make_fused_kernel(n_hidden, heads, gcn_ch):
    h0, h1 = heads
    c0, c1 = gcn_ch

    def kernel(*refs):
        (t_ref,                                          # SMEM scalar: softmax-aggr temperature
         x_ref, maskb_ref,
         w1_ref, b1_ref, att1_ref, bias1_ref,
         w2_ref, b2_ref, att2_ref, bias2_ref) = refs[:11]
        fc_refs = refs[11:-1]       # fc1 w/b, hidden w/b pairs, fc2 w/b
        out_ref = refs[-1]

        x = x_ref[...]                                   # [N, IN_CH]
        mask_bias = maskb_ref[...]                       # [N, N]: 0 where edge j->i, -1e30 otherwise
        inv_n = 1.0 / float(x.shape[0])

        # ---------- GATv2 attention given fused projection xlr = [x@Wl + bl | x@Wr + br] ----------
        def gat_heads(xlr, att_ref, nheads, out_ch):
            hc = nheads * out_ch
            att = att_ref[...]                           # [H, C]
            outs = []
            for hh in range(nheads):                     # static, tiny
                lo = hh * out_ch
                xl_h = xlr[:, lo:lo + out_ch]            # [N, C]  source features
                xr_h = xlr[:, hc + lo:hc + lo + out_ch]  # [N, C]  target features
                s = xr_h[:, None, :] + xl_h[None, :, :]  # [N_dst, N_src, C]
                s = jnp.where(s > 0, s, NEG_SLOPE * s)   # leaky-relu
                logits = jnp.sum(s * att[hh:hh + 1, :][None, :, :], axis=-1)   # [N, N]
                logits = logits + mask_bias              # additive adjacency mask
                m = jnp.max(logits, axis=1, keepdims=True)
                e = jnp.exp(logits - m)                  # masked entries underflow to exactly 0
                denom = jnp.sum(e, axis=1, keepdims=True)
                alpha = e * pl.reciprocal(denom, approx=True)
                outs.append(jnp.dot(alpha, xl_h,
                                    preferred_element_type=jnp.float32))       # [N, C]
            return outs

        # ---------- conv1 (concat=True) + ReLU; keep per-head blocks (no lane concat) ----------
        xlr1 = jnp.dot(x, w1_ref[...], preferred_element_type=jnp.float32) + b1_ref[...]
        heads1 = gat_heads(xlr1, att1_ref, h0, c0)
        bias1 = bias1_ref[...]                           # [h0, c0] (sublane-sliced per head)
        heads1 = [jnp.maximum(heads1[hh] + bias1[hh:hh + 1, :], 0.0) for hh in range(h0)]
        # TODO(synk): dropout layers are inference-mode identities (no RNG applied).

        # ---------- conv2 (concat=False): project the implicit head-concat via row-block matmuls ----------
        w2 = w2_ref[...]                                 # [H0*C0, 2*H1*C1]
        xlr2 = b2_ref[...]
        for hh in range(h0):
            xlr2 = xlr2 + jnp.dot(heads1[hh], w2[hh * c0:(hh + 1) * c0, :],
                                  preferred_element_type=jnp.float32)
        heads2 = gat_heads(xlr2, att2_ref, h1, c1)
        h2 = heads2[0]
        for hh in range(1, h1):
            h2 = h2 + heads2[hh]
        h2 = h2 * (1.0 / float(h1)) + bias2_ref[...]     # mean over heads + bias  [N, C1]

        # ---------- readouts (stay in vregs/VMEM, consumed directly by fc1) ----------
        def fix(v):  # torch.nan_to_num(nan=1, posinf=1, neginf=1)
            v = jnp.where(jnp.isnan(v), 1.0, v)
            return jnp.where(jnp.isinf(v), 1.0, v)

        glob = [fix(v) for v in _aggr5(x, inv_n)]        # 5 x [1, IN_CH]

        g = _aggr5(h2, inv_n)                            # 5 x [1, C1]
        t = t_ref[0, 0]                                  # SoftmaxAggregation(learn=True) temperature
        a = h2 * t
        m = jnp.max(a, axis=0, keepdims=True)
        e = jnp.exp(a - m)
        alpha = e * pl.reciprocal(jnp.sum(e, axis=0, keepdims=True), approx=True)
        g.append(jnp.sum(h2 * alpha, axis=0, keepdims=True))

        pieces = g + glob                                # cat([graph_aggr, globfeat], -1), as blocks

        # ---------- dense head: fc1 as a sum of row-block matmuls (no concat needed) ----------
        fc1w, fc1b = fc_refs[0][...], fc_refs[1][...]
        z = fc1b
        off = 0
        for p in pieces:
            w = p.shape[1]
            z = z + jnp.dot(p, fc1w[off:off + w, :], preferred_element_type=jnp.float32)
            off += w
        z = jnp.maximum(z, 0.0)
        for i in range(n_hidden):
            w_r, b_r = fc_refs[2 + 2 * i], fc_refs[3 + 2 * i]
            z = jnp.maximum(jnp.dot(z, w_r[...], preferred_element_type=jnp.float32) + b_r[...], 0.0)
        fc2w, fc2b = fc_refs[2 + 2 * n_hidden], fc_refs[3 + 2 * n_hidden]
        out_ref[...] = jnp.dot(z, fc2w[...], preferred_element_type=jnp.float32) + fc2b[...]

    return kernel


# ----------------------------- full forward (single pallas_call) -----------------------------
def gat_network_forward(params, x, adj):
    mask_bias = (adj - 1.0) * 1e30                       # 0 where edge, -1e30 otherwise
    c1p, c2p = params["conv1"], params["conv2"]
    # fuse Wl/Wr (and their biases) -> one projection matmul per GAT layer inside the kernel
    w1 = jnp.concatenate([c1p["wl"], c1p["wr"]], axis=1)
    b1 = jnp.concatenate([c1p["bl"], c1p["br"]], axis=1)
    w2 = jnp.concatenate([c2p["wl"], c2p["wr"]], axis=1)
    b2 = jnp.concatenate([c2p["bl"], c2p["br"]], axis=1)
    bias1 = c1p["bias"].reshape(GCN_HEADS[0], GCN_CH[0])  # per-head rows -> sublane slices in-kernel

    fc_args = [params["fc1"][0], params["fc1"][1]]
    for (w, b) in params["fch"]:
        fc_args += [w, b]
    fc_args += [params["fc2"][0], params["fc2"][1]]

    args = (params["softmax_t"], x, mask_bias,
            w1, b1, c1p["att"], bias1,
            w2, b2, c2p["att"], c2p["bias"], *fc_args)

    kern = _make_fused_kernel(len(params["fch"]), tuple(GCN_HEADS), tuple(GCN_CH))
    vmem = pl.BlockSpec(memory_space=pltpu.MemorySpace.VMEM)
    smem = pl.BlockSpec(memory_space=pltpu.MemorySpace.SMEM)
    return pl.pallas_call(
        kern,
        out_shape=jax.ShapeDtypeStruct((1, OUT_CH), jnp.float32),
        in_specs=[smem] + [vmem] * (len(args) - 1),
        out_specs=vmem,
    )(*args)


# ----------------------------- pure-JAX reference (same math, no Pallas) -----------------------------
def _ref_gat(x, p, adj, heads, out_ch, concat, relu_out):
    xl = x @ p["wl"] + p["bl"]
    xr = x @ p["wr"] + p["br"]
    outs = []
    for h in range(heads):
        xlh = xl[:, h * out_ch:(h + 1) * out_ch]
        xrh = xr[:, h * out_ch:(h + 1) * out_ch]
        s = xrh[:, None, :] + xlh[None, :, :]
        s = jnp.where(s > 0, s, NEG_SLOPE * s)
        logits = jnp.sum(s * p["att"][h][None, None, :], axis=-1)
        logits = jnp.where(adj > 0, logits, -1e30)
        m = jnp.max(logits, axis=1, keepdims=True)
        e = jnp.where(adj > 0, jnp.exp(logits - m), 0.0)
        alpha = e / jnp.sum(e, axis=1, keepdims=True)
        outs.append(alpha @ xlh)
    out = jnp.concatenate(outs, -1) if concat else sum(outs) / float(heads)
    out = out + p["bias"]
    return jnp.maximum(out, 0.0) if relu_out else out


def _ref_aggrs(x, t=None):
    n = float(x.shape[0])
    s = jnp.sum(x, 0, keepdims=True)
    mean = s / n
    var = jnp.sum(x * x, 0, keepdims=True) / n - mean * mean
    std = jnp.sqrt(jnp.maximum(var, 1e-5))
    std = jnp.where(std <= SQRT_EPS, 0.0, std)
    xmin = jnp.min(x, 0, keepdims=True)
    xmax = jnp.max(x, 0, keepdims=True)
    outs = [s, mean, std, xmin, xmax]
    if t is not None:
        a = x * t
        e = jnp.exp(a - jnp.max(a, 0, keepdims=True))
        alpha = e / jnp.sum(e, 0, keepdims=True)
        outs.append(jnp.sum(x * alpha, 0, keepdims=True))
    return jnp.concatenate(outs, -1)


def reference_forward(params, x, adj):
    glob = _ref_aggrs(x)
    glob = jnp.where(jnp.isnan(glob), 1.0, glob)
    glob = jnp.where(jnp.isinf(glob), 1.0, glob)
    h = _ref_gat(x, params["conv1"], adj, GCN_HEADS[0], GCN_CH[0], True, True)
    h = _ref_gat(h, params["conv2"], adj, GCN_HEADS[1], GCN_CH[1], False, False)
    g = _ref_aggrs(h, params["softmax_t"])
    z = jnp.concatenate([g, glob], -1)
    z = jnp.maximum(z @ params["fc1"][0] + params["fc1"][1], 0.0)
    for (w, b) in params["fch"]:
        z = jnp.maximum(z @ w + b, 0.0)
    return z @ params["fc2"][0] + params["fc2"][1]


# ----------------------------- parameters / inputs -----------------------------
def init_params(key):
    ks = jax.random.split(key, 18)

    def w(k, shape, scale=0.1):
        return jax.random.normal(k, shape, jnp.float32) * scale

    h0, c0 = GCN_HEADS[0], GCN_CH[0]
    h1, c1 = GCN_HEADS[1], GCN_CH[1]
    params = {
        "conv1": dict(wl=w(ks[0], (IN_CH, h0 * c0)), bl=w(ks[1], (1, h0 * c0), 0.01),
                      wr=w(ks[2], (IN_CH, h0 * c0)), br=w(ks[3], (1, h0 * c0), 0.01),
                      att=w(ks[4], (h0, c0)), bias=w(ks[5], (1, h0 * c0), 0.01)),
        "conv2": dict(wl=w(ks[6], (h0 * c0, h1 * c1)), bl=w(ks[7], (1, h1 * c1), 0.01),
                      wr=w(ks[8], (h0 * c0, h1 * c1)), br=w(ks[9], (1, h1 * c1), 0.01),
                      att=w(ks[10], (h1, c1)), bias=w(ks[11], (1, c1), 0.01)),
        "softmax_t": jnp.ones((1, 1), jnp.float32),   # SoftmaxAggregation(learn=True), t init = 1.0
    }
    dnn_in = 6 * GCN_CH[-1] + 5 * IN_CH
    params["fc1"] = (w(ks[12], (dnn_in, DENSE[0])), w(ks[13], (1, DENSE[0]), 0.01))
    params["fch"] = [(w(ks[14], (DENSE[0], DENSE[1])), w(ks[15], (1, DENSE[1]), 0.01))]
    params["fc2"] = (w(ks[16], (DENSE[-1], OUT_CH)), w(ks[17], (1, OUT_CH), 0.01))
    return params


def build_adj(edge_index, n):
    src, dst = edge_index[0], edge_index[1]
    adj = jnp.zeros((n, n), jnp.float32).at[dst, src].set(1.0)
    idx = jnp.arange(n)
    adj = adj.at[idx, idx].set(1.0)       # GATv2Conv add_self_loops=True
    return adj


if __name__ == "__main__":
    key = jax.random.PRNGKey(0)
    kx, kp = jax.random.split(key)

    x = jax.random.normal(kx, (N_NODES, IN_CH), jnp.float32)          # data.x
    # bidirectional ring graph: edge_index[0]=src, edge_index[1]=dst
    i = jnp.arange(N_NODES, dtype=jnp.int32)
    src = jnp.concatenate([i, (i + 1) % N_NODES])
    dst = jnp.concatenate([(i + 1) % N_NODES, i])
    edge_index = jnp.stack([src, dst])                                # data.edge_index  [2, 2N]

    adj = build_adj(edge_index, N_NODES)
    params = init_params(kp)

    forward = jax.jit(gat_network_forward)
    out = forward(params, x, adj)
    out = jax.block_until_ready(out)

    assert out.shape == (1, OUT_CH), out.shape
    assert bool(jnp.all(jnp.isfinite(out)))
    ref = reference_forward(params, x, adj)
    assert jnp.allclose(out, ref, atol=2e-2, rtol=2e-2), (out, ref)

    print("KERNEL_OK")
</pallas_src>

<mosaic_0001>
module attributes {stable_mosaic.version = 11 : i64} {
  func.func @kernel(%arg0: memref<1x1xf32, #tpu.memory_space<smem>>, %arg1: memref<16x8xf32, #tpu.memory_space<vmem>>, %arg2: memref<16x16xf32, #tpu.memory_space<vmem>>, %arg3: memref<8x64xf32, #tpu.memory_space<vmem>>, %arg4: memref<1x64xf32, #tpu.memory_space<vmem>>, %arg5: memref<2x16xf32, #tpu.memory_space<vmem>>, %arg6: memref<2x16xf32, #tpu.memory_space<vmem>>, %arg7: memref<32x64xf32, #tpu.memory_space<vmem>>, %arg8: memref<1x64xf32, #tpu.memory_space<vmem>>, %arg9: memref<2x16xf32, #tpu.memory_space<vmem>>, %arg10: memref<1x16xf32, #tpu.memory_space<vmem>>, %arg11: memref<136x32xf32, #tpu.memory_space<vmem>>, %arg12: memref<1x32xf32, #tpu.memory_space<vmem>>, %arg13: memref<32x32xf32, #tpu.memory_space<vmem>>, %arg14: memref<1x32xf32, #tpu.memory_space<vmem>>, %arg15: memref<32x4xf32, #tpu.memory_space<vmem>>, %arg16: memref<1x4xf32, #tpu.memory_space<vmem>>, %arg17: memref<1x4xf32, #tpu.memory_space<vmem>>) attributes {dimension_semantics = [], scalar_prefetch = 0 : i64, scratch_operands = 0 : i64, tpu.core_type = #tpu.core_type<tc>} {
    %c0 = arith.constant 0 : index
    %c0_0 = arith.constant 0 : index
    %0 = vector.load %arg1[%c0, %c0_0] : memref<16x8xf32, #tpu.memory_space<vmem>>, vector<16x8xf32>
    %c0_1 = arith.constant 0 : index
    %c0_2 = arith.constant 0 : index
    %1 = vector.load %arg2[%c0_1, %c0_2] : memref<16x16xf32, #tpu.memory_space<vmem>>, vector<16x16xf32>
    %c0_3 = arith.constant 0 : index
    %c0_4 = arith.constant 0 : index
    %2 = vector.load %arg3[%c0_3, %c0_4] : memref<8x64xf32, #tpu.memory_space<vmem>>, vector<8x64xf32>
    %cst = arith.constant dense<0.000000e+00> : vector<16x64xf32>
    %3 = tpu.matmul %0, %2, %cst {dimension_numbers = #tpu.dot_dimension_numbers<[1], [0], [0], [1], [0, 0, 1, 1], [], []>} : vector<16x8xf32>, vector<8x64xf32>, vector<16x64xf32> -> vector<16x64xf32>
    %c0_5 = arith.constant 0 : index
    %c0_6 = arith.constant 0 : index
    %4 = vector.load %arg4[%c0_5, %c0_6] : memref<1x64xf32, #tpu.memory_space<vmem>>, vector<1x64xf32>
    %5 = vector.broadcast %4 : vector<1x64xf32> to vector<16x64xf32>
    %6 = arith.addf %3, %5 : vector<16x64xf32>
    %c0_7 = arith.constant 0 : index
    %c0_8 = arith.constant 0 : index
    %7 = vector.load %arg5[%c0_7, %c0_8] : memref<2x16xf32, #tpu.memory_space<vmem>>, vector<2x16xf32>
    %8 = vector.extract_strided_slice %6 {offsets = [0, 0], sizes = [16, 16], strides = [1, 1]} : vector<16x64xf32> to vector<16x16xf32>
    %9 = vector.extract_strided_slice %6 {offsets = [0, 32], sizes = [16, 16], strides = [1, 1]} : vector<16x64xf32> to vector<16x16xf32>
    %10 = vector.shape_cast %9 : vector<16x16xf32> to vector<16x1x16xf32>
    %11 = vector.shape_cast %8 : vector<16x16xf32> to vector<1x16x16xf32>
    %12 = vector.broadcast %10 : vector<16x1x16xf32> to vector<16x16x16xf32>
    %13 = vector.broadcast %11 : vector<1x16x16xf32> to vector<16x16x16xf32>
    %14 = arith.addf %12, %13 : vector<16x16x16xf32>
    %cst_9 = arith.constant 0.000000e+00 : f32
    %15 = vector.broadcast %cst_9 : f32 to vector<16x16x16xf32>
    %16 = arith.cmpf ogt, %14, %15 : vector<16x16x16xf32>
    %cst_10 = arith.constant 2.000000e-01 : f32
    %17 = vector.broadcast %cst_10 : f32 to vector<16x16x16xf32>
    %18 = arith.mulf %17, %14 : vector<16x16x16xf32>
    %19 = arith.select %16, %14, %18 : vector<16x16x16xi1>, vector<16x16x16xf32>
    %20 = vector.extract_strided_slice %7 {offsets = [0, 0], sizes = [1, 16], strides = [1, 1]} : vector<2x16xf32> to vector<1x16xf32>
    %21 = vector.shape_cast %20 : vector<1x16xf32> to vector<1x1x16xf32>
    %22 = vector.broadcast %21 : vector<1x1x16xf32> to vector<16x16x16xf32>
    %23 = arith.mulf %19, %22 : vector<16x16x16xf32>
    %cst_11 = arith.constant dense<0.000000e+00> : vector<16x16xf32>
    %24 = vector.multi_reduction <add>, %23, %cst_11 [2] : vector<16x16x16xf32> to vector<16x16xf32>
    %25 = arith.addf %24, %1 : vector<16x16xf32>
    %cst_12 = arith.constant dense<0xFF800000> : vector<16xf32>
    %26 = vector.multi_reduction <maximumf>, %25, %cst_12 [1] : vector<16x16xf32> to vector<16xf32>
    %27 = vector.shape_cast %26 : vector<16xf32> to vector<16x1xf32>
    %28 = vector.broadcast %27 : vector<16x1xf32> to vector<16x16xf32>
    %29 = arith.subf %25, %28 : vector<16x16xf32>
    %30 = math.exp %29 : vector<16x16xf32>
    %cst_13 = arith.constant dense<0.000000e+00> : vector<16xf32>
    %31 = vector.multi_reduction <add>, %30, %cst_13 [1] : vector<16x16xf32> to vector<16xf32>
    %32 = vector.shape_cast %31 : vector<16xf32> to vector<16x1xf32>
    %33 = tpu.reciprocal %32 {approx = true} : vector<16x1xf32> -> vector<16x1xf32>
    %34 = vector.broadcast %33 : vector<16x1xf32> to vector<16x16xf32>
    %35 = arith.mulf %30, %34 : vector<16x16xf32>
    %cst_14 = arith.constant dense<0.000000e+00> : vector<16x16xf32>
    %36 = tpu.matmul %35, %8, %cst_14 {dimension_numbers = #tpu.dot_dimension_numbers<[1], [0], [0], [1], [0, 0, 1, 1], [], []>} : vector<16x16xf32>, vector<16x16xf32>, vector<16x16xf32> -> vector<16x16xf32>
    %37 = vector.extract_strided_slice %6 {offsets = [0, 16], sizes = [16, 16], strides = [1, 1]} : vector<16x64xf32> to vector<16x16xf32>
    %38 = vector.extract_strided_slice %6 {offsets = [0, 48], sizes = [16, 16], strides = [1, 1]} : vector<16x64xf32> to vector<16x16xf32>
    %39 = vector.shape_cast %38 : vector<16x16xf32> to vector<16x1x16xf32>
    %40 = vector.shape_cast %37 : vector<16x16xf32> to vector<1x16x16xf32>
    %41 = vector.broadcast %39 : vector<16x1x16xf32> to vector<16x16x16xf32>
    %42 = vector.broadcast %40 : vector<1x16x16xf32> to vector<16x16x16xf32>
    %43 = arith.addf %41, %42 : vector<16x16x16xf32>
    %cst_15 = arith.constant 0.000000e+00 : f32
    %44 = vector.broadcast %cst_15 : f32 to vector<16x16x16xf32>
    %45 = arith.cmpf ogt, %43, %44 : vector<16x16x16xf32>
    %cst_16 = arith.constant 2.000000e-01 : f32
    %46 = vector.broadcast %cst_16 : f32 to vector<16x16x16xf32>
    %47 = arith.mulf %46, %43 : vector<16x16x16xf32>
    %48 = arith.select %45, %43, %47 : vector<16x16x16xi1>, vector<16x16x16xf32>
    %49 = vector.extract_strided_slice %7 {offsets = [1, 0], sizes = [1, 16], strides = [1, 1]} : vector<2x16xf32> to vector<1x16xf32>
    %50 = vector.shape_cast %49 : vector<1x16xf32> to vector<1x1x16xf32>
    %51 = vector.broadcast %50 : vector<1x1x16xf32> to vector<16x16x16xf32>
    %52 = arith.mulf %48, %51 : vector<16x16x16xf32>
    %cst_17 = arith.constant dense<0.000000e+00> : vector<16x16xf32>
    %53 = vector.multi_reduction <add>, %52, %cst_17 [2] : vector<16x16x16xf32> to vector<16x16xf32>
    %54 = arith.addf %53, %1 : vector<16x16xf32>
    %cst_18 = arith.constant dense<0xFF800000> : vector<16xf32>
    %55 = vector.multi_reduction <maximumf>, %54, %cst_18 [1] : vector<16x16xf32> to vector<16xf32>
    %56 = vector.shape_cast %55 : vector<16xf32> to vector<16x1xf32>
    %57 = vector.broadcast %56 : vector<16x1xf32> to vector<16x16xf32>
    %58 = arith.subf %54, %57 : vector<16x16xf32>
    %59 = math.exp %58 : vector<16x16xf32>
    %cst_19 = arith.constant dense<0.000000e+00> : vector<16xf32>
    %60 = vector.multi_reduction <add>, %59, %cst_19 [1] : vector<16x16xf32> to vector<16xf32>
    %61 = vector.shape_cast %60 : vector<16xf32> to vector<16x1xf32>
    %62 = tpu.reciprocal %61 {approx = true} : vector<16x1xf32> -> vector<16x1xf32>
    %63 = vector.broadcast %62 : vector<16x1xf32> to vector<16x16xf32>
    %64 = arith.mulf %59, %63 : vector<16x16xf32>
    %cst_20 = arith.constant dense<0.000000e+00> : vector<16x16xf32>
    %65 = tpu.matmul %64, %37, %cst_20 {dimension_numbers = #tpu.dot_dimension_numbers<[1], [0], [0], [1], [0, 0, 1, 1], [], []>} : vector<16x16xf32>, vector<16x16xf32>, vector<16x16xf32> -> vector<16x16xf32>
    %c0_21 = arith.constant 0 : index
    %c0_22 = arith.constant 0 : index
    %66 = vector.load %arg6[%c0_21, %c0_22] : memref<2x16xf32, #tpu.memory_space<vmem>>, vector<2x16xf32>
    %67 = vector.extract_strided_slice %66 {offsets = [0, 0], sizes = [1, 16], strides = [1, 1]} : vector<2x16xf32> to vector<1x16xf32>
    %68 = vector.broadcast %67 : vector<1x16xf32> to vector<16x16xf32>
    %69 = arith.addf %36, %68 : vector<16x16xf32>
    %cst_23 = arith.constant 0.000000e+00 : f32
    %70 = vector.broadcast %cst_23 : f32 to vector<16x16xf32>
    %71 = arith.maximumf %69, %70 : vector<16x16xf32>
    %72 = vector.extract_strided_slice %66 {offsets = [1, 0], sizes = [1, 16], strides = [1, 1]} : vector<2x16xf32> to vector<1x16xf32>
    %73 = vector.broadcast %72 : vector<1x16xf32> to vector<16x16xf32>
    %74 = arith.addf %65, %73 : vector<16x16xf32>
    %cst_24 = arith.constant 0.000000e+00 : f32
    %75 = vector.broadcast %cst_24 : f32 to vector<16x16xf32>
    %76 = arith.maximumf %74, %75 : vector<16x16xf32>
    %c0_25 = arith.constant 0 : index
    %c0_26 = arith.constant 0 : index
    %77 = vector.load %arg7[%c0_25, %c0_26] : memref<32x64xf32, #tpu.memory_space<vmem>>, vector<32x64xf32>
    %c0_27 = arith.constant 0 : index
    %c0_28 = arith.constant 0 : index
    %78 = vector.load %arg8[%c0_27, %c0_28] : memref<1x64xf32, #tpu.memory_space<vmem>>, vector<1x64xf32>
    %79 = vector.extract_strided_slice %77 {offsets = [0, 0], sizes = [16, 64], strides = [1, 1]} : vector<32x64xf32> to vector<16x64xf32>
    %cst_29 = arith.constant dense<0.000000e+00> : vector<16x64xf32>
    %80 = tpu.matmul %71, %79, %cst_29 {dimension_numbers = #tpu.dot_dimension_numbers<[1], [0], [0], [1], [0, 0, 1, 1], [], []>} : vector<16x16xf32>, vector<16x64xf32>, vector<16x64xf32> -> vector<16x64xf32>
    %81 = vector.broadcast %78 : vector<1x64xf32> to vector<16x64xf32>
    %82 = arith.addf %81, %80 : vector<16x64xf32>
    %83 = vector.extract_strided_slice %77 {offsets = [16, 0], sizes = [16, 64], strides = [1, 1]} : vector<32x64xf32> to vector<16x64xf32>
    %cst_30 = arith.constant dense<0.000000e+00> : vector<16x64xf32>
    %84 = tpu.matmul %76, %83, %cst_30 {dimension_numbers = #tpu.dot_dimension_numbers<[1], [0], [0], [1], [0, 0, 1, 1], [], []>} : vector<16x16xf32>, vector<16x64xf32>, vector<16x64xf32> -> vector<16x64xf32>
    %85 = arith.addf %82, %84 : vector<16x64xf32>
    %c0_31 = arith.constant 0 : index
    %c0_32 = arith.constant 0 : index
    %86 = vector.load %arg9[%c0_31, %c0_32] : memref<2x16xf32, #tpu.memory_space<vmem>>, vector<2x16xf32>
    %87 = vector.extract_strided_slice %85 {offsets = [0, 0], sizes = [16, 16], strides = [1, 1]} : vector<16x64xf32> to vector<16x16xf32>
    %88 = vector.extract_strided_slice %85 {offsets = [0, 32], sizes = [16, 16], strides = [1, 1]} : vector<16x64xf32> to vector<16x16xf32>
    %89 = vector.shape_cast %88 : vector<16x16xf32> to vector<16x1x16xf32>
    %90 = vector.shape_cast %87 : vector<16x16xf32> to vector<1x16x16xf32>
    %91 = vector.broadcast %89 : vector<16x1x16xf32> to vector<16x16x16xf32>
    %92 = vector.broadcast %90 : vector<1x16x16xf32> to vector<16x16x16xf32>
    %93 = arith.addf %91, %92 : vector<16x16x16xf32>
    %cst_33 = arith.constant 0.000000e+00 : f32
    %94 = vector.broadcast %cst_33 : f32 to vector<16x16x16xf32>
    %95 = arith.cmpf ogt, %93, %94 : vector<16x16x16xf32>
    %cst_34 = arith.constant 2.000000e-01 : f32
    %96 = vector.broadcast %cst_34 : f32 to vector<16x16x16xf32>
    %97 = arith.mulf %96, %93 : vector<16x16x16xf32>
    %98 = arith.select %95, %93, %97 : vector<16x16x16xi1>, vector<16x16x16xf32>
    %99 = vector.extract_strided_slice %86 {offsets = [0, 0], sizes = [1, 16], strides = [1, 1]} : vector<2x16xf32> to vector<1x16xf32>
    %100 = vector.shape_cast %99 : vector<1x16xf32> to vector<1x1x16xf32>
    %101 = vector.broadcast %100 : vector<1x1x16xf32> to vector<16x16x16xf32>
    %102 = arith.mulf %98, %101 : vector<16x16x16xf32>
    %cst_35 = arith.constant dense<0.000000e+00> : vector<16x16xf32>
    %103 = vector.multi_reduction <add>, %102, %cst_35 [2] : vector<16x16x16xf32> to vector<16x16xf32>
    %104 = arith.addf %103, %1 : vector<16x16xf32>
    %cst_36 = arith.constant dense<0xFF800000> : vector<16xf32>
    %105 = vector.multi_reduction <maximumf>, %104, %cst_36 [1] : vector<16x16xf32> to vector<16xf32>
    %106 = vector.shape_cast %105 : vector<16xf32> to vector<16x1xf32>
    %107 = vector.broadcast %106 : vector<16x1xf32> to vector<16x16xf32>
    %108 = arith.subf %104, %107 : vector<16x16xf32>
    %109 = math.exp %108 : vector<16x16xf32>
    %cst_37 = arith.constant dense<0.000000e+00> : vector<16xf32>
    %110 = vector.multi_reduction <add>, %109, %cst_37 [1] : vector<16x16xf32> to vector<16xf32>
    %111 = vector.shape_cast %110 : vector<16xf32> to vector<16x1xf32>
    %112 = tpu.reciprocal %111 {approx = true} : vector<16x1xf32> -> vector<16x1xf32>
    %113 = vector.broadcast %112 : vector<16x1xf32> to vector<16x16xf32>
    %114 = arith.mulf %109, %113 : vector<16x16xf32>
    %cst_38 = arith.constant dense<0.000000e+00> : vector<16x16xf32>
    %115 = tpu.matmul %114, %87, %cst_38 {dimension_numbers = #tpu.dot_dimension_numbers<[1], [0], [0], [1], [0, 0, 1, 1], [], []>} : vector<16x16xf32>, vector<16x16xf32>, vector<16x16xf32> -> vector<16x16xf32>
    %116 = vector.extract_strided_slice %85 {offsets = [0, 16], sizes = [16, 16], strides = [1, 1]} : vector<16x64xf32> to vector<16x16xf32>
    %117 = vector.extract_strided_slice %85 {offsets = [0, 48], sizes = [16, 16], strides = [1, 1]} : vector<16x64xf32> to vector<16x16xf32>
    %118 = vector.shape_cast %117 : vector<16x16xf32> to vector<16x1x16xf32>
    %119 = vector.shape_cast %116 : vector<16x16xf32> to vector<1x16x16xf32>
    %120 = vector.broadcast %118 : vector<16x1x16xf32> to vector<16x16x16xf32>
    %121 = vector.broadcast %119 : vector<1x16x16xf32> to vector<16x16x16xf32>
    %122 = arith.addf %120, %121 : vector<16x16x16xf32>
    %cst_39 = arith.constant 0.000000e+00 : f32
    %123 = vector.broadcast %cst_39 : f32 to vector<16x16x16xf32>
    %124 = arith.cmpf ogt, %122, %123 : vector<16x16x16xf32>
    %cst_40 = arith.constant 2.000000e-01 : f32
    %125 = vector.broadcast %cst_40 : f32 to vector<16x16x16xf32>
    %126 = arith.mulf %125, %122 : vector<16x16x16xf32>
    %127 = arith.select %124, %122, %126 : vector<16x16x16xi1>, vector<16x16x16xf32>
    %128 = vector.extract_strided_slice %86 {offsets = [1, 0], sizes = [1, 16], strides = [1, 1]} : vector<2x16xf32> to vector<1x16xf32>
    %129 = vector.shape_cast %128 : vector<1x16xf32> to vector<1x1x16xf32>
    %130 = vector.broadcast %129 : vector<1x1x16xf32> to vector<16x16x16xf32>
    %131 = arith.mulf %127, %130 : vector<16x16x16xf32>
    %cst_41 = arith.constant dense<0.000000e+00> : vector<16x16xf32>
    %132 = vector.multi_reduction <add>, %131, %cst_41 [2] : vector<16x16x16xf32> to vector<16x16xf32>
    %133 = arith.addf %132, %1 : vector<16x16xf32>
    %cst_42 = arith.constant dense<0xFF800000> : vector<16xf32>
    %134 = vector.multi_reduction <maximumf>, %133, %cst_42 [1] : vector<16x16xf32> to vector<16xf32>
    %135 = vector.shape_cast %134 : vector<16xf32> to vector<16x1xf32>
    %136 = vector.broadcast %135 : vector<16x1xf32> to vector<16x16xf32>
    %137 = arith.subf %133, %136 : vector<16x16xf32>
    %138 = math.exp %137 : vector<16x16xf32>
    %cst_43 = arith.constant dense<0.000000e+00> : vector<16xf32>
    %139 = vector.multi_reduction <add>, %138, %cst_43 [1] : vector<16x16xf32> to vector<16xf32>
    %140 = vector.shape_cast %139 : vector<16xf32> to vector<16x1xf32>
    %141 = tpu.reciprocal %140 {approx = true} : vector<16x1xf32> -> vector<16x1xf32>
    %142 = vector.broadcast %141 : vector<16x1xf32> to vector<16x16xf32>
    %143 = arith.mulf %138, %142 : vector<16x16xf32>
    %cst_44 = arith.constant dense<0.000000e+00> : vector<16x16xf32>
    %144 = tpu.matmul %143, %116, %cst_44 {dimension_numbers = #tpu.dot_dimension_numbers<[1], [0], [0], [1], [0, 0, 1, 1], [], []>} : vector<16x16xf32>, vector<16x16xf32>, vector<16x16xf32> -> vector<16x16xf32>
    %145 = arith.addf %115, %144 : vector<16x16xf32>
    %cst_45 = arith.constant 5.000000e-01 : f32
    %146 = vector.broadcast %cst_45 : f32 to vector<16x16xf32>
    %147 = arith.mulf %145, %146 : vector<16x16xf32>
    %c0_46 = arith.constant 0 : index
    %c0_47 = arith.constant 0 : index
    %148 = vector.load %arg10[%c0_46, %c0_47] : memref<1x16xf32, #tpu.memory_space<vmem>>, vector<1x16xf32>
    %149 = vector.broadcast %148 : vector<1x16xf32> to vector<16x16xf32>
    %150 = arith.addf %147, %149 : vector<16x16xf32>
    %cst_48 = arith.constant dense<0.000000e+00> : vector<8xf32>
    %151 = vector.multi_reduction <add>, %0, %cst_48 [0] : vector<16x8xf32> to vector<8xf32>
    %152 = vector.shape_cast %151 : vector<8xf32> to vector<1x8xf32>
    %cst_49 = arith.constant 6.250000e-02 : f32
    %153 = vector.broadcast %cst_49 : f32 to vector<1x8xf32>
    %154 = arith.mulf %152, %153 : vector<1x8xf32>
    %155 = arith.mulf %0, %0 : vector<16x8xf32>
    %cst_50 = arith.constant dense<0.000000e+00> : vector<8xf32>
    %156 = vector.multi_reduction <add>, %155, %cst_50 [0] : vector<16x8xf32> to vector<8xf32>
    %157 = vector.shape_cast %156 : vector<8xf32> to vector<1x8xf32>
    %cst_51 = arith.constant 6.250000e-02 : f32
    %158 = vector.broadcast %cst_51 : f32 to vector<1x8xf32>
    %159 = arith.mulf %157, %158 : vector<1x8xf32>
    %160 = arith.mulf %154, %154 : vector<1x8xf32>
    %161 = arith.subf %159, %160 : vector<1x8xf32>
    %cst_52 = arith.constant 9.99999974E-6 : f32
    %162 = vector.broadcast %cst_52 : f32 to vector<1x8xf32>
    %163 = arith.maximumf %161, %162 : vector<1x8xf32>
    %164 = math.sqrt %163 : vector<1x8xf32>
    %cst_53 = arith.constant 0.00316227763 : f32
    %165 = vector.broadcast %cst_53 : f32 to vector<1x8xf32>
    %166 = arith.cmpf ole, %164, %165 : vector<1x8xf32>
    %cst_54 = arith.constant 0.000000e+00 : f32
    %167 = vector.broadcast %cst_54 : f32 to vector<1x8xf32>
    %168 = arith.select %166, %167, %164 : vector<1x8xi1>, vector<1x8xf32>
    %cst_55 = arith.constant dense<0x7F800000> : vector<8xf32>
    %169 = vector.multi_reduction <minimumf>, %0, %cst_55 [0] : vector<16x8xf32> to vector<8xf32>
    %170 = vector.shape_cast %169 : vector<8xf32> to vector<1x8xf32>
    %cst_56 = arith.constant dense<0xFF800000> : vector<8xf32>
    %171 = vector.multi_reduction <maximumf>, %0, %cst_56 [0] : vector<16x8xf32> to vector<8xf32>
    %172 = vector.shape_cast %171 : vector<8xf32> to vector<1x8xf32>
    %173 = arith.cmpf one, %152, %152 : vector<1x8xf32>
    %cst_57 = arith.constant 1.000000e+00 : f32
    %174 = vector.broadcast %cst_57 : f32 to vector<1x8xf32>
    %175 = arith.select %173, %174, %152 : vector<1x8xi1>, vector<1x8xf32>
    %176 = math.absf %175 : vector<1x8xf32>
    %cst_58 = arith.constant 0x7F800000 : f32
    %177 = vector.broadcast %cst_58 : f32 to vector<1x8xf32>
    %178 = arith.cmpf oeq, %176, %177 : vector<1x8xf32>
    %cst_59 = arith.constant 1.000000e+00 : f32
    %179 = vector.broadcast %cst_59 : f32 to vector<1x8xf32>
    %180 = arith.select %178, %179, %175 : vector<1x8xi1>, vector<1x8xf32>
    %181 = arith.cmpf one, %154, %154 : vector<1x8xf32>
    %cst_60 = arith.constant 1.000000e+00 : f32
    %182 = vector.broadcast %cst_60 : f32 to vector<1x8xf32>
    %183 = arith.select %181, %182, %154 : vector<1x8xi1>, vector<1x8xf32>
    %184 = math.absf %183 : vector<1x8xf32>
    %cst_61 = arith.constant 0x7F800000 : f32
    %185 = vector.broadcast %cst_61 : f32 to vector<1x8xf32>
    %186 = arith.cmpf oeq, %184, %185 : vector<1x8xf32>
    %cst_62 = arith.constant 1.000000e+00 : f32
    %187 = vector.broadcast %cst_62 : f32 to vector<1x8xf32>
    %188 = arith.select %186, %187, %183 : vector<1x8xi1>, vector<1x8xf32>
    %189 = arith.cmpf one, %168, %168 : vector<1x8xf32>
    %cst_63 = arith.constant 1.000000e+00 : f32
    %190 = vector.broadcast %cst_63 : f32 to vector<1x8xf32>
    %191 = arith.select %189, %190, %168 : vector<1x8xi1>, vector<1x8xf32>
    %192 = math.absf %191 : vector<1x8xf32>
    %cst_64 = arith.constant 0x7F800000 : f32
    %193 = vector.broadcast %cst_64 : f32 to vector<1x8xf32>
    %194 = arith.cmpf oeq, %192, %193 : vector<1x8xf32>
    %cst_65 = arith.constant 1.000000e+00 : f32
    %195 = vector.broadcast %cst_65 : f32 to vector<1x8xf32>
    %196 = arith.select %194, %195, %191 : vector<1x8xi1>, vector<1x8xf32>
    %197 = arith.cmpf one, %170, %170 : vector<1x8xf32>
    %cst_66 = arith.constant 1.000000e+00 : f32
    %198 = vector.broadcast %cst_66 : f32 to vector<1x8xf32>
    %199 = arith.select %197, %198, %170 : vector<1x8xi1>, vector<1x8xf32>
    %200 = math.absf %199 : vector<1x8xf32>
    %cst_67 = arith.constant 0x7F800000 : f32
    %201 = vector.broadcast %cst_67 : f32 to vector<1x8xf32>
    %202 = arith.cmpf oeq, %200, %201 : vector<1x8xf32>
    %cst_68 = arith.constant 1.000000e+00 : f32
    %203 = vector.broadcast %cst_68 : f32 to vector<1x8xf32>
    %204 = arith.select %202, %203, %199 : vector<1x8xi1>, vector<1x8xf32>
    %205 = arith.cmpf one, %172, %172 : vector<1x8xf32>
    %cst_69 = arith.constant 1.000000e+00 : f32
    %206 = vector.broadcast %cst_69 : f32 to vector<1x8xf32>
    %207 = arith.select %205, %206, %172 : vector<1x8xi1>, vector<1x8xf32>
    %208 = math.absf %207 : vector<1x8xf32>
    %cst_70 = arith.constant 0x7F800000 : f32
    %209 = vector.broadcast %cst_70 : f32 to vector<1x8xf32>
    %210 = arith.cmpf oeq, %208, %209 : vector<1x8xf32>
    %cst_71 = arith.constant 1.000000e+00 : f32
    %211 = vector.broadcast %cst_71 : f32 to vector<1x8xf32>
    %212 = arith.select %210, %211, %207 : vector<1x8xi1>, vector<1x8xf32>
    %cst_72 = arith.constant dense<0.000000e+00> : vector<16xf32>
    %213 = vector.multi_reduction <add>, %150, %cst_72 [0] : vector<16x16xf32> to vector<16xf32>
    %214 = vector.shape_cast %213 : vector<16xf32> to vector<1x16xf32>
    %cst_73 = arith.constant 6.250000e-02 : f32
    %215 = vector.broadcast %cst_73 : f32 to vector<1x16xf32>
    %216 = arith.mulf %214, %215 : vector<1x16xf32>
    %217 = arith.mulf %150, %150 : vector<16x16xf32>
    %cst_74 = arith.constant dense<0.000000e+00> : vector<16xf32>
    %218 = vector.multi_reduction <add>, %217, %cst_74 [0] : vector<16x16xf32> to vector<16xf32>
    %219 = vector.shape_cast %218 : vector<16xf32> to vector<1x16xf32>
    %cst_75 = arith.constant 6.250000e-02 : f32
    %220 = vector.broadcast %cst_75 : f32 to vector<1x16xf32>
    %221 = arith.mulf %219, %220 : vector<1x16xf32>
    %222 = arith.mulf %216, %216 : vector<1x16xf32>
    %223 = arith.subf %221, %222 : vector<1x16xf32>
    %cst_76 = arith.constant 9.99999974E-6 : f32
    %224 = vector.broadcast %cst_76 : f32 to vector<1x16xf32>
    %225 = arith.maximumf %223, %224 : vector<1x16xf32>
    %226 = math.sqrt %225 : vector<1x16xf32>
    %cst_77 = arith.constant 0.00316227763 : f32
    %227 = vector.broadcast %cst_77 : f32 to vector<1x16xf32>
    %228 = arith.cmpf ole, %226, %227 : vector<1x16xf32>
    %cst_78 = arith.constant 0.000000e+00 : f32
    %229 = vector.broadcast %cst_78 : f32 to vector<1x16xf32>
    %230 = arith.select %228, %229, %226 : vector<1x16xi1>, vector<1x16xf32>
    %cst_79 = arith.constant dense<0x7F800000> : vector<16xf32>
    %231 = vector.multi_reduction <minimumf>, %150, %cst_79 [0] : vector<16x16xf32> to vector<16xf32>
    %232 = vector.shape_cast %231 : vector<16xf32> to vector<1x16xf32>
    %cst_80 = arith.constant dense<0xFF800000> : vector<16xf32>
    %233 = vector.multi_reduction <maximumf>, %150, %cst_80 [0] : vector<16x16xf32> to vector<16xf32>
    %234 = vector.shape_cast %233 : vector<16xf32> to vector<1x16xf32>
    %c0_81 = arith.constant 0 : index
    %c0_82 = arith.constant 0 : index
    %235 = memref.load %arg0[%c0_81, %c0_82] : memref<1x1xf32, #tpu.memory_space<smem>>
    %236 = vector.broadcast %235 : f32 to vector<16x16xf32>
    %237 = arith.mulf %150, %236 : vector<16x16xf32>
    %cst_83 = arith.constant dense<0xFF800000> : vector<16xf32>
    %238 = vector.multi_reduction <maximumf>, %237, %cst_83 [0] : vector<16x16xf32> to vector<16xf32>
    %239 = vector.shape_cast %238 : vector<16xf32> to vector<1x16xf32>
    %240 = vector.broadcast %239 : vector<1x16xf32> to vector<16x16xf32>
    %241 = arith.subf %237, %240 : vector<16x16xf32>
    %242 = math.exp %241 : vector<16x16xf32>
    %cst_84 = arith.constant dense<0.000000e+00> : vector<16xf32>
    %243 = vector.multi_reduction <add>, %242, %cst_84 [0] : vector<16x16xf32> to vector<16xf32>
    %244 = vector.shape_cast %243 : vector<16xf32> to vector<1x16xf32>
    %245 = tpu.reciprocal %244 {approx = true} : vector<1x16xf32> -> vector<1x16xf32>
    %246 = vector.broadcast %245 : vector<1x16xf32> to vector<16x16xf32>
    %247 = arith.mulf %242, %246 : vector<16x16xf32>
    %248 = arith.mulf %150, %247 : vector<16x16xf32>
    %cst_85 = arith.constant dense<0.000000e+00> : vector<16xf32>
    %249 = vector.multi_reduction <add>, %248, %cst_85 [0] : vector<16x16xf32> to vector<16xf32>
    %250 = vector.shape_cast %249 : vector<16xf32> to vector<1x16xf32>
    %c0_86 = arith.constant 0 : index
    %c0_87 = arith.constant 0 : index
    %251 = vector.load %arg11[%c0_86, %c0_87] : memref<136x32xf32, #tpu.memory_space<vmem>>, vector<136x32xf32>
    %c0_88 = arith.constant 0 : index
    %c0_89 = arith.constant 0 : index
    %252 = vector.load %arg12[%c0_88, %c0_89] : memref<1x32xf32, #tpu.memory_space<vmem>>, vector<1x32xf32>
    %253 = vector.extract_strided_slice %251 {offsets = [0, 0], sizes = [16, 32], strides = [1, 1]} : vector<136x32xf32> to vector<16x32xf32>
    %cst_90 = arith.constant dense<0.000000e+00> : vector<1x32xf32>
    %254 = tpu.matmul %214, %253, %cst_90 {dimension_numbers = #tpu.dot_dimension_numbers<[1], [0], [0], [1], [0, 0, 1, 1], [], []>} : vector<1x16xf32>, vector<16x32xf32>, vector<1x32xf32> -> vector<1x32xf32>
    %255 = arith.addf %252, %254 : vector<1x32xf32>
    %256 = vector.extract_strided_slice %251 {offsets = [16, 0], sizes = [16, 32], strides = [1, 1]} : vector<136x32xf32> to vector<16x32xf32>
    %cst_91 = arith.constant dense<0.000000e+00> : vector<1x32xf32>
    %257 = tpu.matmul %216, %256, %cst_91 {dimension_numbers = #tpu.dot_dimension_numbers<[1], [0], [0], [1], [0, 0, 1, 1], [], []>} : vector<1x16xf32>, vector<16x32xf32>, vector<1x32xf32> -> vector<1x32xf32>
    %258 = arith.addf %255, %257 : vector<1x32xf32>
    %259 = vector.extract_strided_slice %251 {offsets = [32, 0], sizes = [16, 32], strides = [1, 1]} : vector<136x32xf32> to vector<16x32xf32>
    %cst_92 = arith.constant dense<0.000000e+00> : vector<1x32xf32>
    %260 = tpu.matmul %230, %259, %cst_92 {dimension_numbers = #tpu.dot_dimension_numbers<[1], [0], [0], [1], [0, 0, 1, 1], [], []>} : vector<1x16xf32>, vector<16x32xf32>, vector<1x32xf32> -> vector<1x32xf32>
    %261 = arith.addf %258, %260 : vector<1x32xf32>
    %262 = vector.extract_strided_slice %251 {offsets = [48, 0], sizes = [16, 32], strides = [1, 1]} : vector<136x32xf32> to vector<16x32xf32>
    %cst_93 = arith.constant dense<0.000000e+00> : vector<1x32xf32>
    %263 = tpu.matmul %232, %262, %cst_93 {dimension_numbers = #tpu.dot_dimension_numbers<[1], [0], [0], [1], [0, 0, 1, 1], [], []>} : vector<1x16xf32>, vector<16x32xf32>, vector<1x32xf32> -> vector<1x32xf32>
    %264 = arith.addf %261, %263 : vector<1x32xf32>
    %265 = vector.extract_strided_slice %251 {offsets = [64, 0], sizes = [16, 32], strides = [1, 1]} : vector<136x32xf32> to vector<16x32xf32>
    %cst_94 = arith.constant dense<0.000000e+00> : vector<1x32xf32>
    %266 = tpu.matmul %234, %265, %cst_94 {dimension_numbers = #tpu.dot_dimension_numbers<[1], [0], [0], [1], [0, 0, 1, 1], [], []>} : vector<1x16xf32>, vector<16x32xf32>, vector<1x32xf32> -> vector<1x32xf32>
    %267 = arith.addf %264, %266 : vector<1x32xf32>
    %268 = vector.extract_strided_slice %251 {offsets = [80, 0], sizes = [16, 32], strides = [1, 1]} : vector<136x32xf32> to vector<16x32xf32>
    %cst_95 = arith.constant dense<0.000000e+00> : vector<1x32xf32>
    %269 = tpu.matmul %250, %268, %cst_95 {dimension_numbers = #tpu.dot_dimension_numbers<[1], [0], [0], [1], [0, 0, 1, 1], [], []>} : vector<1x16xf32>, vector<16x32xf32>, vector<1x32xf32> -> vector<1x32xf32>
    %270 = arith.addf %267, %269 : vector<1x32xf32>
    %271 = vector.extract_strided_slice %251 {offsets = [96, 0], sizes = [8, 32], strides = [1, 1]} : vector<136x32xf32> to vector<8x32xf32>
    %cst_96 = arith.constant dense<0.000000e+00> : vector<1x32xf32>
    %272 = tpu.matmul %180, %271, %cst_96 {dimension_numbers = #tpu.dot_dimension_numbers<[1], [0], [0], [1], [0, 0, 1, 1], [], []>} : vector<1x8xf32>, vector<8x32xf32>, vector<1x32xf32> -> vector<1x32xf32>
    %273 = arith.addf %270, %272 : vector<1x32xf32>
    %274 = vector.extract_strided_slice %251 {offsets = [104, 0], sizes = [8, 32], strides = [1, 1]} : vector<136x32xf32> to vector<8x32xf32>
    %cst_97 = arith.constant dense<0.000000e+00> : vector<1x32xf32>
    %275 = tpu.matmul %188, %274, %cst_97 {dimension_numbers = #tpu.dot_dimension_numbers<[1], [0], [0], [1], [0, 0, 1, 1], [], []>} : vector<1x8xf32>, vector<8x32xf32>, vector<1x32xf32> -> vector<1x32xf32>
    %276 = arith.addf %273, %275 : vector<1x32xf32>
    %277 = vector.extract_strided_slice %251 {offsets = [112, 0], sizes = [8, 32], strides = [1, 1]} : vector<136x32xf32> to vector<8x32xf32>
    %cst_98 = arith.constant dense<0.000000e+00> : vector<1x32xf32>
    %278 = tpu.matmul %196, %277, %cst_98 {dimension_numbers = #tpu.dot_dimension_numbers<[1], [0], [0], [1], [0, 0, 1, 1], [], []>} : vector<1x8xf32>, vector<8x32xf32>, vector<1x32xf32> -> vector<1x32xf32>
    %279 = arith.addf %276, %278 : vector<1x32xf32>
    %280 = vector.extract_strided_slice %251 {offsets = [120, 0], sizes = [8, 32], strides = [1, 1]} : vector<136x32xf32> to vector<8x32xf32>
    %cst_99 = arith.constant dense<0.000000e+00> : vector<1x32xf32>
    %281 = tpu.matmul %204, %280, %cst_99 {dimension_numbers = #tpu.dot_dimension_numbers<[1], [0], [0], [1], [0, 0, 1, 1], [], []>} : vector<1x8xf32>, vector<8x32xf32>, vector<1x32xf32> -> vector<1x32xf32>
    %282 = arith.addf %279, %281 : vector<1x32xf32>
    %283 = vector.extract_strided_slice %251 {offsets = [128, 0], sizes = [8, 32], strides = [1, 1]} : vector<136x32xf32> to vector<8x32xf32>
    %cst_100 = arith.constant dense<0.000000e+00> : vector<1x32xf32>
    %284 = tpu.matmul %212, %283, %cst_100 {dimension_numbers = #tpu.dot_dimension_numbers<[1], [0], [0], [1], [0, 0, 1, 1], [], []>} : vector<1x8xf32>, vector<8x32xf32>, vector<1x32xf32> -> vector<1x32xf32>
    %285 = arith.addf %282, %284 : vector<1x32xf32>
    %cst_101 = arith.constant 0.000000e+00 : f32
    %286 = vector.broadcast %cst_101 : f32 to vector<1x32xf32>
    %287 = arith.maximumf %285, %286 : vector<1x32xf32>
    %c0_102 = arith.constant 0 : index
    %c0_103 = arith.constant 0 : index
    %288 = vector.load %arg13[%c0_102, %c0_103] : memref<32x32xf32, #tpu.memory_space<vmem>>, vector<32x32xf32>
    %cst_104 = arith.constant dense<0.000000e+00> : vector<1x32xf32>
    %289 = tpu.matmul %287, %288, %cst_104 {dimension_numbers = #tpu.dot_dimension_numbers<[1], [0], [0], [1], [0, 0, 1, 1], [], []>} : vector<1x32xf32>, vector<32x32xf32>, vector<1x32xf32> -> vector<1x32xf32>
    %c0_105 = arith.constant 0 : index
    %c0_106 = arith.constant 0 : index
    %290 = vector.load %arg14[%c0_105, %c0_106] : memref<1x32xf32, #tpu.memory_space<vmem>>, vector<1x32xf32>
    %291 = arith.addf %289, %290 : vector<1x32xf32>
    %cst_107 = arith.constant 0.000000e+00 : f32
    %292 = vector.broadcast %cst_107 : f32 to vector<1x32xf32>
    %293 = arith.maximumf %291, %292 : vector<1x32xf32>
    %c0_108 = arith.constant 0 : index
    %c0_109 = arith.constant 0 : index
    %294 = vector.load %arg15[%c0_108, %c0_109] : memref<32x4xf32, #tpu.memory_space<vmem>>, vector<32x4xf32>
    %cst_110 = arith.constant dense<0.000000e+00> : vector<1x4xf32>
    %295 = tpu.matmul %293, %294, %cst_110 {dimension_numbers = #tpu.dot_dimension_numbers<[1], [0], [0], [1], [0, 0, 1, 1], [], []>} : vector<1x32xf32>, vector<32x4xf32>, vector<1x4xf32> -> vector<1x4xf32>
    %c0_111 = arith.constant 0 : index
    %c0_112 = arith.constant 0 : index
    %296 = vector.load %arg16[%c0_111, %c0_112] : memref<1x4xf32, #tpu.memory_space<vmem>>, vector<1x4xf32>
    %297 = arith.addf %295, %296 : vector<1x4xf32>
    %c0_113 = arith.constant 0 : index
    %c0_114 = arith.constant 0 : index
    %298 = vector.load %arg17[%c0_113, %c0_114] : memref<1x4xf32, #tpu.memory_space<vmem>>, vector<1x4xf32>
    tpu.vector_store %arg17[%c0_113, %c0_114], %297 {strides = array<i32>} : memref<1x4xf32, #tpu.memory_space<vmem>>, vector<1x4xf32>,
    return
  }
}

</mosaic_0001>

<llo_original>
// kernel: gat_network_forward.1
$region0: #{gat_network_forward.1}
  #allocation0 [shape = 'u32[]', space=smem, size = 0x4, offset = 0x4, fixed_abs, tag = 'smem constant byte address 0x4 - core index']
  #allocation1 [shape = 'u32[72,128]{1,0:T(1,128)}', space=vmem, size = 0x9000, scoped, tag = 'internal scratch']
  #allocation2 [shape = 'f32[1,1]{1,0:T(1,128)S(6)}', space=smem, size = 0x200, scoped, tag = 'scoped memory for gat_network_forward.1']
  %s0 = inlined_call_operand.<no memory space> [shape: f32[1,1], index: 0, kind: input, shape index: {}]
  %s1 = inlined_call_operand.vmem [shape: f32[16,8], index: 1, kind: input, shape index: {}]
  %s2 = inlined_call_operand.vmem [shape: f32[16,16], index: 2, kind: input, shape index: {}]
  %s3 = inlined_call_operand.vmem [shape: f32[8,64], index: 3, kind: input, shape index: {}]
  %s4 = inlined_call_operand.vmem [shape: f32[1,64], index: 4, kind: input, shape index: {}]
  %s5 = inlined_call_operand.vmem [shape: f32[2,16], index: 5, kind: input, shape index: {}]
  %s6 = inlined_call_operand.vmem [shape: f32[2,16], index: 6, kind: input, shape index: {}]
  %s7 = inlined_call_operand.vmem [shape: f32[32,64], index: 7, kind: input, shape index: {}]
  %s8 = inlined_call_operand.vmem [shape: f32[1,64], index: 8, kind: input, shape index: {}]
  %s9 = inlined_call_operand.vmem [shape: f32[2,16], index: 9, kind: input, shape index: {}]
  %s10 = inlined_call_operand.vmem [shape: f32[1,16], index: 10, kind: input, shape index: {}]
  %s11 = inlined_call_operand.vmem [shape: f32[136,32], index: 11, kind: input, shape index: {}]
  %s12 = inlined_call_operand.vmem [shape: f32[1,32], index: 12, kind: input, shape index: {}]
  %s13 = inlined_call_operand.vmem [shape: f32[32,32], index: 13, kind: input, shape index: {}]
  %s14 = inlined_call_operand.vmem [shape: f32[1,32], index: 14, kind: input, shape index: {}]
  %s15 = inlined_call_operand.vmem [shape: f32[32,4], index: 15, kind: input, shape index: {}]
  %s16 = inlined_call_operand.vmem [shape: f32[1,4], index: 16, kind: input, shape index: {}]
  %s17 = inlined_call_operand.hbm [shape: f32[1,4], index: 17, kind: output, shape index: {}]
  %s18 = sld [smem:[#allocation0]]
  $region78: #{gat_network_forward.1} parent=0
    _
  %s20 = ssub.s32 1, %s18
  %s21 = scalar_select 0, %s20, %s18
  %22 = sst [smem:[#allocation2]] %s0
  $region1: #{gat_network_forward.1} parent=0
    #allocation3 [shape = 'u8[512]{0}', space=vmem, size = 0x400, scoped, tag = 'output window, operand 0, single buffered']
    #allocation4 [shape = 's32[1]{0}', space=sflag, size = 0x4, scoped, tag = 'scoped memory for gat_network_forward.1']
    %23 = vsyncpa [#allocation4], 0
    // Predicated region
    $region2: #{gat_network_forward.1} parent=1 // pred_check
      _
    $region3: #{gat_network_forward.1} parent=1 // pred_check_branch
      %25 = sbr.rel (0) target = $region5
    $region4: #{gat_network_forward.1} parent=1 // pred_region
      _
    $region5: #{gat_network_forward.1} parent=1 // pred_fallthru
      _
    // Predicated region
    $region6: #{gat_network_forward.1} parent=1 // pred_check
      _
    $region7: #{gat_network_forward.1} parent=1 // pred_check_branch
      %27 = sbr.rel (0) target = $region9
    $region8: #{gat_network_forward.1} parent=1 // pred_region
      _
    $region9: #{gat_network_forward.1} parent=1 // pred_fallthru
      _
    // Predicated region
    $region10: #{gat_network_forward.1} parent=1 // pred_check
      _
    $region11: #{gat_network_forward.1} parent=1 // pred_check_branch
      %29 = sbr.rel (0) target = $region13
    $region12: #{gat_network_forward.1} parent=1 // pred_region
      _
    $region13: #{gat_network_forward.1} parent=1 // pred_fallthru
      _
    // Predicated region
    $region14: #{gat_network_forward.1} parent=1 // pred_check
      _
    $region15: #{gat_network_forward.1} parent=1 // pred_check_branch
      %31 = sbr.rel (0) target = $region17
    $region16: #{gat_network_forward.1} parent=1 // pred_region
      _
    $region17: #{gat_network_forward.1} parent=1 // pred_fallthru
      _
    // Predicated region
    $region18: #{gat_network_forward.1} parent=1 // pred_check
      _
    $region19: #{gat_network_forward.1} parent=1 // pred_check_branch
      %33 = sbr.rel (0) target = $region21
    $region20: #{gat_network_forward.1} parent=1 // pred_region
      _
    $region21: #{gat_network_forward.1} parent=1 // pred_fallthru
      _
    // Predicated region
    $region22: #{gat_network_forward.1} parent=1 // pred_check
      _
    $region23: #{gat_network_forward.1} parent=1 // pred_check_branch
      %35 = sbr.rel (0) target = $region25
    $region24: #{gat_network_forward.1} parent=1 // pred_region
      _
    $region25: #{gat_network_forward.1} parent=1 // pred_fallthru
      _
    // Predicated region
    $region26: #{gat_network_forward.1} parent=1 // pred_check
      _
    $region27: #{gat_network_forward.1} parent=1 // pred_check_branch
      %37 = sbr.rel (0) target = $region29
    $region28: #{gat_network_forward.1} parent=1 // pred_region
      _
    $region29: #{gat_network_forward.1} parent=1 // pred_fallthru
      _
    // Predicated region
    $region30: #{gat_network_forward.1} parent=1 // pred_check
      _
    $region31: #{gat_network_forward.1} parent=1 // pred_check_branch
      %39 = sbr.rel (0) target = $region33
    $region32: #{gat_network_forward.1} parent=1 // pred_region
      _
    $region33: #{gat_network_forward.1} parent=1 // pred_fallthru
      _
    // Predicated region
    $region34: #{gat_network_forward.1} parent=1 // pred_check
      _
    $region35: #{gat_network_forward.1} parent=1 // pred_check_branch
      %41 = sbr.rel (0) target = $region37
    $region36: #{gat_network_forward.1} parent=1 // pred_region
      _
    $region37: #{gat_network_forward.1} parent=1 // pred_fallthru
      _
    // Predicated region
    $region38: #{gat_network_forward.1} parent=1 // pred_check
      _
    $region39: #{gat_network_forward.1} parent=1 // pred_check_branch
      %43 = sbr.rel (0) target = $region41
    $region40: #{gat_network_forward.1} parent=1 // pred_region
      _
    $region41: #{gat_network_forward.1} parent=1 // pred_fallthru
      _
    // Predicated region
    $region42: #{gat_network_forward.1} parent=1 // pred_check
      _
    $region43: #{gat_network_forward.1} parent=1 // pred_check_branch
      %45 = sbr.rel (0) target = $region45
    $region44: #{gat_network_forward.1} parent=1 // pred_region
      _
    $region45: #{gat_network_forward.1} parent=1 // pred_fallthru
      _
    // Predicated region
    $region46: #{gat_network_forward.1} parent=1 // pred_check
      _
    $region47: #{gat_network_forward.1} parent=1 // pred_check_branch
      %47 = sbr.rel (0) target = $region49
    $region48: #{gat_network_forward.1} parent=1 // pred_region
      _
    $region49: #{gat_network_forward.1} parent=1 // pred_fallthru
      _
    // Predicated region
    $region50: #{gat_network_forward.1} parent=1 // pred_check
      _
    $region51: #{gat_network_forward.1} parent=1 // pred_check_branch
      %49 = sbr.rel (0) target = $region53
    $region52: #{gat_network_forward.1} parent=1 // pred_region
      _
    $region53: #{gat_network_forward.1} parent=1 // pred_fallthru
      _
    // Predicated region
    $region54: #{gat_network_forward.1} parent=1 // pred_check
      _
    $region55: #{gat_network_forward.1} parent=1 // pred_check_branch
      %51 = sbr.rel (0) target = $region57
    $region56: #{gat_network_forward.1} parent=1 // pred_region
      _
    $region57: #{gat_network_forward.1} parent=1 // pred_fallthru
      _
    // Predicated region
    $region58: #{gat_network_forward.1} parent=1 // pred_check
      _
    $region59: #{gat_network_forward.1} parent=1 // pred_check_branch
      %53 = sbr.rel (0) target = $region61
    $region60: #{gat_network_forward.1} parent=1 // pred_region
      _
    $region61: #{gat_network_forward.1} parent=1 // pred_fallthru
      _
    // Predicated region
    $region62: #{gat_network_forward.1} parent=1 // pred_check
      _
    $region63: #{gat_network_forward.1} parent=1 // pred_check_branch
      %55 = sbr.rel (0) target = $region65
    $region64: #{gat_network_forward.1} parent=1 // pred_region
      _
    $region65: #{gat_network_forward.1} parent=1 // pred_fallthru
      _
    // Predicated region
    $region66: #{gat_network_forward.1} parent=1 // pred_check
      _
    $region67: #{gat_network_forward.1} parent=1 // pred_check_branch
      %57 = sbr.rel (0) target = $region69
    $region68: #{gat_network_forward.1} parent=1 // pred_region
      _
    $region69: #{gat_network_forward.1} parent=1 // pred_fallthru
      _
    %v58 = vld [vmem:[%s1] sm:$0xff]
    %v59 = vld [vmem:[%s1 + $0x8] sm:$0xff]
    %v60 = vld [vmem:[%s2] sm:$0xff]
    %v61 = vld [vmem:[%s2 + $0x8] sm:$0xff]
    %v62 = vld [vmem:[%s3] sm:$0xff]
    %v63 = vld [vmem:[%s4] sm:$0x1]
    %v65 = vperm.slane %v63, 0
    %vm67 = vcmask 64512
    %v69 = vsel %vm67, %v58, 0
    %v72 = vsel %vm67, %v59, 0
    %74 = vmatpush.msra.mxu0 0.0
    %75 = vmatpush.msra.mxu0 0.0
    %76 = vmatpush.msra.mxu0 0.0
    %77 = vmatpush.msra.mxu0 0.0
    %78 = vmatpush.msra.mxu0 0.0
    %79 = vmatpush.msra.mxu0 0.0
    %80 = vmatpush.msra.mxu0 0.0
    %81 = vmatpush.msra.mxu0 0.0
    %82 = vmatpush.msra.mxu0 0.0
    %83 = vmatpush.msra.mxu0 0.0
    %84 = vmatpush.msra.mxu0 0.0
    %85 = vmatpush.msra.mxu0 0.0
    %86 = vmatpush.msra.mxu0 0.0
    %87 = vmatpush.msra.mxu0 0.0
    %88 = vmatpush.msra.mxu0 0.0
    %89 = vmatpush.msra.mxu0 %v62
    %90 = vmatmul.f32.gmra.mxu0 %v69
    %v91 = vpop.f32.mrf.mxu0
    %v92 = vadd.f32 %v65, %v91
    %93 = vmatmul.f32.gmra.mxu0 %v72
    %v94 = vpop.f32.mrf.mxu0
    %v95 = vadd.f32 %v65, %v94
    %96 = vdwg.mxu0
    %v97 = vld [vmem:[%s5] sm:$0x3]
    %v100 = vrot.slane %v92, 1
    %v101 = vrot.slane %v92, 2
    %v102 = vrot.slane %v92, 3
    %v103 = vrot.slane %v92, 4
    %v104 = vrot.slane %v92, 5
    %v105 = vrot.slane %v92, 6
    %v106 = vrot.slane %v92, 7
    %v107 = vrot.slane %v95, 1
    %v108 = vrot.slane %v95, 2
    %v109 = vrot.slane %v95, 3
    %v110 = vrot.slane %v95, 4
    %v111 = vrot.slane %v95, 5
    %v112 = vrot.slane %v95, 6
    %v113 = vrot.slane %v95, 7
    %v114 = vperm.slane %v92, 0
    %v115 = vperm.slane %v100, 0
    %v116 = vperm.slane %v101, 0
    %v117 = vperm.slane %v102, 0
    %v118 = vperm.slane %v103, 0
    %v119 = vperm.slane %v104, 0
    %v120 = vperm.slane %v105, 0
    %v121 = vperm.slane %v106, 0
    %v122 = vperm.slane %v95, 0
    %v123 = vperm.slane %v107, 0
    %v124 = vperm.slane %v108, 0
    %v125 = vperm.slane %v109, 0
    %v126 = vperm.slane %v110, 0
    %v127 = vperm.slane %v111, 0
    %v128 = vperm.slane %v112, 0
    %v129 = vperm.slane %v113, 0
    %146 = vrot.lane.b32.xlu0 %v92, 32
    %v147 = vpop.permute.xlu0 %146
    %148 = vrot.lane.b32.xlu0 %v95, 32
    %v149 = vpop.permute.xlu0 %148
    %v152 = vadd.f32 %v114, %v147
    %v153 = vadd.f32 %v114, %v149
    %v154 = vadd.f32 %v115, %v147
    %v155 = vadd.f32 %v115, %v149
    %v156 = vadd.f32 %v116, %v147
    %v157 = vadd.f32 %v116, %v149
    %v158 = vadd.f32 %v117, %v147
    %v159 = vadd.f32 %v117, %v149
    %v160 = vadd.f32 %v118, %v147
    %v161 = vadd.f32 %v118, %v149
    %v162 = vadd.f32 %v119, %v147
    %v163 = vadd.f32 %v119, %v149
    %v164 = vadd.f32 %v120, %v147
    %v165 = vadd.f32 %v120, %v149
    %v166 = vadd.f32 %v121, %v147
    %v167 = vadd.f32 %v121, %v149
    %v168 = vadd.f32 %v122, %v147
    %v169 = vadd.f32 %v122, %v149
    %v170 = vadd.f32 %v123, %v147
    %v171 = vadd.f32 %v123, %v149
    %v172 = vadd.f32 %v124, %v147
    %v173 = vadd.f32 %v124, %v149
    %v174 = vadd.f32 %v125, %v147
    %v175 = vadd.f32 %v125, %v149
    %v176 = vadd.f32 %v126, %v147
    %v177 = vadd.f32 %v126, %v149
    %v178 = vadd.f32 %v127, %v147
    %v179 = vadd.f32 %v127, %v149
    %v180 = vadd.f32 %v128, %v147
    %v181 = vadd.f32 %v128, %v149
    %v182 = vadd.f32 %v129, %v147
    %v183 = vadd.f32 %v129, %v149
    %vm184 = vcmp.gt.f32.partialorder %v152, 0.0
    %vm185 = vcmp.gt.f32.partialorder %v153, 0.0
    %vm186 = vcmp.gt.f32.partialorder %v154, 0.0
    %vm187 = vcmp.gt.f32.partialorder %v155, 0.0
    %vm188 = vcmp.gt.f32.partialorder %v156, 0.0
    %vm189 = vcmp.gt.f32.partialorder %v157, 0.0
    %vm190 = vcmp.gt.f32.partialorder %v158, 0.0
    %vm191 = vcmp.gt.f32.partialorder %v159, 0.0
    %vm192 = vcmp.gt.f32.partialorder %v160, 0.0
    %vm193 = vcmp.gt.f32.partialorder %v161, 0.0
    %vm194 = vcmp.gt.f32.partialorder %v162, 0.0
    %vm195 = vcmp.gt.f32.partialorder %v163, 0.0
    %vm196 = vcmp.gt.f32.partialorder %v164, 0.0
    %vm197 = vcmp.gt.f32.partialorder %v165, 0.0
    %vm198 = vcmp.gt.f32.partialorder %v166, 0.0
    %vm199 = vcmp.gt.f32.partialorder %v167, 0.0
    %vm200 = vcmp.gt.f32.partialorder %v168, 0.0
    %vm201 = vcmp.gt.f32.partialorder %v169, 0.0
    %vm202 = vcmp.gt.f32.partialorder %v170, 0.0
    %vm203 = vcmp.gt.f32.partialorder %v171, 0.0
    %vm204 = vcmp.gt.f32.partialorder %v172, 0.0
    %vm205 = vcmp.gt.f32.partialorder %v173, 0.0
    %vm206 = vcmp.gt.f32.partialorder %v174, 0.0
    %vm207 = vcmp.gt.f32.partialorder %v175, 0.0
    %vm208 = vcmp.gt.f32.partialorder %v176, 0.0
    %vm209 = vcmp.gt.f32.partialorder %v177, 0.0
    %vm210 = vcmp.gt.f32.partialorder %v178, 0.0
    %vm211 = vcmp.gt.f32.partialorder %v179, 0.0
    %vm212 = vcmp.gt.f32.partialorder %v180, 0.0
    %vm213 = vcmp.gt.f32.partialorder %v181, 0.0
    %vm214 = vcmp.gt.f32.partialorder %v182, 0.0
    %vm215 = vcmp.gt.f32.partialorder %v183, 0.0
    %v216 = vmul.f32 %v152, 0.2
    %v217 = vmul.f32 %v153, 0.2
    %v218 = vmul.f32 %v154, 0.2
    %v219 = vmul.f32 %v155, 0.2
    %v220 = vmul.f32 %v156, 0.2
    %v221 = vmul.f32 %v157, 0.2
    %v222 = vmul.f32 %v158, 0.2
    %v223 = vmul.f32 %v159, 0.2
    %v224 = vmul.f32 %v160, 0.2
    %v225 = vmul.f32 %v161, 0.2
    %v226 = vmul.f32 %v162, 0.2
    %v227 = vmul.f32 %v163, 0.2
    %v228 = vmul.f32 %v164, 0.2
    %v229 = vmul.f32 %v165, 0.2
    %v230 = vmul.f32 %v166, 0.2
    %v231 = vmul.f32 %v167, 0.2
    %v232 = vmul.f32 %v168, 0.2
    %v233 = vmul.f32 %v169, 0.2
    %v234 = vmul.f32 %v170, 0.2
    %v235 = vmul.f32 %v171, 0.2
    %v236 = vmul.f32 %v172, 0.2
    %v237 = vmul.f32 %v173, 0.2
    %v238 = vmul.f32 %v174, 0.2
    %v239 = vmul.f32 %v175, 0.2
    %v240 = vmul.f32 %v176, 0.2
    %v241 = vmul.f32 %v177, 0.2
    %v242 = vmul.f32 %v178, 0.2
    %v243 = vmul.f32 %v179, 0.2
    %v244 = vmul.f32 %v180, 0.2
    %v245 = vmul.f32 %v181, 0.2
    %v246 = vmul.f32 %v182, 0.2
    %v247 = vmul.f32 %v183, 0.2
    %v248 = vsel %vm184, %v152, %v216
    %v249 = vsel %vm185, %v153, %v217
    %v250 = vsel %vm186, %v154, %v218
    %v251 = vsel %vm187, %v155, %v219
    %v252 = vsel %vm188, %v156, %v220
    %v253 = vsel %vm189, %v157, %v221
    %v254 = vsel %vm190, %v158, %v222
    %v255 = vsel %vm191, %v159, %v223
    %v256 = vsel %vm192, %v160, %v224
    %v257 = vsel %vm193, %v161, %v225
    %v258 = vsel %vm194, %v162, %v226
    %v259 = vsel %vm195, %v163, %v227
    %v260 = vsel %vm196, %v164, %v228
    %v261 = vsel %vm197, %v165, %v229
    %v262 = vsel %vm198, %v166, %v230
    %v263 = vsel %vm199, %v167, %v231
    %v264 = vsel %vm200, %v168, %v232
    %v265 = vsel %vm201, %v169, %v233
    %v266 = vsel %vm202, %v170, %v234
    %v267 = vsel %vm203, %v171, %v235
    %v268 = vsel %vm204, %v172, %v236
    %v269 = vsel %vm205, %v173, %v237
    %v270 = vsel %vm206, %v174, %v238
    %v271 = vsel %vm207, %v175, %v239
    %v272 = vsel %vm208, %v176, %v240
    %v273 = vsel %vm209, %v177, %v241
    %v274 = vsel %vm210, %v178, %v242
    %v275 = vsel %vm211, %v179, %v243
    %v276 = vsel %vm212, %v180, %v244
    %v277 = vsel %vm213, %v181, %v245
    %v278 = vsel %vm214, %v182, %v246
    %v279 = vsel %vm215, %v183, %v247
    %v280 = vperm.slane %v97, 0
    %282 = vrot.lane.b32.xlu0 %v280, 32
    %v283 = vpop.permute.xlu0 %282
    %v285 = vmul.f32 %v248, %v283
    %v286 = vmul.f32 %v249, %v283
    %v287 = vmul.f32 %v250, %v283
    %v288 = vmul.f32 %v251, %v283
    %v289 = vmul.f32 %v252, %v283
    %v290 = vmul.f32 %v253, %v283
    %v291 = vmul.f32 %v254, %v283
    %v292 = vmul.f32 %v255, %v283
    %v293 = vmul.f32 %v256, %v283
    %v294 = vmul.f32 %v257, %v283
    %v295 = vmul.f32 %v258, %v283
    %v296 = vmul.f32 %v259, %v283
    %v297 = vmul.f32 %v260, %v283
    %v298 = vmul.f32 %v261, %v283
    %v299 = vmul.f32 %v262, %v283
    %v300 = vmul.f32 %v263, %v283
    %v301 = vmul.f32 %v264, %v283
    %v302 = vmul.f32 %v265, %v283
    %v303 = vmul.f32 %v266, %v283
    %v304 = vmul.f32 %v267, %v283
    %v305 = vmul.f32 %v268, %v283
    %v306 = vmul.f32 %v269, %v283
    %v307 = vmul.f32 %v270, %v283
    %v308 = vmul.f32 %v271, %v283
    %v309 = vmul.f32 %v272, %v283
    %v310 = vmul.f32 %v273, %v283
    %v311 = vmul.f32 %v274, %v283
    %v312 = vmul.f32 %v275, %v283
    %v313 = vmul.f32 %v276, %v283
    %v314 = vmul.f32 %v277, %v283
    %v315 = vmul.f32 %v278, %v283
    %v316 = vmul.f32 %v279, %v283
    %349 = vrot.lane.b32.xlu0 %v285, 96
    %v350 = vpop.permute.xlu0 %349
    %351 = vrot.lane.b32.xlu0 %v286, 96
    %v352 = vpop.permute.xlu0 %351
    %353 = vrot.lane.b32.xlu0 %v287, 96
    %v354 = vpop.permute.xlu0 %353
    %355 = vrot.lane.b32.xlu0 %v288, 96
    %v356 = vpop.permute.xlu0 %355
    %357 = vrot.lane.b32.xlu0 %v289, 96
    %v358 = vpop.permute.xlu0 %357
    %359 = vrot.lane.b32.xlu0 %v290, 96
    %v360 = vpop.permute.xlu0 %359
    %361 = vrot.lane.b32.xlu0 %v291, 96
    %v362 = vpop.permute.xlu0 %361
    %363 = vrot.lane.b32.xlu0 %v292, 96
    %v364 = vpop.permute.xlu0 %363
    %365 = vrot.lane.b32.xlu0 %v293, 96
    %v366 = vpop.permute.xlu0 %365
    %367 = vrot.lane.b32.xlu0 %v294, 96
    %v368 = vpop.permute.xlu0 %367
    %369 = vrot.lane.b32.xlu0 %v295, 96
    %v370 = vpop.permute.xlu0 %369
    %371 = vrot.lane.b32.xlu0 %v296, 96
    %v372 = vpop.permute.xlu0 %371
    %373 = vrot.lane.b32.xlu0 %v297, 96
    %v374 = vpop.permute.xlu0 %373
    %375 = vrot.lane.b32.xlu0 %v298, 96
    %v376 = vpop.permute.xlu0 %375
    %377 = vrot.lane.b32.xlu0 %v299, 96
    %v378 = vpop.permute.xlu0 %377
    %379 = vrot.lane.b32.xlu0 %v300, 96
    %v380 = vpop.permute.xlu0 %379
    %381 = vrot.lane.b32.xlu0 %v301, 96
    %v382 = vpop.permute.xlu0 %381
    %383 = vrot.lane.b32.xlu0 %v302, 96
    %v384 = vpop.permute.xlu0 %383
    %385 = vrot.lane.b32.xlu0 %v303, 96
    %v386 = vpop.permute.xlu0 %385
    %387 = vrot.lane.b32.xlu0 %v304, 96
    %v388 = vpop.permute.xlu0 %387
    %389 = vrot.lane.b32.xlu0 %v305, 96
    %v390 = vpop.permute.xlu0 %389
    %391 = vrot.lane.b32.xlu0 %v306, 96
    %v392 = vpop.permute.xlu0 %391
    %393 = vrot.lane.b32.xlu0 %v307, 96
    %v394 = vpop.permute.xlu0 %393
    %395 = vrot.lane.b32.xlu0 %v308, 96
    %v396 = vpop.permute.xlu0 %395
    %397 = vrot.lane.b32.xlu0 %v309, 96
    %v398 = vpop.permute.xlu0 %397
    %399 = vrot.lane.b32.xlu0 %v310, 96
    %v400 = vpop.permute.xlu0 %399
    %401 = vrot.lane.b32.xlu0 %v311, 96
    %v402 = vpop.permute.xlu0 %401
    %403 = vrot.lane.b32.xlu0 %v312, 96
    %v404 = vpop.permute.xlu0 %403
    %405 = vrot.lane.b32.xlu0 %v313, 96
    %v406 = vpop.permute.xlu0 %405
    %407 = vrot.lane.b32.xlu0 %v314, 96
    %v408 = vpop.permute.xlu0 %407
    %409 = vrot.lane.b32.xlu0 %v315, 96
    %v410 = vpop.permute.xlu0 %409
    %411 = vrot.lane.b32.xlu0 %v316, 96
    %v412 = vpop.permute.xlu0 %411
    %vm445 = vcmask 130048
    %v446 = vsel %vm445, %v350, 0.0
    %447 = vadd.xlane.f32.xlu0 %v446
    %v448 = vpop.xlane.xlu0 %447
    %v449 = vsel %vm445, %v352, 0.0
    %450 = vadd.xlane.f32.xlu0 %v449
    %v451 = vpop.xlane.xlu0 %450
    %v452 = vsel %vm445, %v354, 0.0
    %453 = vadd.xlane.f32.xlu0 %v452
    %v454 = vpop.xlane.xlu0 %453
    %v455 = vsel %vm445, %v356, 0.0
    %456 = vadd.xlane.f32.xlu0 %v455
    %v457 = vpop.xlane.xlu0 %456
    %v458 = vsel %vm445, %v358, 0.0
    %459 = vadd.xlane.f32.xlu0 %v458
    %v460 = vpop.xlane.xlu0 %459
    %v461 = vsel %vm445, %v360, 0.0
    %462 = vadd.xlane.f32.xlu0 %v461
    %v463 = vpop.xlane.xlu0 %462
    %v464 = vsel %vm445, %v362, 0.0
    %465 = vadd.xlane.f32.xlu0 %v464
    %v466 = vpop.xlane.xlu0 %465
    %v467 = vsel %vm445, %v364, 0.0
    %468 = vadd.xlane.f32.xlu0 %v467
    %v469 = vpop.xlane.xlu0 %468
    %v470 = vsel %vm445, %v366, 0.0
    %471 = vadd.xlane.f32.xlu0 %v470
    %v472 = vpop.xlane.xlu0 %471
    %v473 = vsel %vm445, %v368, 0.0
    %474 = vadd.xlane.f32.xlu0 %v473
    %v475 = vpop.xlane.xlu0 %474
    %v476 = vsel %vm445, %v370, 0.0
    %477 = vadd.xlane.f32.xlu0 %v476
    %v478 = vpop.xlane.xlu0 %477
    %v479 = vsel %vm445, %v372, 0.0
    %480 = vadd.xlane.f32.xlu0 %v479
    %v481 = vpop.xlane.xlu0 %480
    %v482 = vsel %vm445, %v374, 0.0
    %483 = vadd.xlane.f32.xlu0 %v482
    %v484 = vpop.xlane.xlu0 %483
    %v485 = vsel %vm445, %v376, 0.0
    %486 = vadd.xlane.f32.xlu0 %v485
    %v487 = vpop.xlane.xlu0 %486
    %v488 = vsel %vm445, %v378, 0.0
    %489 = vadd.xlane.f32.xlu0 %v488
    %v490 = vpop.xlane.xlu0 %489
    %v491 = vsel %vm445, %v380, 0.0
    %492 = vadd.xlane.f32.xlu0 %v491
    %v493 = vpop.xlane.xlu0 %492
    %v494 = vsel %vm445, %v382, 0.0
    %495 = vadd.xlane.f32.xlu0 %v494
    %v496 = vpop.xlane.xlu0 %495
    %v497 = vsel %vm445, %v384, 0.0
    %498 = vadd.xlane.f32.xlu0 %v497
    %v499 = vpop.xlane.xlu0 %498
    %v500 = vsel %vm445, %v386, 0.0
    %501 = vadd.xlane.f32.xlu0 %v500
    %v502 = vpop.xlane.xlu0 %501
    %v503 = vsel %vm445, %v388, 0.0
    %504 = vadd.xlane.f32.xlu0 %v503
    %v505 = vpop.xlane.xlu0 %504
    %v506 = vsel %vm445, %v390, 0.0
    %507 = vadd.xlane.f32.xlu0 %v506
    %v508 = vpop.xlane.xlu0 %507
    %v509 = vsel %vm445, %v392, 0.0
    %510 = vadd.xlane.f32.xlu0 %v509
    %v511 = vpop.xlane.xlu0 %510
    %v512 = vsel %vm445, %v394, 0.0
    %513 = vadd.xlane.f32.xlu0 %v512
    %v514 = vpop.xlane.xlu0 %513
    %v515 = vsel %vm445, %v396, 0.0
    %516 = vadd.xlane.f32.xlu0 %v515
    %v517 = vpop.xlane.xlu0 %516
    %v518 = vsel %vm445, %v398, 0.0
    %519 = vadd.xlane.f32.xlu0 %v518
    %v520 = vpop.xlane.xlu0 %519
    %v521 = vsel %vm445, %v400, 0.0
    %522 = vadd.xlane.f32.xlu0 %v521
    %v523 = vpop.xlane.xlu0 %522
    %v524 = vsel %vm445, %v402, 0.0
    %525 = vadd.xlane.f32.xlu0 %v524
    %v526 = vpop.xlane.xlu0 %525
    %v527 = vsel %vm445, %v404, 0.0
    %528 = vadd.xlane.f32.xlu0 %v527
    %v529 = vpop.xlane.xlu0 %528
    %v530 = vsel %vm445, %v406, 0.0
    %531 = vadd.xlane.f32.xlu0 %v530
    %v532 = vpop.xlane.xlu0 %531
    %v533 = vsel %vm445, %v408, 0.0
    %534 = vadd.xlane.f32.xlu0 %v533
    %v535 = vpop.xlane.xlu0 %534
    %v536 = vsel %vm445, %v410, 0.0
    %537 = vadd.xlane.f32.xlu0 %v536
    %v538 = vpop.xlane.xlu0 %537
    %v539 = vsel %vm445, %v412, 0.0
    %540 = vadd.xlane.f32.xlu0 %v539
    %v541 = vpop.xlane.xlu0 %540
    %v544 = vperm.slane %v60, 0
    %v545 = vlaneseq
    %v546 = vshrl.u32 %v545, 7
    %548 = vset.pattern.permute.xlu0 %v546
    %549 = vperm.xlu0 %548, %v544
    %v550 = vpop.permute.xlu0 %549
    %v551 = vlaneseq
    %v552 = vshrl.u32 %v551, 7
    %v553 = vadd.s32 %v552, 8
    %554 = vset.pattern.permute.xlu0 %v553
    %555 = vperm.xlu0 %554, %v544
    %v556 = vpop.permute.xlu0 %555
    %v557 = vperm.slane %v60, 1
    %v558 = vlaneseq
    %v559 = vshrl.u32 %v558, 7
    %561 = vset.pattern.permute.xlu0 %v559
    %562 = vperm.xlu0 %561, %v557
    %v563 = vpop.permute.xlu0 %562
    %v564 = vlaneseq
    %v565 = vshrl.u32 %v564, 7
    %v566 = vadd.s32 %v565, 8
    %567 = vset.pattern.permute.xlu0 %v566
    %568 = vperm.xlu0 %567, %v557
    %v569 = vpop.permute.xlu0 %568
    %v570 = vperm.slane %v60, 2
    %v571 = vlaneseq
    %v572 = vshrl.u32 %v571, 7
    %574 = vset.pattern.permute.xlu0 %v572
    %575 = vperm.xlu0 %574, %v570
    %v576 = vpop.permute.xlu0 %575
    %v577 = vlaneseq
    %v578 = vshrl.u32 %v577, 7
    %v579 = vadd.s32 %v578, 8
    %580 = vset.pattern.permute.xlu0 %v579
    %581 = vperm.xlu0 %580, %v570
    %v582 = vpop.permute.xlu0 %581
    %v583 = vperm.slane %v60, 3
    %v584 = vlaneseq
    %v585 = vshrl.u32 %v584, 7
    %587 = vset.pattern.permute.xlu0 %v585
    %588 = vperm.xlu0 %587, %v583
    %v589 = vpop.permute.xlu0 %588
    %v590 = vlaneseq
    %v591 = vshrl.u32 %v590, 7
    %v592 = vadd.s32 %v591, 8
    %593 = vset.pattern.permute.xlu0 %v592
    %594 = vperm.xlu0 %593, %v583
    %v595 = vpop.permute.xlu0 %594
    %v596 = vperm.slane %v60, 4
    %v597 = vlaneseq
    %v598 = vshrl.u32 %v597, 7
    %600 = vset.pattern.permute.xlu0 %v598
    %601 = vperm.xlu0 %600, %v596
    %v602 = vpop.permute.xlu0 %601
    %v603 = vlaneseq
    %v604 = vshrl.u32 %v603, 7
    %v605 = vadd.s32 %v604, 8
    %606 = vset.pattern.permute.xlu0 %v605
    %607 = vperm.xlu0 %606, %v596
    %v608 = vpop.permute.xlu0 %607
    %v609 = vperm.slane %v60, 5
    %v610 = vlaneseq
    %v611 = vshrl.u32 %v610, 7
    %613 = vset.pattern.permute.xlu0 %v611
    %614 = vperm.xlu0 %613, %v609
    %v615 = vpop.permute.xlu0 %614
    %v616 = vlaneseq
    %v617 = vshrl.u32 %v616, 7
    %v618 = vadd.s32 %v617, 8
    %619 = vset.pattern.permute.xlu0 %v618
    %620 = vperm.xlu0 %619, %v609
    %v621 = vpop.permute.xlu0 %620
    %v622 = vperm.slane %v60, 6
    %v623 = vlaneseq
    %v624 = vshrl.u32 %v623, 7
    %626 = vset.pattern.permute.xlu0 %v624
    %627 = vperm.xlu0 %626, %v622
    %v628 = vpop.permute.xlu0 %627
    %v629 = vlaneseq
    %v630 = vshrl.u32 %v629, 7
    %v631 = vadd.s32 %v630, 8
    %632 = vset.pattern.permute.xlu0 %v631
    %633 = vperm.xlu0 %632, %v622
    %v634 = vpop.permute.xlu0 %633
    %v635 = vperm.slane %v60, 7
    %v636 = vlaneseq
    %v637 = vshrl.u32 %v636, 7
    %639 = vset.pattern.permute.xlu0 %v637
    %640 = vperm.xlu0 %639, %v635
    %v641 = vpop.permute.xlu0 %640
    %v642 = vlaneseq
    %v643 = vshrl.u32 %v642, 7
    %v644 = vadd.s32 %v643, 8
    %645 = vset.pattern.permute.xlu0 %v644
    %646 = vperm.xlu0 %645, %v635
    %v647 = vpop.permute.xlu0 %646
    %v648 = vperm.slane %v61, 0
    %v649 = vlaneseq
    %v650 = vshrl.u32 %v649, 7
    %652 = vset.pattern.permute.xlu0 %v650
    %653 = vperm.xlu0 %652, %v648
    %v654 = vpop.permute.xlu0 %653
    %v655 = vlaneseq
    %v656 = vshrl.u32 %v655, 7
    %v657 = vadd.s32 %v656, 8
    %658 = vset.pattern.permute.xlu0 %v657
    %659 = vperm.xlu0 %658, %v648
    %v660 = vpop.permute.xlu0 %659
    %v661 = vperm.slane %v61, 1
    %v662 = vlaneseq
    %v663 = vshrl.u32 %v662, 7
    %665 = vset.pattern.permute.xlu0 %v663
    %666 = vperm.xlu0 %665, %v661
    %v667 = vpop.permute.xlu0 %666
    %v668 = vlaneseq
    %v669 = vshrl.u32 %v668, 7
    %v670 = vadd.s32 %v669, 8
    %671 = vset.pattern.permute.xlu0 %v670
    %672 = vperm.xlu0 %671, %v661
    %v673 = vpop.permute.xlu0 %672
    %v674 = vperm.slane %v61, 2
    %v675 = vlaneseq
    %v676 = vshrl.u32 %v675, 7
    %678 = vset.pattern.permute.xlu0 %v676
    %679 = vperm.xlu0 %678, %v674
    %v680 = vpop.permute.xlu0 %679
    %v681 = vlaneseq
    %v682 = vshrl.u32 %v681, 7
    %v683 = vadd.s32 %v682, 8
    %684 = vset.pattern.permute.xlu0 %v683
    %685 = vperm.xlu0 %684, %v674
    %v686 = vpop.permute.xlu0 %685
    %v687 = vperm.slane %v61, 3
    %v688 = vlaneseq
    %v689 = vshrl.u32 %v688, 7
    %691 = vset.pattern.permute.xlu0 %v689
    %692 = vperm.xlu0 %691, %v687
    %v693 = vpop.permute.xlu0 %692
    %v694 = vlaneseq
    %v695 = vshrl.u32 %v694, 7
    %v696 = vadd.s32 %v695, 8
    %697 = vset.pattern.permute.xlu0 %v696
    %698 = vperm.xlu0 %697, %v687
    %v699 = vpop.permute.xlu0 %698
    %v700 = vperm.slane %v61, 4
    %v701 = vlaneseq
    %v702 = vshrl.u32 %v701, 7
    %704 = vset.pattern.permute.xlu0 %v702
    %705 = vperm.xlu0 %704, %v700
    %v706 = vpop.permute.xlu0 %705
    %v707 = vlaneseq
    %v708 = vshrl.u32 %v707, 7
    %v709 = vadd.s32 %v708, 8
    %710 = vset.pattern.permute.xlu0 %v709
    %711 = vperm.xlu0 %710, %v700
    %v712 = vpop.permute.xlu0 %711
    %v713 = vperm.slane %v61, 5
    %v714 = vlaneseq
    %v715 = vshrl.u32 %v714, 7
    %717 = vset.pattern.permute.xlu0 %v715
    %718 = vperm.xlu0 %717, %v713
    %v719 = vpop.permute.xlu0 %718
    %v720 = vlaneseq
    %v721 = vshrl.u32 %v720, 7
    %v722 = vadd.s32 %v721, 8
    %723 = vset.pattern.permute.xlu0 %v722
    %724 = vperm.xlu0 %723, %v713
    %v725 = vpop.permute.xlu0 %724
    %v726 = vperm.slane %v61, 6
    %v727 = vlaneseq
    %v728 = vshrl.u32 %v727, 7
    %730 = vset.pattern.permute.xlu0 %v728
    %731 = vperm.xlu0 %730, %v726
    %v732 = vpop.permute.xlu0 %731
    %v733 = vlaneseq
    %v734 = vshrl.u32 %v733, 7
    %v735 = vadd.s32 %v734, 8
    %736 = vset.pattern.permute.xlu0 %v735
    %737 = vperm.xlu0 %736, %v726
    %v738 = vpop.permute.xlu0 %737
    %v739 = vperm.slane %v61, 7
    %v740 = vlaneseq
    %v741 = vshrl.u32 %v740, 7
    %743 = vset.pattern.permute.xlu0 %v741
    %744 = vperm.xlu0 %743, %v739
    %v745 = vpop.permute.xlu0 %744
    %v746 = vlaneseq
    %v747 = vshrl.u32 %v746, 7
    %v748 = vadd.s32 %v747, 8
    %749 = vset.pattern.permute.xlu0 %v748
    %750 = vperm.xlu0 %749, %v739
    %v751 = vpop.permute.xlu0 %750
    %v784 = vadd.f32 %v448, %v550
    %v785 = vadd.f32 %v451, %v556
    %v786 = vadd.f32 %v454, %v563
    %v787 = vadd.f32 %v457, %v569
    %v788 = vadd.f32 %v460, %v576
    %v789 = vadd.f32 %v463, %v582
    %v790 = vadd.f32 %v466, %v589
    %v791 = vadd.f32 %v469, %v595
    %v792 = vadd.f32 %v472, %v602
    %v793 = vadd.f32 %v475, %v608
    %v794 = vadd.f32 %v478, %v615
    %v795 = vadd.f32 %v481, %v621
    %v796 = vadd.f32 %v484, %v628
    %v797 = vadd.f32 %v487, %v634
    %v798 = vadd.f32 %v490, %v641
    %v799 = vadd.f32 %v493, %v647
    %v800 = vadd.f32 %v496, %v654
    %v801 = vadd.f32 %v499, %v660
    %v802 = vadd.f32 %v502, %v667
    %v803 = vadd.f32 %v505, %v673
    %v804 = vadd.f32 %v508, %v680
    %v805 = vadd.f32 %v511, %v686
    %v806 = vadd.f32 %v514, %v693
    %v807 = vadd.f32 %v517, %v699
    %v808 = vadd.f32 %v520, %v706
    %v809 = vadd.f32 %v523, %v712
    %v810 = vadd.f32 %v526, %v719
    %v811 = vadd.f32 %v529, %v725
    %v812 = vadd.f32 %v532, %v732
    %v813 = vadd.f32 %v535, %v738
    %v814 = vadd.f32 %v538, %v745
    %v815 = vadd.f32 %v541, %v751
    %848 = vset.pattern.permute.xlu0 0
    %849 = vperm.xlu0 %848, %v784
    %v850 = vpop.permute.xlu0 %849
    %851 = vset.pattern.permute.xlu0 0
    %852 = vperm.xlu0 %851, %v785
    %v853 = vpop.permute.xlu0 %852
    %854 = vset.pattern.permute.xlu0 0
    %855 = vperm.xlu0 %854, %v786
    %v856 = vpop.permute.xlu0 %855
    %857 = vset.pattern.permute.xlu0 0
    %858 = vperm.xlu0 %857, %v787
    %v859 = vpop.permute.xlu0 %858
    %860 = vset.pattern.permute.xlu0 0
    %861 = vperm.xlu0 %860, %v788
    %v862 = vpop.permute.xlu0 %861
    %863 = vset.pattern.permute.xlu0 0
    %864 = vperm.xlu0 %863, %v789
    %v865 = vpop.permute.xlu0 %864
    %866 = vset.pattern.permute.xlu0 0
    %867 = vperm.xlu0 %866, %v790
    %v868 = vpop.permute.xlu0 %867
    %869 = vset.pattern.permute.xlu0 0
    %870 = vperm.xlu0 %869, %v791
    %v871 = vpop.permute.xlu0 %870
    %872 = vset.pattern.permute.xlu0 0
    %873 = vperm.xlu0 %872, %v792
    %v874 = vpop.permute.xlu0 %873
    %875 = vset.pattern.permute.xlu0 0
    %876 = vperm.xlu0 %875, %v793
    %v877 = vpop.permute.xlu0 %876
    %878 = vset.pattern.permute.xlu0 0
    %879 = vperm.xlu0 %878, %v794
    %v880 = vpop.permute.xlu0 %879
    %881 = vset.pattern.permute.xlu0 0
    %882 = vperm.xlu0 %881, %v795
    %v883 = vpop.permute.xlu0 %882
    %884 = vset.pattern.permute.xlu0 0
    %885 = vperm.xlu0 %884, %v796
    %v886 = vpop.permute.xlu0 %885
    %887 = vset.pattern.permute.xlu0 0
    %888 = vperm.xlu0 %887, %v797
    %v889 = vpop.permute.xlu0 %888
    %890 = vset.pattern.permute.xlu0 0
    %891 = vperm.xlu0 %890, %v798
    %v892 = vpop.permute.xlu0 %891
    %893 = vset.pattern.permute.xlu0 0
    %894 = vperm.xlu0 %893, %v799
    %v895 = vpop.permute.xlu0 %894
    %896 = vset.pattern.permute.xlu0 0
    %897 = vperm.xlu0 %896, %v800
    %v898 = vpop.permute.xlu0 %897
    %899 = vset.pattern.permute.xlu0 0
    %900 = vperm.xlu0 %899, %v801
    %v901 = vpop.permute.xlu0 %900
    %902 = vset.pattern.permute.xlu0 0
    %903 = vperm.xlu0 %902, %v802
    %v904 = vpop.permute.xlu0 %903
    %905 = vset.pattern.permute.xlu0 0
    %906 = vperm.xlu0 %905, %v803
    %v907 = vpop.permute.xlu0 %906
    %908 = vset.pattern.permute.xlu0 0
    %909 = vperm.xlu0 %908, %v804
    %v910 = vpop.permute.xlu0 %909
    %911 = vset.pattern.permute.xlu0 0
    %912 = vperm.xlu0 %911, %v805
    %v913 = vpop.permute.xlu0 %912
    %914 = vset.pattern.permute.xlu0 0
    %915 = vperm.xlu0 %914, %v806
    %v916 = vpop.permute.xlu0 %915
    %917 = vset.pattern.permute.xlu0 0
    %918 = vperm.xlu0 %917, %v807
    %v919 = vpop.permute.xlu0 %918
    %920 = vset.pattern.permute.xlu0 0
    %921 = vperm.xlu0 %920, %v808
    %v922 = vpop.permute.xlu0 %921
    %923 = vset.pattern.permute.xlu0 0
    %924 = vperm.xlu0 %923, %v809
    %v925 = vpop.permute.xlu0 %924
    %926 = vset.pattern.permute.xlu0 0
    %927 = vperm.xlu0 %926, %v810
    %v928 = vpop.permute.xlu0 %927
    %929 = vset.pattern.permute.xlu0 0
    %930 = vperm.xlu0 %929, %v811
    %v931 = vpop.permute.xlu0 %930
    %932 = vset.pattern.permute.xlu0 0
    %933 = vperm.xlu0 %932, %v812
    %v934 = vpop.permute.xlu0 %933
    %935 = vset.pattern.permute.xlu0 0
    %936 = vperm.xlu0 %935, %v813
    %v937 = vpop.permute.xlu0 %936
    %938 = vset.pattern.permute.xlu0 0
    %939 = vperm.xlu0 %938, %v814
    %v940 = vpop.permute.xlu0 %939
    %941 = vset.pattern.permute.xlu0 0
    %942 = vperm.xlu0 %941, %v815
    %v943 = vpop.permute.xlu0 %942
    %v944 = vlaneseq
    %v945 = vand.u32 %v944, 127
    %v946 = vperm.slane %v850, %v945
    %v947 = vadd.s32 %v945, 4294967288
    %v948 = vperm.slane %v853, %v947
    %vm949 = vcmask 130112
    %v950 = vsel %vm949, %v948, %v946
    %v951 = vperm.slane %v856, %v945
    %v952 = vperm.slane %v859, %v947
    %v953 = vsel %vm949, %v952, %v951
    %v954 = vperm.slane %v862, %v945
    %v955 = vperm.slane %v865, %v947
    %v956 = vsel %vm949, %v955, %v954
    %v957 = vperm.slane %v868, %v945
    %v958 = vperm.slane %v871, %v947
    %v959 = vsel %vm949, %v958, %v957
    %v960 = vperm.slane %v874, %v945
    %v961 = vperm.slane %v877, %v947
    %v962 = vsel %vm949, %v961, %v960
    %v963 = vperm.slane %v880, %v945
    %v964 = vperm.slane %v883, %v947
    %v965 = vsel %vm949, %v964, %v963
    %v966 = vperm.slane %v886, %v945
    %v967 = vperm.slane %v889, %v947
    %v968 = vsel %vm949, %v967, %v966
    %v969 = vperm.slane %v892, %v945
    %v970 = vperm.slane %v895, %v947
    %v971 = vsel %vm949, %v970, %v969
    %v972 = vperm.slane %v898, %v945
    %v973 = vperm.slane %v901, %v947
    %v974 = vsel %vm949, %v973, %v972
    %v975 = vperm.slane %v904, %v945
    %v976 = vperm.slane %v907, %v947
    %v977 = vsel %vm949, %v976, %v975
    %v978 = vperm.slane %v910, %v945
    %v979 = vperm.slane %v913, %v947
    %v980 = vsel %vm949, %v979, %v978
    %v981 = vperm.slane %v916, %v945
    %v982 = vperm.slane %v919, %v947
    %v983 = vsel %vm949, %v982, %v981
    %v984 = vperm.slane %v922, %v945
    %v985 = vperm.slane %v925, %v947
    %v986 = vsel %vm949, %v985, %v984
    %v987 = vperm.slane %v928, %v945
    %v988 = vperm.slane %v931, %v947
    %v989 = vsel %vm949, %v988, %v987
    %v990 = vperm.slane %v934, %v945
    %v991 = vperm.slane %v937, %v947
    %v992 = vsel %vm949, %v991, %v990
    %v993 = vperm.slane %v940, %v945
    %v994 = vperm.slane %v943, %v947
    %v995 = vsel %vm949, %v994, %v993
    %vm996 = vcmask 1041409
    %v997 = vsel %vm996, %v953, %v950
    %vm998 = vcmask 1042434
    %v999 = vsel %vm998, %v956, %v997
    %vm1000 = vcmask 1043459
    %v1001 = vsel %vm1000, %v959, %v999
    %vm1002 = vcmask 1044484
    %v1003 = vsel %vm1002, %v962, %v1001
    %vm1004 = vcmask 1045509
    %v1005 = vsel %vm1004, %v965, %v1003
    %vm1006 = vcmask 1046534
    %v1007 = vsel %vm1006, %v968, %v1005
    %vm1008 = vcmask 1047559
    %v1009 = vsel %vm1008, %v971, %v1007
    %v1010 = vsel %vm996, %v977, %v974
    %v1011 = vsel %vm998, %v980, %v1010
    %v1012 = vsel %vm1000, %v983, %v1011
    %v1013 = vsel %vm1002, %v986, %v1012
    %v1014 = vsel %vm1004, %v989, %v1013
    %v1015 = vsel %vm1006, %v992, %v1014
    %v1016 = vsel %vm1008, %v995, %v1015
    %v1019 = vsel %vm445, %v1009, -inf
    %1020 = vmax.xlane.f32.xlu0 %v1019
    %v1021 = vpop.xlane.xlu0 %1020
    %v1022 = vsel %vm445, %v1016, -inf
    %1023 = vmax.xlane.f32.xlu0 %v1022
    %v1024 = vpop.xlane.xlu0 %1023
    %v1027 = vperm.slane %v1021, 0
    %v1028 = vperm.slane %v1021, 1
    %v1029 = vperm.slane %v1021, 2
    %v1030 = vperm.slane %v1021, 3
    %v1031 = vperm.slane %v1021, 4
    %v1032 = vperm.slane %v1021, 5
    %v1033 = vperm.slane %v1021, 6
    %v1034 = vperm.slane %v1021, 7
    %v1035 = vperm.slane %v1024, 0
    %v1036 = vperm.slane %v1024, 1
    %v1037 = vperm.slane %v1024, 2
    %v1038 = vperm.slane %v1024, 3
    %v1039 = vperm.slane %v1024, 4
    %v1040 = vperm.slane %v1024, 5
    %v1041 = vperm.slane %v1024, 6
    %v1042 = vperm.slane %v1024, 7
    %v1059 = vsub.f32 %v784, %v1027
    %v1060 = vsub.f32 %v785, %v1027
    %v1061 = vsub.f32 %v786, %v1028
    %v1062 = vsub.f32 %v787, %v1028
    %v1063 = vsub.f32 %v788, %v1029
    %v1064 = vsub.f32 %v789, %v1029
    %v1065 = vsub.f32 %v790, %v1030
    %v1066 = vsub.f32 %v791, %v1030
    %v1067 = vsub.f32 %v792, %v1031
    %v1068 = vsub.f32 %v793, %v1031
    %v1069 = vsub.f32 %v794, %v1032
    %v1070 = vsub.f32 %v795, %v1032
    %v1071 = vsub.f32 %v796, %v1033
    %v1072 = vsub.f32 %v797, %v1033
    %v1073 = vsub.f32 %v798, %v1034
    %v1074 = vsub.f32 %v799, %v1034
    %v1075 = vsub.f32 %v800, %v1035
    %v1076 = vsub.f32 %v801, %v1035
    %v1077 = vsub.f32 %v802, %v1036
    %v1078 = vsub.f32 %v803, %v1036
    %v1079 = vsub.f32 %v804, %v1037
    %v1080 = vsub.f32 %v805, %v1037
    %v1081 = vsub.f32 %v806, %v1038
    %v1082 = vsub.f32 %v807, %v1038
    %v1083 = vsub.f32 %v808, %v1039
    %v1084 = vsub.f32 %v809, %v1039
    %v1085 = vsub.f32 %v810, %v1040
    %v1086 = vsub.f32 %v811, %v1040
    %v1087 = vsub.f32 %v812, %v1041
    %v1088 = vsub.f32 %v813, %v1041
    %v1089 = vsub.f32 %v814, %v1042
    %v1090 = vsub.f32 %v815, %v1042
    %v1091 = vmul.f32 %v1059, 1.442695
    %v1092 = vpow.pop %v1091
    %v1093 = vmul.f32 %v1060, 1.442695
    %v1094 = vpow.pop %v1093
    %v1095 = vmul.f32 %v1061, 1.442695
    %v1096 = vpow.pop %v1095
    %v1097 = vmul.f32 %v1062, 1.442695
    %v1098 = vpow.pop %v1097
    %v1099 = vmul.f32 %v1063, 1.442695
    %v1100 = vpow.pop %v1099
    %v1101 = vmul.f32 %v1064, 1.442695
    %v1102 = vpow.pop %v1101
    %v1103 = vmul.f32 %v1065, 1.442695
    %v1104 = vpow.pop %v1103
    %v1105 = vmul.f32 %v1066, 1.442695
    %v1106 = vpow.pop %v1105
    %v1107 = vmul.f32 %v1067, 1.442695
    %v1108 = vpow.pop %v1107
    %v1109 = vmul.f32 %v1068, 1.442695
    %v1110 = vpow.pop %v1109
    %v1111 = vmul.f32 %v1069, 1.442695
    %v1112 = vpow.pop %v1111
    %v1113 = vmul.f32 %v1070, 1.442695
    %v1114 = vpow.pop %v1113
    %v1115 = vmul.f32 %v1071, 1.442695
    %v1116 = vpow.pop %v1115
    %v1117 = vmul.f32 %v1072, 1.442695
    %v1118 = vpow.pop %v1117
    %v1119 = vmul.f32 %v1073, 1.442695
    %v1120 = vpow.pop %v1119
    %v1121 = vmul.f32 %v1074, 1.442695
    %v1122 = vpow.pop %v1121
    %v1123 = vmul.f32 %v1075, 1.442695
    %v1124 = vpow.pop %v1123
    %v1125 = vmul.f32 %v1076, 1.442695
    %v1126 = vpow.pop %v1125
    %v1127 = vmul.f32 %v1077, 1.442695
    %v1128 = vpow.pop %v1127
    %v1129 = vmul.f32 %v1078, 1.442695
    %v1130 = vpow.pop %v1129
    %v1131 = vmul.f32 %v1079, 1.442695
    %v1132 = vpow.pop %v1131
    %v1133 = vmul.f32 %v1080, 1.442695
    %v1134 = vpow.pop %v1133
    %v1135 = vmul.f32 %v1081, 1.442695
    %v1136 = vpow.pop %v1135
    %v1137 = vmul.f32 %v1082, 1.442695
    %v1138 = vpow.pop %v1137
    %v1139 = vmul.f32 %v1083, 1.442695
    %v1140 = vpow.pop %v1139
    %v1141 = vmul.f32 %v1084, 1.442695
    %v1142 = vpow.pop %v1141
    %v1143 = vmul.f32 %v1085, 1.442695
    %v1144 = vpow.pop %v1143
    %v1145 = vmul.f32 %v1086, 1.442695
    %v1146 = vpow.pop %v1145
    %v1147 = vmul.f32 %v1087, 1.442695
    %v1148 = vpow.pop %v1147
    %v1149 = vmul.f32 %v1088, 1.442695
    %v1150 = vpow.pop %v1149
    %v1151 = vmul.f32 %v1089, 1.442695
    %v1152 = vpow.pop %v1151
    %v1153 = vmul.f32 %v1090, 1.442695
    %v1154 = vpow.pop %v1153
    %1187 = vset.pattern.permute.xlu0 0
    %1188 = vperm.xlu0 %1187, %v1092
    %v1189 = vpop.permute.xlu0 %1188
    %1190 = vset.pattern.permute.xlu0 0
    %1191 = vperm.xlu0 %1190, %v1094
    %v1192 = vpop.permute.xlu0 %1191
    %1193 = vset.pattern.permute.xlu0 0
    %1194 = vperm.xlu0 %1193, %v1096
    %v1195 = vpop.permute.xlu0 %1194
    %1196 = vset.pattern.permute.xlu0 0
    %1197 = vperm.xlu0 %1196, %v1098
    %v1198 = vpop.permute.xlu0 %1197
    %1199 = vset.pattern.permute.xlu0 0
    %1200 = vperm.xlu0 %1199, %v1100
    %v1201 = vpop.permute.xlu0 %1200
    %1202 = vset.pattern.permute.xlu0 0
    %1203 = vperm.xlu0 %1202, %v1102
    %v1204 = vpop.permute.xlu0 %1203
    %1205 = vset.pattern.permute.xlu0 0
    %1206 = vperm.xlu0 %1205, %v1104
    %v1207 = vpop.permute.xlu0 %1206
    %1208 = vset.pattern.permute.xlu0 0
    %1209 = vperm.xlu0 %1208, %v1106
    %v1210 = vpop.permute.xlu0 %1209
    %1211 = vset.pattern.permute.xlu0 0
    %1212 = vperm.xlu0 %1211, %v1108
    %v1213 = vpop.permute.xlu0 %1212
    %1214 = vset.pattern.permute.xlu0 0
    %1215 = vperm.xlu0 %1214, %v1110
    %v1216 = vpop.permute.xlu0 %1215
    %1217 = vset.pattern.permute.xlu0 0
    %1218 = vperm.xlu0 %1217, %v1112
    %v1219 = vpop.permute.xlu0 %1218
    %1220 = vset.pattern.permute.xlu0 0
    %1221 = vperm.xlu0 %1220, %v1114
    %v1222 = vpop.permute.xlu0 %1221
    %1223 = vset.pattern.permute.xlu0 0
    %1224 = vperm.xlu0 %1223, %v1116
    %v1225 = vpop.permute.xlu0 %1224
    %1226 = vset.pattern.permute.xlu0 0
    %1227 = vperm.xlu0 %1226, %v1118
    %v1228 = vpop.permute.xlu0 %1227
    %1229 = vset.pattern.permute.xlu0 0
    %1230 = vperm.xlu0 %1229, %v1120
    %v1231 = vpop.permute.xlu0 %1230
    %1232 = vset.pattern.permute.xlu0 0
    %1233 = vperm.xlu0 %1232, %v1122
    %v1234 = vpop.permute.xlu0 %1233
    %1235 = vset.pattern.permute.xlu0 0
    %1236 = vperm.xlu0 %1235, %v1124
    %v1237 = vpop.permute.xlu0 %1236
    %1238 = vset.pattern.permute.xlu0 0
    %1239 = vperm.xlu0 %1238, %v1126
    %v1240 = vpop.permute.xlu0 %1239
    %1241 = vset.pattern.permute.xlu0 0
    %1242 = vperm.xlu0 %1241, %v1128
    %v1243 = vpop.permute.xlu0 %1242
    %1244 = vset.pattern.permute.xlu0 0
    %1245 = vperm.xlu0 %1244, %v1130
    %v1246 = vpop.permute.xlu0 %1245
    %1247 = vset.pattern.permute.xlu0 0
    %1248 = vperm.xlu0 %1247, %v1132
    %v1249 = vpop.permute.xlu0 %1248
    %1250 = vset.pattern.permute.xlu0 0
    %1251 = vperm.xlu0 %1250, %v1134
    %v1252 = vpop.permute.xlu0 %1251
    %1253 = vset.pattern.permute.xlu0 0
    %1254 = vperm.xlu0 %1253, %v1136
    %v1255 = vpop.permute.xlu0 %1254
    %1256 = vset.pattern.permute.xlu0 0
    %1257 = vperm.xlu0 %1256, %v1138
    %v1258 = vpop.permute.xlu0 %1257
    %1259 = vset.pattern.permute.xlu0 0
    %1260 = vperm.xlu0 %1259, %v1140
    %v1261 = vpop.permute.xlu0 %1260
    %1262 = vset.pattern.permute.xlu0 0
    %1263 = vperm.xlu0 %1262, %v1142
    %v1264 = vpop.permute.xlu0 %1263
    %1265 = vset.pattern.permute.xlu0 0
    %1266 = vperm.xlu0 %1265, %v1144
    %v1267 = vpop.permute.xlu0 %1266
    %1268 = vset.pattern.permute.xlu0 0
    %1269 = vperm.xlu0 %1268, %v1146
    %v1270 = vpop.permute.xlu0 %1269
    %1271 = vset.pattern.permute.xlu0 0
    %1272 = vperm.xlu0 %1271, %v1148
    %v1273 = vpop.permute.xlu0 %1272
    %1274 = vset.pattern.permute.xlu0 0
    %1275 = vperm.xlu0 %1274, %v1150
    %v1276 = vpop.permute.xlu0 %1275
    %1277 = vset.pattern.permute.xlu0 0
    %1278 = vperm.xlu0 %1277, %v1152
    %v1279 = vpop.permute.xlu0 %1278
    %1280 = vset.pattern.permute.xlu0 0
    %1281 = vperm.xlu0 %1280, %v1154
    %v1282 = vpop.permute.xlu0 %1281
    %v1283 = vperm.slane %v1189, %v945
    %v1284 = vperm.slane %v1192, %v947
    %v1285 = vsel %vm949, %v1284, %v1283
    %v1286 = vperm.slane %v1195, %v945
    %v1287 = vperm.slane %v1198, %v947
    %v1288 = vsel %vm949, %v1287, %v1286
    %v1289 = vperm.slane %v1201, %v945
    %v1290 = vperm.slane %v1204, %v947
    %v1291 = vsel %vm949, %v1290, %v1289
    %v1292 = vperm.slane %v1207, %v945
    %v1293 = vperm.slane %v1210, %v947
    %v1294 = vsel %vm949, %v1293, %v1292
    %v1295 = vperm.slane %v1213, %v945
    %v1296 = vperm.slane %v1216, %v947
    %v1297 = vsel %vm949, %v1296, %v1295
    %v1298 = vperm.slane %v1219, %v945
    %v1299 = vperm.slane %v1222, %v947
    %v1300 = vsel %vm949, %v1299, %v1298
    %v1301 = vperm.slane %v1225, %v945
    %v1302 = vperm.slane %v1228, %v947
    %v1303 = vsel %vm949, %v1302, %v1301
    %v1304 = vperm.slane %v1231, %v945
    %v1305 = vperm.slane %v1234, %v947
    %v1306 = vsel %vm949, %v1305, %v1304
    %v1307 = vperm.slane %v1237, %v945
    %v1308 = vperm.slane %v1240, %v947
    %v1309 = vsel %vm949, %v1308, %v1307
    %v1310 = vperm.slane %v1243, %v945
    %v1311 = vperm.slane %v1246, %v947
    %v1312 = vsel %vm949, %v1311, %v1310
    %v1313 = vperm.slane %v1249, %v945
    %v1314 = vperm.slane %v1252, %v947
    %v1315 = vsel %vm949, %v1314, %v1313
    %v1316 = vperm.slane %v1255, %v945
    %v1317 = vperm.slane %v1258, %v947
    %v1318 = vsel %vm949, %v1317, %v1316
    %v1319 = vperm.slane %v1261, %v945
    %v1320 = vperm.slane %v1264, %v947
    %v1321 = vsel %vm949, %v1320, %v1319
    %v1322 = vperm.slane %v1267, %v945
    %v1323 = vperm.slane %v1270, %v947
    %v1324 = vsel %vm949, %v1323, %v1322
    %v1325 = vperm.slane %v1273, %v945
    %v1326 = vperm.slane %v1276, %v947
    %v1327 = vsel %vm949, %v1326, %v1325
    %v1328 = vperm.slane %v1279, %v945
    %v1329 = vperm.slane %v1282, %v947
    %v1330 = vsel %vm949, %v1329, %v1328
    %v1331 = vsel %vm996, %v1288, %v1285
    %v1332 = vsel %vm998, %v1291, %v1331
    %v1333 = vsel %vm1000, %v1294, %v1332
    %v1334 = vsel %vm1002, %v1297, %v1333
    %v1335 = vsel %vm1004, %v1300, %v1334
    %v1336 = vsel %vm1006, %v1303, %v1335
    %v1337 = vsel %vm1008, %v1306, %v1336
    %v1338 = vsel %vm996, %v1312, %v1309
    %v1339 = vsel %vm998, %v1315, %v1338
    %v1340 = vsel %vm1000, %v1318, %v1339
    %v1341 = vsel %vm1002, %v1321, %v1340
    %v1342 = vsel %vm1004, %v1324, %v1341
    %v1343 = vsel %vm1006, %v1327, %v1342
    %v1344 = vsel %vm1008, %v1330, %v1343
    %v1347 = vsel %vm445, %v1337, 0.0
    %1348 = vadd.xlane.f32.xlu0 %v1347
    %v1349 = vpop.xlane.xlu0 %1348
    %v1350 = vsel %vm445, %v1344, 0.0
    %1351 = vadd.xlane.f32.xlu0 %v1350
    %v1352 = vpop.xlane.xlu0 %1351
    %v1353 = vrcp.pop %v1349
    %v1354 = vrcp.pop %v1352
    %v1357 = vperm.slane %v1353, 0
    %v1358 = vperm.slane %v1353, 1
    %v1359 = vperm.slane %v1353, 2
    %v1360 = vperm.slane %v1353, 3
    %v1361 = vperm.slane %v1353, 4
    %v1362 = vperm.slane %v1353, 5
    %v1363 = vperm.slane %v1353, 6
    %v1364 = vperm.slane %v1353, 7
    %v1365 = vperm.slane %v1354, 0
    %v1366 = vperm.slane %v1354, 1
    %v1367 = vperm.slane %v1354, 2
    %v1368 = vperm.slane %v1354, 3
    %v1369 = vperm.slane %v1354, 4
    %v1370 = vperm.slane %v1354, 5
    %v1371 = vperm.slane %v1354, 6
    %v1372 = vperm.slane %v1354, 7
    %v1389 = vmul.f32 %v1092, %v1357
    %v1390 = vmul.f32 %v1094, %v1357
    %v1391 = vmul.f32 %v1096, %v1358
    %v1392 = vmul.f32 %v1098, %v1358
    %v1393 = vmul.f32 %v1100, %v1359
    %v1394 = vmul.f32 %v1102, %v1359
    %v1395 = vmul.f32 %v1104, %v1360
    %v1396 = vmul.f32 %v1106, %v1360
    %v1397 = vmul.f32 %v1108, %v1361
    %v1398 = vmul.f32 %v1110, %v1361
    %v1399 = vmul.f32 %v1112, %v1362
    %v1400 = vmul.f32 %v1114, %v1362
    %v1401 = vmul.f32 %v1116, %v1363
    %v1402 = vmul.f32 %v1118, %v1363
    %v1403 = vmul.f32 %v1120, %v1364
    %v1404 = vmul.f32 %v1122, %v1364
    %v1405 = vmul.f32 %v1124, %v1365
    %v1406 = vmul.f32 %v1126, %v1365
    %v1407 = vmul.f32 %v1128, %v1366
    %v1408 = vmul.f32 %v1130, %v1366
    %v1409 = vmul.f32 %v1132, %v1367
    %v1410 = vmul.f32 %v1134, %v1367
    %v1411 = vmul.f32 %v1136, %v1368
    %v1412 = vmul.f32 %v1138, %v1368
    %v1413 = vmul.f32 %v1140, %v1369
    %v1414 = vmul.f32 %v1142, %v1369
    %v1415 = vmul.f32 %v1144, %v1370
    %v1416 = vmul.f32 %v1146, %v1370
    %v1417 = vmul.f32 %v1148, %v1371
    %v1418 = vmul.f32 %v1150, %v1371
    %v1419 = vmul.f32 %v1152, %v1372
    %v1420 = vmul.f32 %v1154, %v1372
    %v1421 = vperm.slane %v97, 1
    %1423 = vrot.lane.b32.xlu0 %v1421, 48
    %v1424 = vpop.permute.xlu0 %1423
    %v1426 = vmul.f32 %v248, %v1424
    %v1427 = vmul.f32 %v249, %v1424
    %v1428 = vmul.f32 %v250, %v1424
    %v1429 = vmul.f32 %v251, %v1424
    %v1430 = vmul.f32 %v252, %v1424
    %v1431 = vmul.f32 %v253, %v1424
    %v1432 = vmul.f32 %v254, %v1424
    %v1433 = vmul.f32 %v255, %v1424
    %v1434 = vmul.f32 %v256, %v1424
    %v1435 = vmul.f32 %v257, %v1424
    %v1436 = vmul.f32 %v258, %v1424
    %v1437 = vmul.f32 %v259, %v1424
    %v1438 = vmul.f32 %v260, %v1424
    %v1439 = vmul.f32 %v261, %v1424
    %v1440 = vmul.f32 %v262, %v1424
    %v1441 = vmul.f32 %v263, %v1424
    %v1442 = vmul.f32 %v264, %v1424
    %v1443 = vmul.f32 %v265, %v1424
    %v1444 = vmul.f32 %v266, %v1424
    %v1445 = vmul.f32 %v267, %v1424
    %v1446 = vmul.f32 %v268, %v1424
    %v1447 = vmul.f32 %v269, %v1424
    %v1448 = vmul.f32 %v270, %v1424
    %v1449 = vmul.f32 %v271, %v1424
    %v1450 = vmul.f32 %v272, %v1424
    %v1451 = vmul.f32 %v273, %v1424
    %v1452 = vmul.f32 %v274, %v1424
    %v1453 = vmul.f32 %v275, %v1424
    %v1454 = vmul.f32 %v276, %v1424
    %v1455 = vmul.f32 %v277, %v1424
    %v1456 = vmul.f32 %v278, %v1424
    %v1457 = vmul.f32 %v279, %v1424
    %1490 = vrot.lane.b32.xlu0 %v1426, 80
    %v1491 = vpop.permute.xlu0 %1490
    %1492 = vrot.lane.b32.xlu0 %v1427, 80
    %v1493 = vpop.permute.xlu0 %1492
    %1494 = vrot.lane.b32.xlu0 %v1428, 80
    %v1495 = vpop.permute.xlu0 %1494
    %1496 = vrot.lane.b32.xlu0 %v1429, 80
    %v1497 = vpop.permute.xlu0 %1496
    %1498 = vrot.lane.b32.xlu0 %v1430, 80
    %v1499 = vpop.permute.xlu0 %1498
    %1500 = vrot.lane.b32.xlu0 %v1431, 80
    %v1501 = vpop.permute.xlu0 %1500
    %1502 = vrot.lane.b32.xlu0 %v1432, 80
    %v1503 = vpop.permute.xlu0 %1502
    %1504 = vrot.lane.b32.xlu0 %v1433, 80
    %v1505 = vpop.permute.xlu0 %1504
    %1506 = vrot.lane.b32.xlu0 %v1434, 80
    %v1507 = vpop.permute.xlu0 %1506
    %1508 = vrot.lane.b32.xlu0 %v1435, 80
    %v1509 = vpop.permute.xlu0 %1508
    %1510 = vrot.lane.b32.xlu0 %v1436, 80
    %v1511 = vpop.permute.xlu0 %1510
    %1512 = vrot.lane.b32.xlu0 %v1437, 80
    %v1513 = vpop.permute.xlu0 %1512
    %1514 = vrot.lane.b32.xlu0 %v1438, 80
    %v1515 = vpop.permute.xlu0 %1514
    %1516 = vrot.lane.b32.xlu0 %v1439, 80
    %v1517 = vpop.permute.xlu0 %1516
    %1518 = vrot.lane.b32.xlu0 %v1440, 80
    %v1519 = vpop.permute.xlu0 %1518
    %1520 = vrot.lane.b32.xlu0 %v1441, 80
    %v1521 = vpop.permute.xlu0 %1520
    %1522 = vrot.lane.b32.xlu0 %v1442, 80
    %v1523 = vpop.permute.xlu0 %1522
    %1524 = vrot.lane.b32.xlu0 %v1443, 80
    %v1525 = vpop.permute.xlu0 %1524
    %1526 = vrot.lane.b32.xlu0 %v1444, 80
    %v1527 = vpop.permute.xlu0 %1526
    %1528 = vrot.lane.b32.xlu0 %v1445, 80
    %v1529 = vpop.permute.xlu0 %1528
    %1530 = vrot.lane.b32.xlu0 %v1446, 80
    %v1531 = vpop.permute.xlu0 %1530
    %1532 = vrot.lane.b32.xlu0 %v1447, 80
    %v1533 = vpop.permute.xlu0 %1532
    %1534 = vrot.lane.b32.xlu0 %v1448, 80
    %v1535 = vpop.permute.xlu0 %1534
    %1536 = vrot.lane.b32.xlu0 %v1449, 80
    %v1537 = vpop.permute.xlu0 %1536
    %1538 = vrot.lane.b32.xlu0 %v1450, 80
    %v1539 = vpop.permute.xlu0 %1538
    %1540 = vrot.lane.b32.xlu0 %v1451, 80
    %v1541 = vpop.permute.xlu0 %1540
    %1542 = vrot.lane.b32.xlu0 %v1452, 80
    %v1543 = vpop.permute.xlu0 %1542
    %1544 = vrot.lane.b32.xlu0 %v1453, 80
    %v1545 = vpop.permute.xlu0 %1544
    %1546 = vrot.lane.b32.xlu0 %v1454, 80
    %v1547 = vpop.permute.xlu0 %1546
    %1548 = vrot.lane.b32.xlu0 %v1455, 80
    %v1549 = vpop.permute.xlu0 %1548
    %1550 = vrot.lane.b32.xlu0 %v1456, 80
    %v1551 = vpop.permute.xlu0 %1550
    %1552 = vrot.lane.b32.xlu0 %v1457, 80
    %v1553 = vpop.permute.xlu0 %1552
    %v1586 = vsel %vm445, %v1491, 0.0
    %1587 = vadd.xlane.f32.xlu0 %v1586
    %v1588 = vpop.xlane.xlu0 %1587
    %v1589 = vsel %vm445, %v1493, 0.0
    %1590 = vadd.xlane.f32.xlu0 %v1589
    %v1591 = vpop.xlane.xlu0 %1590
    %v1592 = vsel %vm445, %v1495, 0.0
    %1593 = vadd.xlane.f32.xlu0 %v1592
    %v1594 = vpop.xlane.xlu0 %1593
    %v1595 = vsel %vm445, %v1497, 0.0
    %1596 = vadd.xlane.f32.xlu0 %v1595
    %v1597 = vpop.xlane.xlu0 %1596
    %v1598 = vsel %vm445, %v1499, 0.0
    %1599 = vadd.xlane.f32.xlu0 %v1598
    %v1600 = vpop.xlane.xlu0 %1599
    %v1601 = vsel %vm445, %v1501, 0.0
    %1602 = vadd.xlane.f32.xlu0 %v1601
    %v1603 = vpop.xlane.xlu0 %1602
    %v1604 = vsel %vm445, %v1503, 0.0
    %1605 = vadd.xlane.f32.xlu0 %v1604
    %v1606 = vpop.xlane.xlu0 %1605
    %v1607 = vsel %vm445, %v1505, 0.0
    %1608 = vadd.xlane.f32.xlu0 %v1607
    %v1609 = vpop.xlane.xlu0 %1608
    %v1610 = vsel %vm445, %v1507, 0.0
    %1611 = vadd.xlane.f32.xlu0 %v1610
    %v1612 = vpop.xlane.xlu0 %1611
    %v1613 = vsel %vm445, %v1509, 0.0
    %1614 = vadd.xlane.f32.xlu0 %v1613
    %v1615 = vpop.xlane.xlu0 %1614
    %v1616 = vsel %vm445, %v1511, 0.0
    %1617 = vadd.xlane.f32.xlu0 %v1616
    %v1618 = vpop.xlane.xlu0 %1617
    %v1619 = vsel %vm445, %v1513, 0.0
    %1620 = vadd.xlane.f32.xlu0 %v1619
    %v1621 = vpop.xlane.xlu0 %1620
    %v1622 = vsel %vm445, %v1515, 0.0
    %1623 = vadd.xlane.f32.xlu0 %v1622
    %v1624 = vpop.xlane.xlu0 %1623
    %v1625 = vsel %vm445, %v1517, 0.0
    %1626 = vadd.xlane.f32.xlu0 %v1625
    %v1627 = vpop.xlane.xlu0 %1626
    %v1628 = vsel %vm445, %v1519, 0.0
    %1629 = vadd.xlane.f32.xlu0 %v1628
    %v1630 = vpop.xlane.xlu0 %1629
    %v1631 = vsel %vm445, %v1521, 0.0
    %1632 = vadd.xlane.f32.xlu0 %v1631
    %v1633 = vpop.xlane.xlu0 %1632
    %v1634 = vsel %vm445, %v1523, 0.0
    %1635 = vadd.xlane.f32.xlu0 %v1634
    %v1636 = vpop.xlane.xlu0 %1635
    %v1637 = vsel %vm445, %v1525, 0.0
    %1638 = vadd.xlane.f32.xlu0 %v1637
    %v1639 = vpop.xlane.xlu0 %1638
    %v1640 = vsel %vm445, %v1527, 0.0
    %1641 = vadd.xlane.f32.xlu0 %v1640
    %v1642 = vpop.xlane.xlu0 %1641
    %v1643 = vsel %vm445, %v1529, 0.0
    %1644 = vadd.xlane.f32.xlu0 %v1643
    %v1645 = vpop.xlane.xlu0 %1644
    %v1646 = vsel %vm445, %v1531, 0.0
    %1647 = vadd.xlane.f32.xlu0 %v1646
    %v1648 = vpop.xlane.xlu0 %1647
    %v1649 = vsel %vm445, %v1533, 0.0
    %1650 = vadd.xlane.f32.xlu0 %v1649
    %v1651 = vpop.xlane.xlu0 %1650
    %v1652 = vsel %vm445, %v1535, 0.0
    %1653 = vadd.xlane.f32.xlu0 %v1652
    %v1654 = vpop.xlane.xlu0 %1653
    %v1655 = vsel %vm445, %v1537, 0.0
    %1656 = vadd.xlane.f32.xlu0 %v1655
    %v1657 = vpop.xlane.xlu0 %1656
    %v1658 = vsel %vm445, %v1539, 0.0
    %1659 = vadd.xlane.f32.xlu0 %v1658
    %v1660 = vpop.xlane.xlu0 %1659
    %v1661 = vsel %vm445, %v1541, 0.0
    %1662 = vadd.xlane.f32.xlu0 %v1661
    %v1663 = vpop.xlane.xlu0 %1662
    %v1664 = vsel %vm445, %v1543, 0.0
    %1665 = vadd.xlane.f32.xlu0 %v1664
    %v1666 = vpop.xlane.xlu0 %1665
    %v1667 = vsel %vm445, %v1545, 0.0
    %1668 = vadd.xlane.f32.xlu0 %v1667
    %v1669 = vpop.xlane.xlu0 %1668
    %v1670 = vsel %vm445, %v1547, 0.0
    %1671 = vadd.xlane.f32.xlu0 %v1670
    %v1672 = vpop.xlane.xlu0 %1671
    %v1673 = vsel %vm445, %v1549, 0.0
    %1674 = vadd.xlane.f32.xlu0 %v1673
    %v1675 = vpop.xlane.xlu0 %1674
    %v1676 = vsel %vm445, %v1551, 0.0
    %1677 = vadd.xlane.f32.xlu0 %v1676
    %v1678 = vpop.xlane.xlu0 %1677
    %v1679 = vsel %vm445, %v1553, 0.0
    %1680 = vadd.xlane.f32.xlu0 %v1679
    %v1681 = vpop.xlane.xlu0 %1680
    %v1682 = vadd.f32 %v1588, %v550
    %v1683 = vadd.f32 %v1591, %v556
    %v1684 = vadd.f32 %v1594, %v563
    %v1685 = vadd.f32 %v1597, %v569
    %v1686 = vadd.f32 %v1600, %v576
    %v1687 = vadd.f32 %v1603, %v582
    %v1688 = vadd.f32 %v1606, %v589
    %v1689 = vadd.f32 %v1609, %v595
    %v1690 = vadd.f32 %v1612, %v602
    %v1691 = vadd.f32 %v1615, %v608
    %v1692 = vadd.f32 %v1618, %v615
    %v1693 = vadd.f32 %v1621, %v621
    %v1694 = vadd.f32 %v1624, %v628
    %v1695 = vadd.f32 %v1627, %v634
    %v1696 = vadd.f32 %v1630, %v641
    %v1697 = vadd.f32 %v1633, %v647
    %v1698 = vadd.f32 %v1636, %v654
    %v1699 = vadd.f32 %v1639, %v660
    %v1700 = vadd.f32 %v1642, %v667
    %v1701 = vadd.f32 %v1645, %v673
    %v1702 = vadd.f32 %v1648, %v680
    %v1703 = vadd.f32 %v1651, %v686
    %v1704 = vadd.f32 %v1654, %v693
    %v1705 = vadd.f32 %v1657, %v699
    %v1706 = vadd.f32 %v1660, %v706
    %v1707 = vadd.f32 %v1663, %v712
    %v1708 = vadd.f32 %v1666, %v719
    %v1709 = vadd.f32 %v1669, %v725
    %v1710 = vadd.f32 %v1672, %v732
    %v1711 = vadd.f32 %v1675, %v738
    %v1712 = vadd.f32 %v1678, %v745
    %v1713 = vadd.f32 %v1681, %v751
    %1746 = vset.pattern.permute.xlu0 0
    %1747 = vperm.xlu0 %1746, %v1682
    %v1748 = vpop.permute.xlu0 %1747
    %1749 = vset.pattern.permute.xlu0 0
    %1750 = vperm.xlu0 %1749, %v1683
    %v1751 = vpop.permute.xlu0 %1750
    %1752 = vset.pattern.permute.xlu0 0
    %1753 = vperm.xlu0 %1752, %v1684
    %v1754 = vpop.permute.xlu0 %1753
    %1755 = vset.pattern.permute.xlu0 0
    %1756 = vperm.xlu0 %1755, %v1685
    %v1757 = vpop.permute.xlu0 %1756
    %1758 = vset.pattern.permute.xlu0 0
    %1759 = vperm.xlu0 %1758, %v1686
    %v1760 = vpop.permute.xlu0 %1759
    %1761 = vset.pattern.permute.xlu0 0
    %1762 = vperm.xlu0 %1761, %v1687
    %v1763 = vpop.permute.xlu0 %1762
    %1764 = vset.pattern.permute.xlu0 0
    %1765 = vperm.xlu0 %1764, %v1688
    %v1766 = vpop.permute.xlu0 %1765
    %1767 = vset.pattern.permute.xlu0 0
    %1768 = vperm.xlu0 %1767, %v1689
    %v1769 = vpop.permute.xlu0 %1768
    %1770 = vset.pattern.permute.xlu0 0
    %1771 = vperm.xlu0 %1770, %v1690
    %v1772 = vpop.permute.xlu0 %1771
    %1773 = vset.pattern.permute.xlu0 0
    %1774 = vperm.xlu0 %1773, %v1691
    %v1775 = vpop.permute.xlu0 %1774
    %1776 = vset.pattern.permute.xlu0 0
    %1777 = vperm.xlu0 %1776, %v1692
    %v1778 = vpop.permute.xlu0 %1777
    %1779 = vset.pattern.permute.xlu0 0
    %1780 = vperm.xlu0 %1779, %v1693
    %v1781 = vpop.permute.xlu0 %1780
    %1782 = vset.pattern.permute.xlu0 0
    %1783 = vperm.xlu0 %1782, %v1694
    %v1784 = vpop.permute.xlu0 %1783
    %1785 = vset.pattern.permute.xlu0 0
    %1786 = vperm.xlu0 %1785, %v1695
    %v1787 = vpop.permute.xlu0 %1786
    %1788 = vset.pattern.permute.xlu0 0
    %1789 = vperm.xlu0 %1788, %v1696
    %v1790 = vpop.permute.xlu0 %1789
    %1791 = vset.pattern.permute.xlu0 0
    %1792 = vperm.xlu0 %1791, %v1697
    %v1793 = vpop.permute.xlu0 %1792
    %1794 = vset.pattern.permute.xlu0 0
    %1795 = vperm.xlu0 %1794, %v1698
    %v1796 = vpop.permute.xlu0 %1795
    %1797 = vset.pattern.permute.xlu0 0
    %1798 = vperm.xlu0 %1797, %v1699
    %v1799 = vpop.permute.xlu0 %1798
    %1800 = vset.pattern.permute.xlu0 0
    %1801 = vperm.xlu0 %1800, %v1700
    %v1802 = vpop.permute.xlu0 %1801
    %1803 = vset.pattern.permute.xlu0 0
    %1804 = vperm.xlu0 %1803, %v1701
    %v1805 = vpop.permute.xlu0 %1804
    %1806 = vset.pattern.permute.xlu0 0
    %1807 = vperm.xlu0 %1806, %v1702
    %v1808 = vpop.permute.xlu0 %1807
    %1809 = vset.pattern.permute.xlu0 0
    %1810 = vperm.xlu0 %1809, %v1703
    %v1811 = vpop.permute.xlu0 %1810
    %1812 = vset.pattern.permute.xlu0 0
    %1813 = vperm.xlu0 %1812, %v1704
    %v1814 = vpop.permute.xlu0 %1813
    %1815 = vset.pattern.permute.xlu0 0
    %1816 = vperm.xlu0 %1815, %v1705
    %v1817 = vpop.permute.xlu0 %1816
    %1818 = vset.pattern.permute.xlu0 0
    %1819 = vperm.xlu0 %1818, %v1706
    %v1820 = vpop.permute.xlu0 %1819
    %1821 = vset.pattern.permute.xlu0 0
    %1822 = vperm.xlu0 %1821, %v1707
    %v1823 = vpop.permute.xlu0 %1822
    %1824 = vset.pattern.permute.xlu0 0
    %1825 = vperm.xlu0 %1824, %v1708
    %v1826 = vpop.permute.xlu0 %1825
    %1827 = vset.pattern.permute.xlu0 0
    %1828 = vperm.xlu0 %1827, %v1709
    %v1829 = vpop.permute.xlu0 %1828
    %1830 = vset.pattern.permute.xlu0 0
    %1831 = vperm.xlu0 %1830, %v1710
    %v1832 = vpop.permute.xlu0 %1831
    %1833 = vset.pattern.permute.xlu0 0
    %1834 = vperm.xlu0 %1833, %v1711
    %v1835 = vpop.permute.xlu0 %1834
    %1836 = vset.pattern.permute.xlu0 0
    %1837 = vperm.xlu0 %1836, %v1712
    %v1838 = vpop.permute.xlu0 %1837
    %1839 = vset.pattern.permute.xlu0 0
    %1840 = vperm.xlu0 %1839, %v1713
    %v1841 = vpop.permute.xlu0 %1840
    %v1842 = vperm.slane %v1748, %v945
    %v1843 = vperm.slane %v1751, %v947
    %v1844 = vsel %vm949, %v1843, %v1842
    %v1845 = vperm.slane %v1754, %v945
    %v1846 = vperm.slane %v1757, %v947
    %v1847 = vsel %vm949, %v1846, %v1845
    %v1848 = vperm.slane %v1760, %v945
    %v1849 = vperm.slane %v1763, %v947
    %v1850 = vsel %vm949, %v1849, %v1848
    %v1851 = vperm.slane %v1766, %v945
    %v1852 = vperm.slane %v1769, %v947
    %v1853 = vsel %vm949, %v1852, %v1851
    %v1854 = vperm.slane %v1772, %v945
    %v1855 = vperm.slane %v1775, %v947
    %v1856 = vsel %vm949, %v1855, %v1854
    %v1857 = vperm.slane %v1778, %v945
    %v1858 = vperm.slane %v1781, %v947
    %v1859 = vsel %vm949, %v1858, %v1857
    %v1860 = vperm.slane %v1784, %v945
    %v1861 = vperm.slane %v1787, %v947
    %v1862 = vsel %vm949, %v1861, %v1860
    %v1863 = vperm.slane %v1790, %v945
    %v1864 = vperm.slane %v1793, %v947
    %v1865 = vsel %vm949, %v1864, %v1863
    %v1866 = vperm.slane %v1796, %v945
    %v1867 = vperm.slane %v1799, %v947
    %v1868 = vsel %vm949, %v1867, %v1866
    %v1869 = vperm.slane %v1802, %v945
    %v1870 = vperm.slane %v1805, %v947
    %v1871 = vsel %vm949, %v1870, %v1869
    %v1872 = vperm.slane %v1808, %v945
    %v1873 = vperm.slane %v1811, %v947
    %v1874 = vsel %vm949, %v1873, %v1872
    %v1875 = vperm.slane %v1814, %v945
    %v1876 = vperm.slane %v1817, %v947
    %v1877 = vsel %vm949, %v1876, %v1875
    %v1878 = vperm.slane %v1820, %v945
    %v1879 = vperm.slane %v1823, %v947
    %v1880 = vsel %vm949, %v1879, %v1878
    %v1881 = vperm.slane %v1826, %v945
    %v1882 = vperm.slane %v1829, %v947
    %v1883 = vsel %vm949, %v1882, %v1881
    %v1884 = vperm.slane %v1832, %v945
    %v1885 = vperm.slane %v1835, %v947
    %v1886 = vsel %vm949, %v1885, %v1884
    %v1887 = vperm.slane %v1838, %v945
    %v1888 = vperm.slane %v1841, %v947
    %v1889 = vsel %vm949, %v1888, %v1887
    %v1890 = vsel %vm996, %v1847, %v1844
    %v1891 = vsel %vm998, %v1850, %v1890
    %v1892 = vsel %vm1000, %v1853, %v1891
    %v1893 = vsel %vm1002, %v1856, %v1892
    %v1894 = vsel %vm1004, %v1859, %v1893
    %v1895 = vsel %vm1006, %v1862, %v1894
    %v1896 = vsel %vm1008, %v1865, %v1895
    %v1897 = vsel %vm996, %v1871, %v1868
    %v1898 = vsel %vm998, %v1874, %v1897
    %v1899 = vsel %vm1000, %v1877, %v1898
    %v1900 = vsel %vm1002, %v1880, %v1899
    %v1901 = vsel %vm1004, %v1883, %v1900
    %v1902 = vsel %vm1006, %v1886, %v1901
    %v1903 = vsel %vm1008, %v1889, %v1902
    %v1906 = vsel %vm445, %v1896, -inf
    %1907 = vmax.xlane.f32.xlu0 %v1906
    %v1908 = vpop.xlane.xlu0 %1907
    %v1909 = vsel %vm445, %v1903, -inf
    %1910 = vmax.xlane.f32.xlu0 %v1909
    %v1911 = vpop.xlane.xlu0 %1910
    %v1914 = vperm.slane %v1908, 0
    %v1915 = vperm.slane %v1908, 1
    %v1916 = vperm.slane %v1908, 2
    %v1917 = vperm.slane %v1908, 3
    %v1918 = vperm.slane %v1908, 4
    %v1919 = vperm.slane %v1908, 5
    %v1920 = vperm.slane %v1908, 6
    %v1921 = vperm.slane %v1908, 7
    %v1922 = vperm.slane %v1911, 0
    %v1923 = vperm.slane %v1911, 1
    %v1924 = vperm.slane %v1911, 2
    %v1925 = vperm.slane %v1911, 3
    %v1926 = vperm.slane %v1911, 4
    %v1927 = vperm.slane %v1911, 5
    %v1928 = vperm.slane %v1911, 6
    %v1929 = vperm.slane %v1911, 7
    %v1946 = vsub.f32 %v1682, %v1914
    %v1947 = vsub.f32 %v1683, %v1914
    %v1948 = vsub.f32 %v1684, %v1915
    %v1949 = vsub.f32 %v1685, %v1915
    %v1950 = vsub.f32 %v1686, %v1916
    %v1951 = vsub.f32 %v1687, %v1916
    %v1952 = vsub.f32 %v1688, %v1917
    %v1953 = vsub.f32 %v1689, %v1917
    %v1954 = vsub.f32 %v1690, %v1918
    %v1955 = vsub.f32 %v1691, %v1918
    %v1956 = vsub.f32 %v1692, %v1919
    %v1957 = vsub.f32 %v1693, %v1919
    %v1958 = vsub.f32 %v1694, %v1920
    %v1959 = vsub.f32 %v1695, %v1920
    %v1960 = vsub.f32 %v1696, %v1921
    %v1961 = vsub.f32 %v1697, %v1921
    %v1962 = vsub.f32 %v1698, %v1922
    %v1963 = vsub.f32 %v1699, %v1922
    %v1964 = vsub.f32 %v1700, %v1923
    %v1965 = vsub.f32 %v1701, %v1923
    %v1966 = vsub.f32 %v1702, %v1924
    %v1967 = vsub.f32 %v1703, %v1924
    %v1968 = vsub.f32 %v1704, %v1925
    %v1969 = vsub.f32 %v1705, %v1925
    %v1970 = vsub.f32 %v1706, %v1926
    %v1971 = vsub.f32 %v1707, %v1926
    %v1972 = vsub.f32 %v1708, %v1927
    %v1973 = vsub.f32 %v1709, %v1927
    %v1974 = vsub.f32 %v1710, %v1928
    %v1975 = vsub.f32 %v1711, %v1928
    %v1976 = vsub.f32 %v1712, %v1929
    %v1977 = vsub.f32 %v1713, %v1929
    %v1978 = vmul.f32 %v1946, 1.442695
    %v1979 = vpow.pop %v1978
    %v1980 = vmul.f32 %v1947, 1.442695
    %v1981 = vpow.pop %v1980
    %v1982 = vmul.f32 %v1948, 1.442695
    %v1983 = vpow.pop %v1982
    %v1984 = vmul.f32 %v1949, 1.442695
    %v1985 = vpow.pop %v1984
    %v1986 = vmul.f32 %v1950, 1.442695
    %v1987 = vpow.pop %v1986
    %v1988 = vmul.f32 %v1951, 1.442695
    %v1989 = vpow.pop %v1988
    %v1990 = vmul.f32 %v1952, 1.442695
    %v1991 = vpow.pop %v1990
    %v1992 = vmul.f32 %v1953, 1.442695
    %v1993 = vpow.pop %v1992
    %v1994 = vmul.f32 %v1954, 1.442695
    %v1995 = vpow.pop %v1994
    %v1996 = vmul.f32 %v1955, 1.442695
    %v1997 = vpow.pop %v1996
    %v1998 = vmul.f32 %v1956, 1.442695
    %v1999 = vpow.pop %v1998
    %v2000 = vmul.f32 %v1957, 1.442695
    %v2001 = vpow.pop %v2000
    %v2002 = vmul.f32 %v1958, 1.442695
    %v2003 = vpow.pop %v2002
    %v2004 = vmul.f32 %v1959, 1.442695
    %v2005 = vpow.pop %v2004
    %v2006 = vmul.f32 %v1960, 1.442695
    %v2007 = vpow.pop %v2006
    %v2008 = vmul.f32 %v1961, 1.442695
    %v2009 = vpow.pop %v2008
    %v2010 = vmul.f32 %v1962, 1.442695
    %v2011 = vpow.pop %v2010
    %v2012 = vmul.f32 %v1963, 1.442695
    %v2013 = vpow.pop %v2012
    %v2014 = vmul.f32 %v1964, 1.442695
    %v2015 = vpow.pop %v2014
    %v2016 = vmul.f32 %v1965, 1.442695
    %v2017 = vpow.pop %v2016
    %v2018 = vmul.f32 %v1966, 1.442695
    %v2019 = vpow.pop %v2018
    %v2020 = vmul.f32 %v1967, 1.442695
    %v2021 = vpow.pop %v2020
    %v2022 = vmul.f32 %v1968, 1.442695
    %v2023 = vpow.pop %v2022
    %v2024 = vmul.f32 %v1969, 1.442695
    %v2025 = vpow.pop %v2024
    %v2026 = vmul.f32 %v1970, 1.442695
    %v2027 = vpow.pop %v2026
    %v2028 = vmul.f32 %v1971, 1.442695
    %v2029 = vpow.pop %v2028
    %v2030 = vmul.f32 %v1972, 1.442695
    %v2031 = vpow.pop %v2030
    %v2032 = vmul.f32 %v1973, 1.442695
    %v2033 = vpow.pop %v2032
    %v2034 = vmul.f32 %v1974, 1.442695
    %v2035 = vpow.pop %v2034
    %v2036 = vmul.f32 %v1975, 1.442695
    %v2037 = vpow.pop %v2036
    %v2038 = vmul.f32 %v1976, 1.442695
    %v2039 = vpow.pop %v2038
    %v2040 = vmul.f32 %v1977, 1.442695
    %v2041 = vpow.pop %v2040
    %2074 = vset.pattern.permute.xlu0 0
    %2075 = vperm.xlu0 %2074, %v1979
    %v2076 = vpop.permute.xlu0 %2075
    %2077 = vset.pattern.permute.xlu0 0
    %2078 = vperm.xlu0 %2077, %v1981
    %v2079 = vpop.permute.xlu0 %2078
    %2080 = vset.pattern.permute.xlu0 0
    %2081 = vperm.xlu0 %2080, %v1983
    %v2082 = vpop.permute.xlu0 %2081
    %2083 = vset.pattern.permute.xlu0 0
    %2084 = vperm.xlu0 %2083, %v1985
    %v2085 = vpop.permute.xlu0 %2084
    %2086 = vset.pattern.permute.xlu0 0
    %2087 = vperm.xlu0 %2086, %v1987
    %v2088 = vpop.permute.xlu0 %2087
    %2089 = vset.pattern.permute.xlu0 0
    %2090 = vperm.xlu0 %2089, %v1989
    %v2091 = vpop.permute.xlu0 %2090
    %2092 = vset.pattern.permute.xlu0 0
    %2093 = vperm.xlu0 %2092, %v1991
    %v2094 = vpop.permute.xlu0 %2093
    %2095 = vset.pattern.permute.xlu0 0
    %2096 = vperm.xlu0 %2095, %v1993
    %v2097 = vpop.permute.xlu0 %2096
    %2098 = vset.pattern.permute.xlu0 0
    %2099 = vperm.xlu0 %2098, %v1995
    %v2100 = vpop.permute.xlu0 %2099
    %2101 = vset.pattern.permute.xlu0 0
    %2102 = vperm.xlu0 %2101, %v1997
    %v2103 = vpop.permute.xlu0 %2102
    %2104 = vset.pattern.permute.xlu0 0
    %2105 = vperm.xlu0 %2104, %v1999
    %v2106 = vpop.permute.xlu0 %2105
    %2107 = vset.pattern.permute.xlu0 0
    %2108 = vperm.xlu0 %2107, %v2001
    %v2109 = vpop.permute.xlu0 %2108
    %2110 = vset.pattern.permute.xlu0 0
    %2111 = vperm.xlu0 %2110, %v2003
    %v2112 = vpop.permute.xlu0 %2111
    %2113 = vset.pattern.permute.xlu0 0
    %2114 = vperm.xlu0 %2113, %v2005
    %v2115 = vpop.permute.xlu0 %2114
    %2116 = vset.pattern.permute.xlu0 0
    %2117 = vperm.xlu0 %2116, %v2007
    %v2118 = vpop.permute.xlu0 %2117
    %2119 = vset.pattern.permute.xlu0 0
    %2120 = vperm.xlu0 %2119, %v2009
    %v2121 = vpop.permute.xlu0 %2120
    %2122 = vset.pattern.permute.xlu0 0
    %2123 = vperm.xlu0 %2122, %v2011
    %v2124 = vpop.permute.xlu0 %2123
    %2125 = vset.pattern.permute.xlu0 0
    %2126 = vperm.xlu0 %2125, %v2013
    %v2127 = vpop.permute.xlu0 %2126
    %2128 = vset.pattern.permute.xlu0 0
    %2129 = vperm.xlu0 %2128, %v2015
    %v2130 = vpop.permute.xlu0 %2129
    %2131 = vset.pattern.permute.xlu0 0
    %2132 = vperm.xlu0 %2131, %v2017
    %v2133 = vpop.permute.xlu0 %2132
    %2134 = vset.pattern.permute.xlu0 0
    %2135 = vperm.xlu0 %2134, %v2019
    %v2136 = vpop.permute.xlu0 %2135
    %2137 = vset.pattern.permute.xlu0 0
    %2138 = vperm.xlu0 %2137, %v2021
    %v2139 = vpop.permute.xlu0 %2138
    %2140 = vset.pattern.permute.xlu0 0
    %2141 = vperm.xlu0 %2140, %v2023
    %v2142 = vpop.permute.xlu0 %2141
    %2143 = vset.pattern.permute.xlu0 0
    %2144 = vperm.xlu0 %2143, %v2025
    %v2145 = vpop.permute.xlu0 %2144
    %2146 = vset.pattern.permute.xlu0 0
    %2147 = vperm.xlu0 %2146, %v2027
    %v2148 = vpop.permute.xlu0 %2147
    %2149 = vset.pattern.permute.xlu0 0
    %2150 = vperm.xlu0 %2149, %v2029
    %v2151 = vpop.permute.xlu0 %2150
    %2152 = vset.pattern.permute.xlu0 0
    %2153 = vperm.xlu0 %2152, %v2031
    %v2154 = vpop.permute.xlu0 %2153
    %2155 = vset.pattern.permute.xlu0 0
    %2156 = vperm.xlu0 %2155, %v2033
    %v2157 = vpop.permute.xlu0 %2156
    %2158 = vset.pattern.permute.xlu0 0
    %2159 = vperm.xlu0 %2158, %v2035
    %v2160 = vpop.permute.xlu0 %2159
    %2161 = vset.pattern.permute.xlu0 0
    %2162 = vperm.xlu0 %2161, %v2037
    %v2163 = vpop.permute.xlu0 %2162
    %2164 = vset.pattern.permute.xlu0 0
    %2165 = vperm.xlu0 %2164, %v2039
    %v2166 = vpop.permute.xlu0 %2165
    %2167 = vset.pattern.permute.xlu0 0
    %2168 = vperm.xlu0 %2167, %v2041
    %v2169 = vpop.permute.xlu0 %2168
    %v2170 = vperm.slane %v2076, %v945
    %v2171 = vperm.slane %v2079, %v947
    %v2172 = vsel %vm949, %v2171, %v2170
    %v2173 = vperm.slane %v2082, %v945
    %v2174 = vperm.slane %v2085, %v947
    %v2175 = vsel %vm949, %v2174, %v2173
    %v2176 = vperm.slane %v2088, %v945
    %v2177 = vperm.slane %v2091, %v947
    %v2178 = vsel %vm949, %v2177, %v2176
    %v2179 = vperm.slane %v2094, %v945
    %v2180 = vperm.slane %v2097, %v947
    %v2181 = vsel %vm949, %v2180, %v2179
    %v2182 = vperm.slane %v2100, %v945
    %v2183 = vperm.slane %v2103, %v947
    %v2184 = vsel %vm949, %v2183, %v2182
    %v2185 = vperm.slane %v2106, %v945
    %v2186 = vperm.slane %v2109, %v947
    %v2187 = vsel %vm949, %v2186, %v2185
    %v2188 = vperm.slane %v2112, %v945
    %v2189 = vperm.slane %v2115, %v947
    %v2190 = vsel %vm949, %v2189, %v2188
    %v2191 = vperm.slane %v2118, %v945
    %v2192 = vperm.slane %v2121, %v947
    %v2193 = vsel %vm949, %v2192, %v2191
    %v2194 = vperm.slane %v2124, %v945
    %v2195 = vperm.slane %v2127, %v947
    %v2196 = vsel %vm949, %v2195, %v2194
    %v2197 = vperm.slane %v2130, %v945
    %v2198 = vperm.slane %v2133, %v947
    %v2199 = vsel %vm949, %v2198, %v2197
    %v2200 = vperm.slane %v2136, %v945
    %v2201 = vperm.slane %v2139, %v947
    %v2202 = vsel %vm949, %v2201, %v2200
    %v2203 = vperm.slane %v2142, %v945
    %v2204 = vperm.slane %v2145, %v947
    %v2205 = vsel %vm949, %v2204, %v2203
    %v2206 = vperm.slane %v2148, %v945
    %v2207 = vperm.slane %v2151, %v947
    %v2208 = vsel %vm949, %v2207, %v2206
    %v2209 = vperm.slane %v2154, %v945
    %v2210 = vperm.slane %v2157, %v947
    %v2211 = vsel %vm949, %v2210, %v2209
    %v2212 = vperm.slane %v2160, %v945
    %v2213 = vperm.slane %v2163, %v947
    %v2214 = vsel %vm949, %v2213, %v2212
    %v2215 = vperm.slane %v2166, %v945
    %v2216 = vperm.slane %v2169, %v947
    %v2217 = vsel %vm949, %v2216, %v2215
    %v2218 = vsel %vm996, %v2175, %v2172
    %v2219 = vsel %vm998, %v2178, %v2218
    %v2220 = vsel %vm1000, %v2181, %v2219
    %v2221 = vsel %vm1002, %v2184, %v2220
    %v2222 = vsel %vm1004, %v2187, %v2221
    %v2223 = vsel %vm1006, %v2190, %v2222
    %v2224 = vsel %vm1008, %v2193, %v2223
    %v2225 = vsel %vm996, %v2199, %v2196
    %v2226 = vsel %vm998, %v2202, %v2225
    %v2227 = vsel %vm1000, %v2205, %v2226
    %v2228 = vsel %vm1002, %v2208, %v2227
    %v2229 = vsel %vm1004, %v2211, %v2228
    %v2230 = vsel %vm1006, %v2214, %v2229
    %v2231 = vsel %vm1008, %v2217, %v2230
    %v2234 = vsel %vm445, %v2224, 0.0
    %2235 = vadd.xlane.f32.xlu0 %v2234
    %v2236 = vpop.xlane.xlu0 %2235
    %v2237 = vsel %vm445, %v2231, 0.0
    %2238 = vadd.xlane.f32.xlu0 %v2237
    %v2239 = vpop.xlane.xlu0 %2238
    %v2240 = vrcp.pop %v2236
    %v2241 = vrcp.pop %v2239
    %v2244 = vperm.slane %v2240, 0
    %v2245 = vperm.slane %v2240, 1
    %v2246 = vperm.slane %v2240, 2
    %v2247 = vperm.slane %v2240, 3
    %v2248 = vperm.slane %v2240, 4
    %v2249 = vperm.slane %v2240, 5
    %v2250 = vperm.slane %v2240, 6
    %v2251 = vperm.slane %v2240, 7
    %v2252 = vperm.slane %v2241, 0
    %v2253 = vperm.slane %v2241, 1
    %v2254 = vperm.slane %v2241, 2
    %v2255 = vperm.slane %v2241, 3
    %v2256 = vperm.slane %v2241, 4
    %v2257 = vperm.slane %v2241, 5
    %v2258 = vperm.slane %v2241, 6
    %v2259 = vperm.slane %v2241, 7
    %v2276 = vmul.f32 %v1979, %v2244
    %v2277 = vmul.f32 %v1981, %v2244
    %v2278 = vmul.f32 %v1983, %v2245
    %v2279 = vmul.f32 %v1985, %v2245
    %v2280 = vmul.f32 %v1987, %v2246
    %v2281 = vmul.f32 %v1989, %v2246
    %v2282 = vmul.f32 %v1991, %v2247
    %v2283 = vmul.f32 %v1993, %v2247
    %v2284 = vmul.f32 %v1995, %v2248
    %v2285 = vmul.f32 %v1997, %v2248
    %v2286 = vmul.f32 %v1999, %v2249
    %v2287 = vmul.f32 %v2001, %v2249
    %v2288 = vmul.f32 %v2003, %v2250
    %v2289 = vmul.f32 %v2005, %v2250
    %v2290 = vmul.f32 %v2007, %v2251
    %v2291 = vmul.f32 %v2009, %v2251
    %v2292 = vmul.f32 %v2011, %v2252
    %v2293 = vmul.f32 %v2013, %v2252
    %v2294 = vmul.f32 %v2015, %v2253
    %v2295 = vmul.f32 %v2017, %v2253
    %v2296 = vmul.f32 %v2019, %v2254
    %v2297 = vmul.f32 %v2021, %v2254
    %v2298 = vmul.f32 %v2023, %v2255
    %v2299 = vmul.f32 %v2025, %v2255
    %v2300 = vmul.f32 %v2027, %v2256
    %v2301 = vmul.f32 %v2029, %v2256
    %v2302 = vmul.f32 %v2031, %v2257
    %v2303 = vmul.f32 %v2033, %v2257
    %v2304 = vmul.f32 %v2035, %v2258
    %v2305 = vmul.f32 %v2037, %v2258
    %v2306 = vmul.f32 %v2039, %v2259
    %v2307 = vmul.f32 %v2041, %v2259
    %v2308 = vld [vmem:[%s6] sm:$0x3]
    %v2309 = vperm.slane %v2308, 0
    %2342 = vset.pattern.permute.xlu0 0
    %2343 = vperm.xlu0 %2342, %v1389
    %v2344 = vpop.permute.xlu0 %2343
    %2345 = vset.pattern.permute.xlu0 0
    %2346 = vperm.xlu0 %2345, %v1390
    %v2347 = vpop.permute.xlu0 %2346
    %2348 = vset.pattern.permute.xlu0 0
    %2349 = vperm.xlu0 %2348, %v1391
    %v2350 = vpop.permute.xlu0 %2349
    %2351 = vset.pattern.permute.xlu0 0
    %2352 = vperm.xlu0 %2351, %v1392
    %v2353 = vpop.permute.xlu0 %2352
    %2354 = vset.pattern.permute.xlu0 0
    %2355 = vperm.xlu0 %2354, %v1393
    %v2356 = vpop.permute.xlu0 %2355
    %2357 = vset.pattern.permute.xlu0 0
    %2358 = vperm.xlu0 %2357, %v1394
    %v2359 = vpop.permute.xlu0 %2358
    %2360 = vset.pattern.permute.xlu0 0
    %2361 = vperm.xlu0 %2360, %v1395
    %v2362 = vpop.permute.xlu0 %2361
    %2363 = vset.pattern.permute.xlu0 0
    %2364 = vperm.xlu0 %2363, %v1396
    %v2365 = vpop.permute.xlu0 %2364
    %2366 = vset.pattern.permute.xlu0 0
    %2367 = vperm.xlu0 %2366, %v1397
    %v2368 = vpop.permute.xlu0 %2367
    %2369 = vset.pattern.permute.xlu0 0
    %2370 = vperm.xlu0 %2369, %v1398
    %v2371 = vpop.permute.xlu0 %2370
    %2372 = vset.pattern.permute.xlu0 0
    %2373 = vperm.xlu0 %2372, %v1399
    %v2374 = vpop.permute.xlu0 %2373
    %2375 = vset.pattern.permute.xlu0 0
    %2376 = vperm.xlu0 %2375, %v1400
    %v2377 = vpop.permute.xlu0 %2376
    %2378 = vset.pattern.permute.xlu0 0
    %2379 = vperm.xlu0 %2378, %v1401
    %v2380 = vpop.permute.xlu0 %2379
    %2381 = vset.pattern.permute.xlu0 0
    %2382 = vperm.xlu0 %2381, %v1402
    %v2383 = vpop.permute.xlu0 %2382
    %2384 = vset.pattern.permute.xlu0 0
    %2385 = vperm.xlu0 %2384, %v1403
    %v2386 = vpop.permute.xlu0 %2385
    %2387 = vset.pattern.permute.xlu0 0
    %2388 = vperm.xlu0 %2387, %v1404
    %v2389 = vpop.permute.xlu0 %2388
    %2390 = vset.pattern.permute.xlu0 0
    %2391 = vperm.xlu0 %2390, %v1405
    %v2392 = vpop.permute.xlu0 %2391
    %2393 = vset.pattern.permute.xlu0 0
    %2394 = vperm.xlu0 %2393, %v1406
    %v2395 = vpop.permute.xlu0 %2394
    %2396 = vset.pattern.permute.xlu0 0
    %2397 = vperm.xlu0 %2396, %v1407
    %v2398 = vpop.permute.xlu0 %2397
    %2399 = vset.pattern.permute.xlu0 0
    %2400 = vperm.xlu0 %2399, %v1408
    %v2401 = vpop.permute.xlu0 %2400
    %2402 = vset.pattern.permute.xlu0 0
    %2403 = vperm.xlu0 %2402, %v1409
    %v2404 = vpop.permute.xlu0 %2403
    %2405 = vset.pattern.permute.xlu0 0
    %2406 = vperm.xlu0 %2405, %v1410
    %v2407 = vpop.permute.xlu0 %2406
    %2408 = vset.pattern.permute.xlu0 0
    %2409 = vperm.xlu0 %2408, %v1411
    %v2410 = vpop.permute.xlu0 %2409
    %2411 = vset.pattern.permute.xlu0 0
    %2412 = vperm.xlu0 %2411, %v1412
    %v2413 = vpop.permute.xlu0 %2412
    %2414 = vset.pattern.permute.xlu0 0
    %2415 = vperm.xlu0 %2414, %v1413
    %v2416 = vpop.permute.xlu0 %2415
    %2417 = vset.pattern.permute.xlu0 0
    %2418 = vperm.xlu0 %2417, %v1414
    %v2419 = vpop.permute.xlu0 %2418
    %2420 = vset.pattern.permute.xlu0 0
    %2421 = vperm.xlu0 %2420, %v1415
    %v2422 = vpop.permute.xlu0 %2421
    %2423 = vset.pattern.permute.xlu0 0
    %2424 = vperm.xlu0 %2423, %v1416
    %v2425 = vpop.permute.xlu0 %2424
    %2426 = vset.pattern.permute.xlu0 0
    %2427 = vperm.xlu0 %2426, %v1417
    %v2428 = vpop.permute.xlu0 %2427
    %2429 = vset.pattern.permute.xlu0 0
    %2430 = vperm.xlu0 %2429, %v1418
    %v2431 = vpop.permute.xlu0 %2430
    %2432 = vset.pattern.permute.xlu0 0
    %2433 = vperm.xlu0 %2432, %v1419
    %v2434 = vpop.permute.xlu0 %2433
    %2435 = vset.pattern.permute.xlu0 0
    %2436 = vperm.xlu0 %2435, %v1420
    %v2437 = vpop.permute.xlu0 %2436
    %v2438 = vperm.slane %v2344, %v945
    %v2439 = vperm.slane %v2347, %v947
    %v2440 = vsel %vm949, %v2439, %v2438
    %v2441 = vperm.slane %v2350, %v945
    %v2442 = vperm.slane %v2353, %v947
    %v2443 = vsel %vm949, %v2442, %v2441
    %v2444 = vperm.slane %v2356, %v945
    %v2445 = vperm.slane %v2359, %v947
    %v2446 = vsel %vm949, %v2445, %v2444
    %v2447 = vperm.slane %v2362, %v945
    %v2448 = vperm.slane %v2365, %v947
    %v2449 = vsel %vm949, %v2448, %v2447
    %v2450 = vperm.slane %v2368, %v945
    %v2451 = vperm.slane %v2371, %v947
    %v2452 = vsel %vm949, %v2451, %v2450
    %v2453 = vperm.slane %v2374, %v945
    %v2454 = vperm.slane %v2377, %v947
    %v2455 = vsel %vm949, %v2454, %v2453
    %v2456 = vperm.slane %v2380, %v945
    %v2457 = vperm.slane %v2383, %v947
    %v2458 = vsel %vm949, %v2457, %v2456
    %v2459 = vperm.slane %v2386, %v945
    %v2460 = vperm.slane %v2389, %v947
    %v2461 = vsel %vm949, %v2460, %v2459
    %v2462 = vperm.slane %v2392, %v945
    %v2463 = vperm.slane %v2395, %v947
    %v2464 = vsel %vm949, %v2463, %v2462
    %v2465 = vperm.slane %v2398, %v945
    %v2466 = vperm.slane %v2401, %v947
    %v2467 = vsel %vm949, %v2466, %v2465
    %v2468 = vperm.slane %v2404, %v945
    %v2469 = vperm.slane %v2407, %v947
    %v2470 = vsel %vm949, %v2469, %v2468
    %v2471 = vperm.slane %v2410, %v945
    %v2472 = vperm.slane %v2413, %v947
    %v2473 = vsel %vm949, %v2472, %v2471
    %v2474 = vperm.slane %v2416, %v945
    %v2475 = vperm.slane %v2419, %v947
    %v2476 = vsel %vm949, %v2475, %v2474
    %v2477 = vperm.slane %v2422, %v945
    %v2478 = vperm.slane %v2425, %v947
    %v2479 = vsel %vm949, %v2478, %v2477
    %v2480 = vperm.slane %v2428, %v945
    %v2481 = vperm.slane %v2431, %v947
    %v2482 = vsel %vm949, %v2481, %v2480
    %v2483 = vperm.slane %v2434, %v945
    %v2484 = vperm.slane %v2437, %v947
    %v2485 = vsel %vm949, %v2484, %v2483
    %v2486 = vsel %vm996, %v2443, %v2440
    %v2487 = vsel %vm998, %v2446, %v2486
    %v2488 = vsel %vm1000, %v2449, %v2487
    %v2489 = vsel %vm1002, %v2452, %v2488
    %v2490 = vsel %vm1004, %v2455, %v2489
    %v2491 = vsel %vm1006, %v2458, %v2490
    %v2492 = vsel %vm1008, %v2461, %v2491
    %v2493 = vsel %vm996, %v2467, %v2464
    %v2494 = vsel %vm998, %v2470, %v2493
    %v2495 = vsel %vm1000, %v2473, %v2494
    %v2496 = vsel %vm1002, %v2476, %v2495
    %v2497 = vsel %vm1004, %v2479, %v2496
    %v2498 = vsel %vm1006, %v2482, %v2497
    %v2499 = vsel %vm1008, %v2485, %v2498
    %v2500 = vsel %vm445, %v2492, 0
    %v2502 = vsel %vm445, %v2499, 0
    %2504 = vmatpush.msra.mxu0 0.0
    %2505 = vmatpush.msra.mxu0 0.0
    %2506 = vmatpush.msra.mxu0 0.0
    %2507 = vmatpush.msra.mxu0 0.0
    %2508 = vmatpush.msra.mxu0 0.0
    %2509 = vmatpush.msra.mxu0 0.0
    %2510 = vmatpush.msra.mxu0 0.0
    %2511 = vmatpush.msra.mxu0 0.0
    %2512 = vmatpush.msra.mxu0 0.0
    %2513 = vmatpush.msra.mxu0 0.0
    %2514 = vmatpush.msra.mxu0 0.0
    %2515 = vmatpush.msra.mxu0 0.0
    %2516 = vmatpush.msra.mxu0 0.0
    %2517 = vmatpush.msra.mxu0 0.0
    %2518 = vmatpush.msra.mxu0 %v95
    %2519 = vmatpush.msra.mxu0 %v92
    %2520 = vmatmul.f32.gmra.mxu0 %v2500
    %v2521 = vpop.f32.mrf.mxu0
    %v2522 = vadd.f32 %v2309, %v2521
    %2523 = vmatmul.f32.gmra.mxu0 %v2502
    %v2524 = vpop.f32.mrf.mxu0
    %v2525 = vadd.f32 %v2309, %v2524
    %2526 = vdwg.mxu0
    %v2527 = vmax.f32 %v2522, 0.0
    %v2528 = vmax.f32 %v2525, 0.0
    %v2529 = vperm.slane %v2308, 1
    %2562 = vset.pattern.permute.xlu0 0
    %2563 = vperm.xlu0 %2562, %v2276
    %v2564 = vpop.permute.xlu0 %2563
    %2565 = vset.pattern.permute.xlu0 0
    %2566 = vperm.xlu0 %2565, %v2277
    %v2567 = vpop.permute.xlu0 %2566
    %2568 = vset.pattern.permute.xlu0 0
    %2569 = vperm.xlu0 %2568, %v2278
    %v2570 = vpop.permute.xlu0 %2569
    %2571 = vset.pattern.permute.xlu0 0
    %2572 = vperm.xlu0 %2571, %v2279
    %v2573 = vpop.permute.xlu0 %2572
    %2574 = vset.pattern.permute.xlu0 0
    %2575 = vperm.xlu0 %2574, %v2280
    %v2576 = vpop.permute.xlu0 %2575
    %2577 = vset.pattern.permute.xlu0 0
    %2578 = vperm.xlu0 %2577, %v2281
    %v2579 = vpop.permute.xlu0 %2578
    %2580 = vset.pattern.permute.xlu0 0
    %2581 = vperm.xlu0 %2580, %v2282
    %v2582 = vpop.permute.xlu0 %2581
    %2583 = vset.pattern.permute.xlu0 0
    %2584 = vperm.xlu0 %2583, %v2283
    %v2585 = vpop.permute.xlu0 %2584
    %2586 = vset.pattern.permute.xlu0 0
    %2587 = vperm.xlu0 %2586, %v2284
    %v2588 = vpop.permute.xlu0 %2587
    %2589 = vset.pattern.permute.xlu0 0
    %2590 = vperm.xlu0 %2589, %v2285
    %v2591 = vpop.permute.xlu0 %2590
    %2592 = vset.pattern.permute.xlu0 0
    %2593 = vperm.xlu0 %2592, %v2286
    %v2594 = vpop.permute.xlu0 %2593
    %2595 = vset.pattern.permute.xlu0 0
    %2596 = vperm.xlu0 %2595, %v2287
    %v2597 = vpop.permute.xlu0 %2596
    %2598 = vset.pattern.permute.xlu0 0
    %2599 = vperm.xlu0 %2598, %v2288
    %v2600 = vpop.permute.xlu0 %2599
    %2601 = vset.pattern.permute.xlu0 0
    %2602 = vperm.xlu0 %2601, %v2289
    %v2603 = vpop.permute.xlu0 %2602
    %2604 = vset.pattern.permute.xlu0 0
    %2605 = vperm.xlu0 %2604, %v2290
    %v2606 = vpop.permute.xlu0 %2605
    %2607 = vset.pattern.permute.xlu0 0
    %2608 = vperm.xlu0 %2607, %v2291
    %v2609 = vpop.permute.xlu0 %2608
    %2610 = vset.pattern.permute.xlu0 0
    %2611 = vperm.xlu0 %2610, %v2292
    %v2612 = vpop.permute.xlu0 %2611
    %2613 = vset.pattern.permute.xlu0 0
    %2614 = vperm.xlu0 %2613, %v2293
    %v2615 = vpop.permute.xlu0 %2614
    %2616 = vset.pattern.permute.xlu0 0
    %2617 = vperm.xlu0 %2616, %v2294
    %v2618 = vpop.permute.xlu0 %2617
    %2619 = vset.pattern.permute.xlu0 0
    %2620 = vperm.xlu0 %2619, %v2295
    %v2621 = vpop.permute.xlu0 %2620
    %2622 = vset.pattern.permute.xlu0 0
    %2623 = vperm.xlu0 %2622, %v2296
    %v2624 = vpop.permute.xlu0 %2623
    %2625 = vset.pattern.permute.xlu0 0
    %2626 = vperm.xlu0 %2625, %v2297
    %v2627 = vpop.permute.xlu0 %2626
    %2628 = vset.pattern.permute.xlu0 0
    %2629 = vperm.xlu0 %2628, %v2298
    %v2630 = vpop.permute.xlu0 %2629
    %2631 = vset.pattern.permute.xlu0 0
    %2632 = vperm.xlu0 %2631, %v2299
    %v2633 = vpop.permute.xlu0 %2632
    %2634 = vset.pattern.permute.xlu0 0
    %2635 = vperm.xlu0 %2634, %v2300
    %v2636 = vpop.permute.xlu0 %2635
    %2637 = vset.pattern.permute.xlu0 0
    %2638 = vperm.xlu0 %2637, %v2301
    %v2639 = vpop.permute.xlu0 %2638
    %2640 = vset.pattern.permute.xlu0 0
    %2641 = vperm.xlu0 %2640, %v2302
    %v2642 = vpop.permute.xlu0 %2641
    %2643 = vset.pattern.permute.xlu0 0
    %2644 = vperm.xlu0 %2643, %v2303
    %v2645 = vpop.permute.xlu0 %2644
    %2646 = vset.pattern.permute.xlu0 0
    %2647 = vperm.xlu0 %2646, %v2304
    %v2648 = vpop.permute.xlu0 %2647
    %2649 = vset.pattern.permute.xlu0 0
    %2650 = vperm.xlu0 %2649, %v2305
    %v2651 = vpop.permute.xlu0 %2650
    %2652 = vset.pattern.permute.xlu0 0
    %2653 = vperm.xlu0 %2652, %v2306
    %v2654 = vpop.permute.xlu0 %2653
    %2655 = vset.pattern.permute.xlu0 0
    %2656 = vperm.xlu0 %2655, %v2307
    %v2657 = vpop.permute.xlu0 %2656
    %v2658 = vperm.slane %v2564, %v945
    %v2659 = vperm.slane %v2567, %v947
    %v2660 = vsel %vm949, %v2659, %v2658
    %v2661 = vperm.slane %v2570, %v945
    %v2662 = vperm.slane %v2573, %v947
    %v2663 = vsel %vm949, %v2662, %v2661
    %v2664 = vperm.slane %v2576, %v945
    %v2665 = vperm.slane %v2579, %v947
    %v2666 = vsel %vm949, %v2665, %v2664
    %v2667 = vperm.slane %v2582, %v945
    %v2668 = vperm.slane %v2585, %v947
    %v2669 = vsel %vm949, %v2668, %v2667
    %v2670 = vperm.slane %v2588, %v945
    %v2671 = vperm.slane %v2591, %v947
    %v2672 = vsel %vm949, %v2671, %v2670
    %v2673 = vperm.slane %v2594, %v945
    %v2674 = vperm.slane %v2597, %v947
    %v2675 = vsel %vm949, %v2674, %v2673
    %v2676 = vperm.slane %v2600, %v945
    %v2677 = vperm.slane %v2603, %v947
    %v2678 = vsel %vm949, %v2677, %v2676
    %v2679 = vperm.slane %v2606, %v945
    %v2680 = vperm.slane %v2609, %v947
    %v2681 = vsel %vm949, %v2680, %v2679
    %v2682 = vperm.slane %v2612, %v945
    %v2683 = vperm.slane %v2615, %v947
    %v2684 = vsel %vm949, %v2683, %v2682
    %v2685 = vperm.slane %v2618, %v945
    %v2686 = vperm.slane %v2621, %v947
    %v2687 = vsel %vm949, %v2686, %v2685
    %v2688 = vperm.slane %v2624, %v945
    %v2689 = vperm.slane %v2627, %v947
    %v2690 = vsel %vm949, %v2689, %v2688
    %v2691 = vperm.slane %v2630, %v945
    %v2692 = vperm.slane %v2633, %v947
    %v2693 = vsel %vm949, %v2692, %v2691
    %v2694 = vperm.slane %v2636, %v945
    %v2695 = vperm.slane %v2639, %v947
    %v2696 = vsel %vm949, %v2695, %v2694
    %v2697 = vperm.slane %v2642, %v945
    %v2698 = vperm.slane %v2645, %v947
    %v2699 = vsel %vm949, %v2698, %v2697
    %v2700 = vperm.slane %v2648, %v945
    %v2701 = vperm.slane %v2651, %v947
    %v2702 = vsel %vm949, %v2701, %v2700
    %v2703 = vperm.slane %v2654, %v945
    %v2704 = vperm.slane %v2657, %v947
    %v2705 = vsel %vm949, %v2704, %v2703
    %v2706 = vsel %vm996, %v2663, %v2660
    %v2707 = vsel %vm998, %v2666, %v2706
    %v2708 = vsel %vm1000, %v2669, %v2707
    %v2709 = vsel %vm1002, %v2672, %v2708
    %v2710 = vsel %vm1004, %v2675, %v2709
    %v2711 = vsel %vm1006, %v2678, %v2710
    %v2712 = vsel %vm1008, %v2681, %v2711
    %v2713 = vsel %vm996, %v2687, %v2684
    %v2714 = vsel %vm998, %v2690, %v2713
    %v2715 = vsel %vm1000, %v2693, %v2714
    %v2716 = vsel %vm1002, %v2696, %v2715
    %v2717 = vsel %vm1004, %v2699, %v2716
    %v2718 = vsel %vm1006, %v2702, %v2717
    %v2719 = vsel %vm1008, %v2705, %v2718
    %2720 = vrot.lane.b32.xlu0 %v92, 112
    %v2721 = vpop.permute.xlu0 %2720
    %2722 = vrot.lane.b32.xlu0 %v95, 112
    %v2723 = vpop.permute.xlu0 %2722
    %v2726 = vsel %vm445, %v2712, 0
    %v2728 = vsel %vm445, %v2719, 0
    %2730 = vmatpush.msra.mxu0 0.0
    %2731 = vmatpush.msra.mxu0 0.0
    %2732 = vmatpush.msra.mxu0 0.0
    %2733 = vmatpush.msra.mxu0 0.0
    %2734 = vmatpush.msra.mxu0 0.0
    %2735 = vmatpush.msra.mxu0 0.0
    %2736 = vmatpush.msra.mxu0 0.0
    %2737 = vmatpush.msra.mxu0 0.0
    %2738 = vmatpush.msra.mxu0 0.0
    %2739 = vmatpush.msra.mxu0 0.0
    %2740 = vmatpush.msra.mxu0 0.0
    %2741 = vmatpush.msra.mxu0 0.0
    %2742 = vmatpush.msra.mxu0 0.0
    %2743 = vmatpush.msra.mxu0 0.0
    %2744 = vmatpush.msra.mxu0 %v2723
    %2745 = vmatpush.msra.mxu0 %v2721
    %2746 = vmatmul.f32.gmra.mxu0 %v2726
    %v2747 = vpop.f32.mrf.mxu0
    %v2748 = vadd.f32 %v2529, %v2747
    %2749 = vmatmul.f32.gmra.mxu0 %v2728
    %v2750 = vpop.f32.mrf.mxu0
    %v2751 = vadd.f32 %v2529, %v2750
    %2752 = vdwg.mxu0
    %v2753 = vmax.f32 %v2748, 0.0
    %v2754 = vmax.f32 %v2751, 0.0
    %v2755 = vld [vmem:[%s7] sm:$0xff]
    %v2756 = vld [vmem:[%s7 + $0x8] sm:$0xff]
    %v2757 = vld [vmem:[%s7 + $0x10] sm:$0xff]
    %v2758 = vld [vmem:[%s7 + $0x18] sm:$0xff]
    %v2759 = vld [vmem:[%s8] sm:$0x1]
    %v2761 = vsel %vm445, %v2527, 0
    %v2764 = vsel %vm445, %v2528, 0
    %2766 = vmatpush.msra.mxu0 0.0
    %2767 = vmatpush.msra.mxu0 0.0
    %2768 = vmatpush.msra.mxu0 0.0
    %2769 = vmatpush.msra.mxu0 0.0
    %2770 = vmatpush.msra.mxu0 0.0
    %2771 = vmatpush.msra.mxu0 0.0
    %2772 = vmatpush.msra.mxu0 0.0
    %2773 = vmatpush.msra.mxu0 0.0
    %2774 = vmatpush.msra.mxu0 0.0
    %2775 = vmatpush.msra.mxu0 0.0
    %2776 = vmatpush.msra.mxu0 0.0
    %2777 = vmatpush.msra.mxu0 0.0
    %2778 = vmatpush.msra.mxu0 0.0
    %2779 = vmatpush.msra.mxu0 0.0
    %2780 = vmatpush.msra.mxu0 %v2756
    %2781 = vmatpush.msra.mxu0 %v2755
    %2782 = vmatmul.f32.gmra.mxu0 %v2761
    %v2783 = vpop.f32.mrf.mxu0
    %v2784 = vadd.f32 0.0, %v2783
    %2785 = vmatmul.f32.gmra.mxu0 %v2764
    %v2786 = vpop.f32.mrf.mxu0
    %v2787 = vadd.f32 0.0, %v2786
    %2788 = vdwg.mxu0
    %v2790 = vperm.slane %v2759, 0
    %v2792 = vadd.f32 %v2790, %v2784
    %v2793 = vadd.f32 %v2790, %v2787
    %v2795 = vsel %vm445, %v2753, 0
    %v2798 = vsel %vm445, %v2754, 0
    %2800 = vmatpush.msra.mxu0 0.0
    %2801 = vmatpush.msra.mxu0 0.0
    %2802 = vmatpush.msra.mxu0 0.0
    %2803 = vmatpush.msra.mxu0 0.0
    %2804 = vmatpush.msra.mxu0 0.0
    %2805 = vmatpush.msra.mxu0 0.0
    %2806 = vmatpush.msra.mxu0 0.0
    %2807 = vmatpush.msra.mxu0 0.0
    %2808 = vmatpush.msra.mxu0 0.0
    %2809 = vmatpush.msra.mxu0 0.0
    %2810 = vmatpush.msra.mxu0 0.0
    %2811 = vmatpush.msra.mxu0 0.0
    %2812 = vmatpush.msra.mxu0 0.0
    %2813 = vmatpush.msra.mxu0 0.0
    %2814 = vmatpush.msra.mxu0 %v2758
    %2815 = vmatpush.msra.mxu0 %v2757
    %2816 = vmatmul.f32.gmra.mxu0 %v2795
    %v2817 = vpop.f32.mrf.mxu0
    %v2818 = vadd.f32 0.0, %v2817
    %2819 = vmatmul.f32.gmra.mxu0 %v2798
    %v2820 = vpop.f32.mrf.mxu0
    %v2821 = vadd.f32 0.0, %v2820
    %2822 = vdwg.mxu0
    %v2823 = vadd.f32 %v2792, %v2818
    %v2824 = vadd.f32 %v2793, %v2821
    %v2825 = vld [vmem:[%s9] sm:$0x3]
    %v2828 = vrot.slane %v2823, 1
    %v2829 = vrot.slane %v2823, 2
    %v2830 = vrot.slane %v2823, 3
    %v2831 = vrot.slane %v2823, 4
    %v2832 = vrot.slane %v2823, 5
    %v2833 = vrot.slane %v2823, 6
    %v2834 = vrot.slane %v2823, 7
    %v2835 = vrot.slane %v2824, 1
    %v2836 = vrot.slane %v2824, 2
    %v2837 = vrot.slane %v2824, 3
    %v2838 = vrot.slane %v2824, 4
    %v2839 = vrot.slane %v2824, 5
    %v2840 = vrot.slane %v2824, 6
    %v2841 = vrot.slane %v2824, 7
    %v2842 = vperm.slane %v2823, 0
    %v2843 = vperm.slane %v2828, 0
    %v2844 = vperm.slane %v2829, 0
    %v2845 = vperm.slane %v2830, 0
    %v2846 = vperm.slane %v2831, 0
    %v2847 = vperm.slane %v2832, 0
    %v2848 = vperm.slane %v2833, 0
    %v2849 = vperm.slane %v2834, 0
    %v2850 = vperm.slane %v2824, 0
    %v2851 = vperm.slane %v2835, 0
    %v2852 = vperm.slane %v2836, 0
    %v2853 = vperm.slane %v2837, 0
    %v2854 = vperm.slane %v2838, 0
    %v2855 = vperm.slane %v2839, 0
    %v2856 = vperm.slane %v2840, 0
    %v2857 = vperm.slane %v2841, 0
    %2874 = vrot.lane.b32.xlu0 %v2823, 32
    %v2875 = vpop.permute.xlu0 %2874
    %2876 = vrot.lane.b32.xlu0 %v2824, 32
    %v2877 = vpop.permute.xlu0 %2876
    %v2880 = vadd.f32 %v2842, %v2875
    %v2881 = vadd.f32 %v2842, %v2877
    %v2882 = vadd.f32 %v2843, %v2875
    %v2883 = vadd.f32 %v2843, %v2877
    %v2884 = vadd.f32 %v2844, %v2875
    %v2885 = vadd.f32 %v2844, %v2877
    %v2886 = vadd.f32 %v2845, %v2875
    %v2887 = vadd.f32 %v2845, %v2877
    %v2888 = vadd.f32 %v2846, %v2875
    %v2889 = vadd.f32 %v2846, %v2877
    %v2890 = vadd.f32 %v2847, %v2875
    %v2891 = vadd.f32 %v2847, %v2877
    %v2892 = vadd.f32 %v2848, %v2875
    %v2893 = vadd.f32 %v2848, %v2877
    %v2894 = vadd.f32 %v2849, %v2875
    %v2895 = vadd.f32 %v2849, %v2877
    %v2896 = vadd.f32 %v2850, %v2875
    %v2897 = vadd.f32 %v2850, %v2877
    %v2898 = vadd.f32 %v2851, %v2875
    %v2899 = vadd.f32 %v2851, %v2877
    %v2900 = vadd.f32 %v2852, %v2875
    %v2901 = vadd.f32 %v2852, %v2877
    %v2902 = vadd.f32 %v2853, %v2875
    %v2903 = vadd.f32 %v2853, %v2877
    %v2904 = vadd.f32 %v2854, %v2875
    %v2905 = vadd.f32 %v2854, %v2877
    %v2906 = vadd.f32 %v2855, %v2875
    %v2907 = vadd.f32 %v2855, %v2877
    %v2908 = vadd.f32 %v2856, %v2875
    %v2909 = vadd.f32 %v2856, %v2877
    %v2910 = vadd.f32 %v2857, %v2875
    %v2911 = vadd.f32 %v2857, %v2877
    %vm2912 = vcmp.gt.f32.partialorder %v2880, 0.0
    %vm2913 = vcmp.gt.f32.partialorder %v2881, 0.0
    %vm2914 = vcmp.gt.f32.partialorder %v2882, 0.0
    %vm2915 = vcmp.gt.f32.partialorder %v2883, 0.0
    %vm2916 = vcmp.gt.f32.partialorder %v2884, 0.0
    %vm2917 = vcmp.gt.f32.partialorder %v2885, 0.0
    %vm2918 = vcmp.gt.f32.partialorder %v2886, 0.0
    %vm2919 = vcmp.gt.f32.partialorder %v2887, 0.0
    %vm2920 = vcmp.gt.f32.partialorder %v2888, 0.0
    %vm2921 = vcmp.gt.f32.partialorder %v2889, 0.0
    %vm2922 = vcmp.gt.f32.partialorder %v2890, 0.0
    %vm2923 = vcmp.gt.f32.partialorder %v2891, 0.0
    %vm2924 = vcmp.gt.f32.partialorder %v2892, 0.0
    %vm2925 = vcmp.gt.f32.partialorder %v2893, 0.0
    %vm2926 = vcmp.gt.f32.partialorder %v2894, 0.0
    %vm2927 = vcmp.gt.f32.partialorder %v2895, 0.0
    %vm2928 = vcmp.gt.f32.partialorder %v2896, 0.0
    %vm2929 = vcmp.gt.f32.partialorder %v2897, 0.0
    %vm2930 = vcmp.gt.f32.partialorder %v2898, 0.0
    %vm2931 = vcmp.gt.f32.partialorder %v2899, 0.0
    %vm2932 = vcmp.gt.f32.partialorder %v2900, 0.0
    %vm2933 = vcmp.gt.f32.partialorder %v2901, 0.0
    %vm2934 = vcmp.gt.f32.partialorder %v2902, 0.0
    %vm2935 = vcmp.gt.f32.partialorder %v2903, 0.0
    %vm2936 = vcmp.gt.f32.partialorder %v2904, 0.0
    %vm2937 = vcmp.gt.f32.partialorder %v2905, 0.0
    %vm2938 = vcmp.gt.f32.partialorder %v2906, 0.0
    %vm2939 = vcmp.gt.f32.partialorder %v2907, 0.0
    %vm2940 = vcmp.gt.f32.partialorder %v2908, 0.0
    %vm2941 = vcmp.gt.f32.partialorder %v2909, 0.0
    %vm2942 = vcmp.gt.f32.partialorder %v2910, 0.0
    %vm2943 = vcmp.gt.f32.partialorder %v2911, 0.0
    %v2944 = vmul.f32 %v2880, 0.2
    %v2945 = vmul.f32 %v2881, 0.2
    %v2946 = vmul.f32 %v2882, 0.2
    %v2947 = vmul.f32 %v2883, 0.2
    %v2948 = vmul.f32 %v2884, 0.2
    %v2949 = vmul.f32 %v2885, 0.2
    %v2950 = vmul.f32 %v2886, 0.2
    %v2951 = vmul.f32 %v2887, 0.2
    %v2952 = vmul.f32 %v2888, 0.2
    %v2953 = vmul.f32 %v2889, 0.2
    %v2954 = vmul.f32 %v2890, 0.2
    %v2955 = vmul.f32 %v2891, 0.2
    %v2956 = vmul.f32 %v2892, 0.2
    %v2957 = vmul.f32 %v2893, 0.2
    %v2958 = vmul.f32 %v2894, 0.2
    %v2959 = vmul.f32 %v2895, 0.2
    %v2960 = vmul.f32 %v2896, 0.2
    %v2961 = vmul.f32 %v2897, 0.2
    %v2962 = vmul.f32 %v2898, 0.2
    %v2963 = vmul.f32 %v2899, 0.2
    %v2964 = vmul.f32 %v2900, 0.2
    %v2965 = vmul.f32 %v2901, 0.2
    %v2966 = vmul.f32 %v2902, 0.2
    %v2967 = vmul.f32 %v2903, 0.2
    %v2968 = vmul.f32 %v2904, 0.2
    %v2969 = vmul.f32 %v2905, 0.2
    %v2970 = vmul.f32 %v2906, 0.2
    %v2971 = vmul.f32 %v2907, 0.2
    %v2972 = vmul.f32 %v2908, 0.2
    %v2973 = vmul.f32 %v2909, 0.2
    %v2974 = vmul.f32 %v2910, 0.2
    %v2975 = vmul.f32 %v2911, 0.2
    %v2976 = vsel %vm2912, %v2880, %v2944
    %v2977 = vsel %vm2913, %v2881, %v2945
    %v2978 = vsel %vm2914, %v2882, %v2946
    %v2979 = vsel %vm2915, %v2883, %v2947
    %v2980 = vsel %vm2916, %v2884, %v2948
    %v2981 = vsel %vm2917, %v2885, %v2949
    %v2982 = vsel %vm2918, %v2886, %v2950
    %v2983 = vsel %vm2919, %v2887, %v2951
    %v2984 = vsel %vm2920, %v2888, %v2952
    %v2985 = vsel %vm2921, %v2889, %v2953
    %v2986 = vsel %vm2922, %v2890, %v2954
    %v2987 = vsel %vm2923, %v2891, %v2955
    %v2988 = vsel %vm2924, %v2892, %v2956
    %v2989 = vsel %vm2925, %v2893, %v2957
    %v2990 = vsel %vm2926, %v2894, %v2958
    %v2991 = vsel %vm2927, %v2895, %v2959
    %v2992 = vsel %vm2928, %v2896, %v2960
    %v2993 = vsel %vm2929, %v2897, %v2961
    %v2994 = vsel %vm2930, %v2898, %v2962
    %v2995 = vsel %vm2931, %v2899, %v2963
    %v2996 = vsel %vm2932, %v2900, %v2964
    %v2997 = vsel %vm2933, %v2901, %v2965
    %v2998 = vsel %vm2934, %v2902, %v2966
    %v2999 = vsel %vm2935, %v2903, %v2967
    %v3000 = vsel %vm2936, %v2904, %v2968
    %v3001 = vsel %vm2937, %v2905, %v2969
    %v3002 = vsel %vm2938, %v2906, %v2970
    %v3003 = vsel %vm2939, %v2907, %v2971
    %v3004 = vsel %vm2940, %v2908, %v2972
    %v3005 = vsel %vm2941, %v2909, %v2973
    %v3006 = vsel %vm2942, %v2910, %v2974
    %v3007 = vsel %vm2943, %v2911, %v2975
    %v3008 = vperm.slane %v2825, 0
    %3010 = vrot.lane.b32.xlu0 %v3008, 32
    %v3011 = vpop.permute.xlu0 %3010
    %v3013 = vmul.f32 %v2976, %v3011
    %v3014 = vmul.f32 %v2977, %v3011
    %v3015 = vmul.f32 %v2978, %v3011
    %v3016 = vmul.f32 %v2979, %v3011
    %v3017 = vmul.f32 %v2980, %v3011
    %v3018 = vmul.f32 %v2981, %v3011
    %v3019 = vmul.f32 %v2982, %v3011
    %v3020 = vmul.f32 %v2983, %v3011
    %v3021 = vmul.f32 %v2984, %v3011
    %v3022 = vmul.f32 %v2985, %v3011
    %v3023 = vmul.f32 %v2986, %v3011
    %v3024 = vmul.f32 %v2987, %v3011
    %v3025 = vmul.f32 %v2988, %v3011
    %v3026 = vmul.f32 %v2989, %v3011
    %v3027 = vmul.f32 %v2990, %v3011
    %v3028 = vmul.f32 %v2991, %v3011
    %v3029 = vmul.f32 %v2992, %v3011
    %v3030 = vmul.f32 %v2993, %v3011
    %v3031 = vmul.f32 %v2994, %v3011
    %v3032 = vmul.f32 %v2995, %v3011
    %v3033 = vmul.f32 %v2996, %v3011
    %v3034 = vmul.f32 %v2997, %v3011
    %v3035 = vmul.f32 %v2998, %v3011
    %v3036 = vmul.f32 %v2999, %v3011
    %v3037 = vmul.f32 %v3000, %v3011
    %v3038 = vmul.f32 %v3001, %v3011
    %v3039 = vmul.f32 %v3002, %v3011
    %v3040 = vmul.f32 %v3003, %v3011
    %v3041 = vmul.f32 %v3004, %v3011
    %v3042 = vmul.f32 %v3005, %v3011
    %v3043 = vmul.f32 %v3006, %v3011
    %v3044 = vmul.f32 %v3007, %v3011
    %3077 = vrot.lane.b32.xlu0 %v3013, 96
    %v3078 = vpop.permute.xlu0 %3077
    %3079 = vrot.lane.b32.xlu0 %v3014, 96
    %v3080 = vpop.permute.xlu0 %3079
    %3081 = vrot.lane.b32.xlu0 %v3015, 96
    %v3082 = vpop.permute.xlu0 %3081
    %3083 = vrot.lane.b32.xlu0 %v3016, 96
    %v3084 = vpop.permute.xlu0 %3083
    %3085 = vrot.lane.b32.xlu0 %v3017, 96
    %v3086 = vpop.permute.xlu0 %3085
    %3087 = vrot.lane.b32.xlu0 %v3018, 96
    %v3088 = vpop.permute.xlu0 %3087
    %3089 = vrot.lane.b32.xlu0 %v3019, 96
    %v3090 = vpop.permute.xlu0 %3089
    %3091 = vrot.lane.b32.xlu0 %v3020, 96
    %v3092 = vpop.permute.xlu0 %3091
    %3093 = vrot.lane.b32.xlu0 %v3021, 96
    %v3094 = vpop.permute.xlu0 %3093
    %3095 = vrot.lane.b32.xlu0 %v3022, 96
    %v3096 = vpop.permute.xlu0 %3095
    %3097 = vrot.lane.b32.xlu0 %v3023, 96
    %v3098 = vpop.permute.xlu0 %3097
    %3099 = vrot.lane.b32.xlu0 %v3024, 96
    %v3100 = vpop.permute.xlu0 %3099
    %3101 = vrot.lane.b32.xlu0 %v3025, 96
    %v3102 = vpop.permute.xlu0 %3101
    %3103 = vrot.lane.b32.xlu0 %v3026, 96
    %v3104 = vpop.permute.xlu0 %3103
    %3105 = vrot.lane.b32.xlu0 %v3027, 96
    %v3106 = vpop.permute.xlu0 %3105
    %3107 = vrot.lane.b32.xlu0 %v3028, 96
    %v3108 = vpop.permute.xlu0 %3107
    %3109 = vrot.lane.b32.xlu0 %v3029, 96
    %v3110 = vpop.permute.xlu0 %3109
    %3111 = vrot.lane.b32.xlu0 %v3030, 96
    %v3112 = vpop.permute.xlu0 %3111
    %3113 = vrot.lane.b32.xlu0 %v3031, 96
    %v3114 = vpop.permute.xlu0 %3113
    %3115 = vrot.lane.b32.xlu0 %v3032, 96
    %v3116 = vpop.permute.xlu0 %3115
    %3117 = vrot.lane.b32.xlu0 %v3033, 96
    %v3118 = vpop.permute.xlu0 %3117
    %3119 = vrot.lane.b32.xlu0 %v3034, 96
    %v3120 = vpop.permute.xlu0 %3119
    %3121 = vrot.lane.b32.xlu0 %v3035, 96
    %v3122 = vpop.permute.xlu0 %3121
    %3123 = vrot.lane.b32.xlu0 %v3036, 96
    %v3124 = vpop.permute.xlu0 %3123
    %3125 = vrot.lane.b32.xlu0 %v3037, 96
    %v3126 = vpop.permute.xlu0 %3125
    %3127 = vrot.lane.b32.xlu0 %v3038, 96
    %v3128 = vpop.permute.xlu0 %3127
    %3129 = vrot.lane.b32.xlu0 %v3039, 96
    %v3130 = vpop.permute.xlu0 %3129
    %3131 = vrot.lane.b32.xlu0 %v3040, 96
    %v3132 = vpop.permute.xlu0 %3131
    %3133 = vrot.lane.b32.xlu0 %v3041, 96
    %v3134 = vpop.permute.xlu0 %3133
    %3135 = vrot.lane.b32.xlu0 %v3042, 96
    %v3136 = vpop.permute.xlu0 %3135
    %3137 = vrot.lane.b32.xlu0 %v3043, 96
    %v3138 = vpop.permute.xlu0 %3137
    %3139 = vrot.lane.b32.xlu0 %v3044, 96
    %v3140 = vpop.permute.xlu0 %3139
    %v3173 = vsel %vm445, %v3078, 0.0
    %3174 = vadd.xlane.f32.xlu0 %v3173
    %v3175 = vpop.xlane.xlu0 %3174
    %v3176 = vsel %vm445, %v3080, 0.0
    %3177 = vadd.xlane.f32.xlu0 %v3176
    %v3178 = vpop.xlane.xlu0 %3177
    %v3179 = vsel %vm445, %v3082, 0.0
    %3180 = vadd.xlane.f32.xlu0 %v3179
    %v3181 = vpop.xlane.xlu0 %3180
    %v3182 = vsel %vm445, %v3084, 0.0
    %3183 = vadd.xlane.f32.xlu0 %v3182
    %v3184 = vpop.xlane.xlu0 %3183
    %v3185 = vsel %vm445, %v3086, 0.0
    %3186 = vadd.xlane.f32.xlu0 %v3185
    %v3187 = vpop.xlane.xlu0 %3186
    %v3188 = vsel %vm445, %v3088, 0.0
    %3189 = vadd.xlane.f32.xlu0 %v3188
    %v3190 = vpop.xlane.xlu0 %3189
    %v3191 = vsel %vm445, %v3090, 0.0
    %3192 = vadd.xlane.f32.xlu0 %v3191
    %v3193 = vpop.xlane.xlu0 %3192
    %v3194 = vsel %vm445, %v3092, 0.0
    %3195 = vadd.xlane.f32.xlu0 %v3194
    %v3196 = vpop.xlane.xlu0 %3195
    %v3197 = vsel %vm445, %v3094, 0.0
    %3198 = vadd.xlane.f32.xlu0 %v3197
    %v3199 = vpop.xlane.xlu0 %3198
    %v3200 = vsel %vm445, %v3096, 0.0
    %3201 = vadd.xlane.f32.xlu0 %v3200
    %v3202 = vpop.xlane.xlu0 %3201
    %v3203 = vsel %vm445, %v3098, 0.0
    %3204 = vadd.xlane.f32.xlu0 %v3203
    %v3205 = vpop.xlane.xlu0 %3204
    %v3206 = vsel %vm445, %v3100, 0.0
    %3207 = vadd.xlane.f32.xlu0 %v3206
    %v3208 = vpop.xlane.xlu0 %3207
    %v3209 = vsel %vm445, %v3102, 0.0
    %3210 = vadd.xlane.f32.xlu0 %v3209
    %v3211 = vpop.xlane.xlu0 %3210
    %v3212 = vsel %vm445, %v3104, 0.0
    %3213 = vadd.xlane.f32.xlu0 %v3212
    %v3214 = vpop.xlane.xlu0 %3213
    %v3215 = vsel %vm445, %v3106, 0.0
    %3216 = vadd.xlane.f32.xlu0 %v3215
    %v3217 = vpop.xlane.xlu0 %3216
    %v3218 = vsel %vm445, %v3108, 0.0
    %3219 = vadd.xlane.f32.xlu0 %v3218
    %v3220 = vpop.xlane.xlu0 %3219
    %v3221 = vsel %vm445, %v3110, 0.0
    %3222 = vadd.xlane.f32.xlu0 %v3221
    %v3223 = vpop.xlane.xlu0 %3222
    %v3224 = vsel %vm445, %v3112, 0.0
    %3225 = vadd.xlane.f32.xlu0 %v3224
    %v3226 = vpop.xlane.xlu0 %3225
    %v3227 = vsel %vm445, %v3114, 0.0
    %3228 = vadd.xlane.f32.xlu0 %v3227
    %v3229 = vpop.xlane.xlu0 %3228
    %v3230 = vsel %vm445, %v3116, 0.0
    %3231 = vadd.xlane.f32.xlu0 %v3230
    %v3232 = vpop.xlane.xlu0 %3231
    %v3233 = vsel %vm445, %v3118, 0.0
    %3234 = vadd.xlane.f32.xlu0 %v3233
    %v3235 = vpop.xlane.xlu0 %3234
    %v3236 = vsel %vm445, %v3120, 0.0
    %3237 = vadd.xlane.f32.xlu0 %v3236
    %v3238 = vpop.xlane.xlu0 %3237
    %v3239 = vsel %vm445, %v3122, 0.0
    %3240 = vadd.xlane.f32.xlu0 %v3239
    %v3241 = vpop.xlane.xlu0 %3240
    %v3242 = vsel %vm445, %v3124, 0.0
    %3243 = vadd.xlane.f32.xlu0 %v3242
    %v3244 = vpop.xlane.xlu0 %3243
    %v3245 = vsel %vm445, %v3126, 0.0
    %3246 = vadd.xlane.f32.xlu0 %v3245
    %v3247 = vpop.xlane.xlu0 %3246
    %v3248 = vsel %vm445, %v3128, 0.0
    %3249 = vadd.xlane.f32.xlu0 %v3248
    %v3250 = vpop.xlane.xlu0 %3249
    %v3251 = vsel %vm445, %v3130, 0.0
    %3252 = vadd.xlane.f32.xlu0 %v3251
    %v3253 = vpop.xlane.xlu0 %3252
    %v3254 = vsel %vm445, %v3132, 0.0
    %3255 = vadd.xlane.f32.xlu0 %v3254
    %v3256 = vpop.xlane.xlu0 %3255
    %v3257 = vsel %vm445, %v3134, 0.0
    %3258 = vadd.xlane.f32.xlu0 %v3257
    %v3259 = vpop.xlane.xlu0 %3258
    %v3260 = vsel %vm445, %v3136, 0.0
    %3261 = vadd.xlane.f32.xlu0 %v3260
    %v3262 = vpop.xlane.xlu0 %3261
    %v3263 = vsel %vm445, %v3138, 0.0
    %3264 = vadd.xlane.f32.xlu0 %v3263
    %v3265 = vpop.xlane.xlu0 %3264
    %v3266 = vsel %vm445, %v3140, 0.0
    %3267 = vadd.xlane.f32.xlu0 %v3266
    %v3268 = vpop.xlane.xlu0 %3267
    %v3269 = vadd.f32 %v3175, %v550
    %v3270 = vadd.f32 %v3178, %v556
    %v3271 = vadd.f32 %v3181, %v563
    %v3272 = vadd.f32 %v3184, %v569
    %v3273 = vadd.f32 %v3187, %v576
    %v3274 = vadd.f32 %v3190, %v582
    %v3275 = vadd.f32 %v3193, %v589
    %v3276 = vadd.f32 %v3196, %v595
    %v3277 = vadd.f32 %v3199, %v602
    %v3278 = vadd.f32 %v3202, %v608
    %v3279 = vadd.f32 %v3205, %v615
    %v3280 = vadd.f32 %v3208, %v621
    %v3281 = vadd.f32 %v3211, %v628
    %v3282 = vadd.f32 %v3214, %v634
    %v3283 = vadd.f32 %v3217, %v641
    %v3284 = vadd.f32 %v3220, %v647
    %v3285 = vadd.f32 %v3223, %v654
    %v3286 = vadd.f32 %v3226, %v660
    %v3287 = vadd.f32 %v3229, %v667
    %v3288 = vadd.f32 %v3232, %v673
    %v3289 = vadd.f32 %v3235, %v680
    %v3290 = vadd.f32 %v3238, %v686
    %v3291 = vadd.f32 %v3241, %v693
    %v3292 = vadd.f32 %v3244, %v699
    %v3293 = vadd.f32 %v3247, %v706
    %v3294 = vadd.f32 %v3250, %v712
    %v3295 = vadd.f32 %v3253, %v719
    %v3296 = vadd.f32 %v3256, %v725
    %v3297 = vadd.f32 %v3259, %v732
    %v3298 = vadd.f32 %v3262, %v738
    %v3299 = vadd.f32 %v3265, %v745
    %v3300 = vadd.f32 %v3268, %v751
    %3333 = vset.pattern.permute.xlu0 0
    %3334 = vperm.xlu0 %3333, %v3269
    %v3335 = vpop.permute.xlu0 %3334
    %3336 = vset.pattern.permute.xlu0 0
    %3337 = vperm.xlu0 %3336, %v3270
    %v3338 = vpop.permute.xlu0 %3337
    %3339 = vset.pattern.permute.xlu0 0
    %3340 = vperm.xlu0 %3339, %v3271
    %v3341 = vpop.permute.xlu0 %3340
    %3342 = vset.pattern.permute.xlu0 0
    %3343 = vperm.xlu0 %3342, %v3272
    %v3344 = vpop.permute.xlu0 %3343
    %3345 = vset.pattern.permute.xlu0 0
    %3346 = vperm.xlu0 %3345, %v3273
    %v3347 = vpop.permute.xlu0 %3346
    %3348 = vset.pattern.permute.xlu0 0
    %3349 = vperm.xlu0 %3348, %v3274
    %v3350 = vpop.permute.xlu0 %3349
    %3351 = vset.pattern.permute.xlu0 0
    %3352 = vperm.xlu0 %3351, %v3275
    %v3353 = vpop.permute.xlu0 %3352
    %3354 = vset.pattern.permute.xlu0 0
    %3355 = vperm.xlu0 %3354, %v3276
    %v3356 = vpop.permute.xlu0 %3355
    %3357 = vset.pattern.permute.xlu0 0
    %3358 = vperm.xlu0 %3357, %v3277
    %v3359 = vpop.permute.xlu0 %3358
    %3360 = vset.pattern.permute.xlu0 0
    %3361 = vperm.xlu0 %3360, %v3278
    %v3362 = vpop.permute.xlu0 %3361
    %3363 = vset.pattern.permute.xlu0 0
    %3364 = vperm.xlu0 %3363, %v3279
    %v3365 = vpop.permute.xlu0 %3364
    %3366 = vset.pattern.permute.xlu0 0
    %3367 = vperm.xlu0 %3366, %v3280
    %v3368 = vpop.permute.xlu0 %3367
    %3369 = vset.pattern.permute.xlu0 0
    %3370 = vperm.xlu0 %3369, %v3281
    %v3371 = vpop.permute.xlu0 %3370
    %3372 = vset.pattern.permute.xlu0 0
    %3373 = vperm.xlu0 %3372, %v3282
    %v3374 = vpop.permute.xlu0 %3373
    %3375 = vset.pattern.permute.xlu0 0
    %3376 = vperm.xlu0 %3375, %v3283
    %v3377 = vpop.permute.xlu0 %3376
    %3378 = vset.pattern.permute.xlu0 0
    %3379 = vperm.xlu0 %3378, %v3284
    %v3380 = vpop.permute.xlu0 %3379
    %3381 = vset.pattern.permute.xlu0 0
    %3382 = vperm.xlu0 %3381, %v3285
    %v3383 = vpop.permute.xlu0 %3382
    %3384 = vset.pattern.permute.xlu0 0
    %3385 = vperm.xlu0 %3384, %v3286
    %v3386 = vpop.permute.xlu0 %3385
    %3387 = vset.pattern.permute.xlu0 0
    %3388 = vperm.xlu0 %3387, %v3287
    %v3389 = vpop.permute.xlu0 %3388
    %3390 = vset.pattern.permute.xlu0 0
    %3391 = vperm.xlu0 %3390, %v3288
    %v3392 = vpop.permute.xlu0 %3391
    %3393 = vset.pattern.permute.xlu0 0
    %3394 = vperm.xlu0 %3393, %v3289
    %v3395 = vpop.permute.xlu0 %3394
    %3396 = vset.pattern.permute.xlu0 0
    %3397 = vperm.xlu0 %3396, %v3290
    %v3398 = vpop.permute.xlu0 %3397
    %3399 = vset.pattern.permute.xlu0 0
    %3400 = vperm.xlu0 %3399, %v3291
    %v3401 = vpop.permute.xlu0 %3400
    %3402 = vset.pattern.permute.xlu0 0
    %3403 = vperm.xlu0 %3402, %v3292
    %v3404 = vpop.permute.xlu0 %3403
    %3405 = vset.pattern.permute.xlu0 0
    %3406 = vperm.xlu0 %3405, %v3293
    %v3407 = vpop.permute.xlu0 %3406
    %3408 = vset.pattern.permute.xlu0 0
    %3409 = vperm.xlu0 %3408, %v3294
    %v3410 = vpop.permute.xlu0 %3409
    %3411 = vset.pattern.permute.xlu0 0
    %3412 = vperm.xlu0 %3411, %v3295
    %v3413 = vpop.permute.xlu0 %3412
    %3414 = vset.pattern.permute.xlu0 0
    %3415 = vperm.xlu0 %3414, %v3296
    %v3416 = vpop.permute.xlu0 %3415
    %3417 = vset.pattern.permute.xlu0 0
    %3418 = vperm.xlu0 %3417, %v3297
    %v3419 = vpop.permute.xlu0 %3418
    %3420 = vset.pattern.permute.xlu0 0
    %3421 = vperm.xlu0 %3420, %v3298
    %v3422 = vpop.permute.xlu0 %3421
    %3423 = vset.pattern.permute.xlu0 0
    %3424 = vperm.xlu0 %3423, %v3299
    %v3425 = vpop.permute.xlu0 %3424
    %3426 = vset.pattern.permute.xlu0 0
    %3427 = vperm.xlu0 %3426, %v3300
    %v3428 = vpop.permute.xlu0 %3427
    %v3429 = vperm.slane %v3335, %v945
    %v3430 = vperm.slane %v3338, %v947
    %v3431 = vsel %vm949, %v3430, %v3429
    %v3432 = vperm.slane %v3341, %v945
    %v3433 = vperm.slane %v3344, %v947
    %v3434 = vsel %vm949, %v3433, %v3432
    %v3435 = vperm.slane %v3347, %v945
    %v3436 = vperm.slane %v3350, %v947
    %v3437 = vsel %vm949, %v3436, %v3435
    %v3438 = vperm.slane %v3353, %v945
    %v3439 = vperm.slane %v3356, %v947
    %v3440 = vsel %vm949, %v3439, %v3438
    %v3441 = vperm.slane %v3359, %v945
    %v3442 = vperm.slane %v3362, %v947
    %v3443 = vsel %vm949, %v3442, %v3441
    %v3444 = vperm.slane %v3365, %v945
    %v3445 = vperm.slane %v3368, %v947
    %v3446 = vsel %vm949, %v3445, %v3444
    %v3447 = vperm.slane %v3371, %v945
    %v3448 = vperm.slane %v3374, %v947
    %v3449 = vsel %vm949, %v3448, %v3447
    %v3450 = vperm.slane %v3377, %v945
    %v3451 = vperm.slane %v3380, %v947
    %v3452 = vsel %vm949, %v3451, %v3450
    %v3453 = vperm.slane %v3383, %v945
    %v3454 = vperm.slane %v3386, %v947
    %v3455 = vsel %vm949, %v3454, %v3453
    %v3456 = vperm.slane %v3389, %v945
    %v3457 = vperm.slane %v3392, %v947
    %v3458 = vsel %vm949, %v3457, %v3456
    %v3459 = vperm.slane %v3395, %v945
    %v3460 = vperm.slane %v3398, %v947
    %v3461 = vsel %vm949, %v3460, %v3459
    %v3462 = vperm.slane %v3401, %v945
    %v3463 = vperm.slane %v3404, %v947
    %v3464 = vsel %vm949, %v3463, %v3462
    %v3465 = vperm.slane %v3407, %v945
    %v3466 = vperm.slane %v3410, %v947
    %v3467 = vsel %vm949, %v3466, %v3465
    %v3468 = vperm.slane %v3413, %v945
    %v3469 = vperm.slane %v3416, %v947
    %v3470 = vsel %vm949, %v3469, %v3468
    %v3471 = vperm.slane %v3419, %v945
    %v3472 = vperm.slane %v3422, %v947
    %v3473 = vsel %vm949, %v3472, %v3471
    %v3474 = vperm.slane %v3425, %v945
    %v3475 = vperm.slane %v3428, %v947
    %v3476 = vsel %vm949, %v3475, %v3474
    %v3477 = vsel %vm996, %v3434, %v3431
    %v3478 = vsel %vm998, %v3437, %v3477
    %v3479 = vsel %vm1000, %v3440, %v3478
    %v3480 = vsel %vm1002, %v3443, %v3479
    %v3481 = vsel %vm1004, %v3446, %v3480
    %v3482 = vsel %vm1006, %v3449, %v3481
    %v3483 = vsel %vm1008, %v3452, %v3482
    %v3484 = vsel %vm996, %v3458, %v3455
    %v3485 = vsel %vm998, %v3461, %v3484
    %v3486 = vsel %vm1000, %v3464, %v3485
    %v3487 = vsel %vm1002, %v3467, %v3486
    %v3488 = vsel %vm1004, %v3470, %v3487
    %v3489 = vsel %vm1006, %v3473, %v3488
    %v3490 = vsel %vm1008, %v3476, %v3489
    %v3493 = vsel %vm445, %v3483, -inf
    %3494 = vmax.xlane.f32.xlu0 %v3493
    %v3495 = vpop.xlane.xlu0 %3494
    %v3496 = vsel %vm445, %v3490, -inf
    %3497 = vmax.xlane.f32.xlu0 %v3496
    %v3498 = vpop.xlane.xlu0 %3497
    %v3501 = vperm.slane %v3495, 0
    %v3502 = vperm.slane %v3495, 1
    %v3503 = vperm.slane %v3495, 2
    %v3504 = vperm.slane %v3495, 3
    %v3505 = vperm.slane %v3495, 4
    %v3506 = vperm.slane %v3495, 5
    %v3507 = vperm.slane %v3495, 6
    %v3508 = vperm.slane %v3495, 7
    %v3509 = vperm.slane %v3498, 0
    %v3510 = vperm.slane %v3498, 1
    %v3511 = vperm.slane %v3498, 2
    %v3512 = vperm.slane %v3498, 3
    %v3513 = vperm.slane %v3498, 4
    %v3514 = vperm.slane %v3498, 5
    %v3515 = vperm.slane %v3498, 6
    %v3516 = vperm.slane %v3498, 7
    %v3533 = vsub.f32 %v3269, %v3501
    %v3534 = vsub.f32 %v3270, %v3501
    %v3535 = vsub.f32 %v3271, %v3502
    %v3536 = vsub.f32 %v3272, %v3502
    %v3537 = vsub.f32 %v3273, %v3503
    %v3538 = vsub.f32 %v3274, %v3503
    %v3539 = vsub.f32 %v3275, %v3504
    %v3540 = vsub.f32 %v3276, %v3504
    %v3541 = vsub.f32 %v3277, %v3505
    %v3542 = vsub.f32 %v3278, %v3505
    %v3543 = vsub.f32 %v3279, %v3506
    %v3544 = vsub.f32 %v3280, %v3506
    %v3545 = vsub.f32 %v3281, %v3507
    %v3546 = vsub.f32 %v3282, %v3507
    %v3547 = vsub.f32 %v3283, %v3508
    %v3548 = vsub.f32 %v3284, %v3508
    %v3549 = vsub.f32 %v3285, %v3509
    %v3550 = vsub.f32 %v3286, %v3509
    %v3551 = vsub.f32 %v3287, %v3510
    %v3552 = vsub.f32 %v3288, %v3510
    %v3553 = vsub.f32 %v3289, %v3511
    %v3554 = vsub.f32 %v3290, %v3511
    %v3555 = vsub.f32 %v3291, %v3512
    %v3556 = vsub.f32 %v3292, %v3512
    %v3557 = vsub.f32 %v3293, %v3513
    %v3558 = vsub.f32 %v3294, %v3513
    %v3559 = vsub.f32 %v3295, %v3514
    %v3560 = vsub.f32 %v3296, %v3514
    %v3561 = vsub.f32 %v3297, %v3515
    %v3562 = vsub.f32 %v3298, %v3515
    %v3563 = vsub.f32 %v3299, %v3516
    %v3564 = vsub.f32 %v3300, %v3516
    %v3565 = vmul.f32 %v3533, 1.442695
    %v3566 = vpow.pop %v3565
    %v3567 = vmul.f32 %v3534, 1.442695
    %v3568 = vpow.pop %v3567
    %v3569 = vmul.f32 %v3535, 1.442695
    %v3570 = vpow.pop %v3569
    %v3571 = vmul.f32 %v3536, 1.442695
    %v3572 = vpow.pop %v3571
    %v3573 = vmul.f32 %v3537, 1.442695
    %v3574 = vpow.pop %v3573
    %v3575 = vmul.f32 %v3538, 1.442695
    %v3576 = vpow.pop %v3575
    %v3577 = vmul.f32 %v3539, 1.442695
    %v3578 = vpow.pop %v3577
    %v3579 = vmul.f32 %v3540, 1.442695
    %v3580 = vpow.pop %v3579
    %v3581 = vmul.f32 %v3541, 1.442695
    %v3582 = vpow.pop %v3581
    %v3583 = vmul.f32 %v3542, 1.442695
    %v3584 = vpow.pop %v3583
    %v3585 = vmul.f32 %v3543, 1.442695
    %v3586 = vpow.pop %v3585
    %v3587 = vmul.f32 %v3544, 1.442695
    %v3588 = vpow.pop %v3587
    %v3589 = vmul.f32 %v3545, 1.442695
    %v3590 = vpow.pop %v3589
    %v3591 = vmul.f32 %v3546, 1.442695
    %v3592 = vpow.pop %v3591
    %v3593 = vmul.f32 %v3547, 1.442695
    %v3594 = vpow.pop %v3593
    %v3595 = vmul.f32 %v3548, 1.442695
    %v3596 = vpow.pop %v3595
    %v3597 = vmul.f32 %v3549, 1.442695
    %v3598 = vpow.pop %v3597
    %v3599 = vmul.f32 %v3550, 1.442695
    %v3600 = vpow.pop %v3599
    %v3601 = vmul.f32 %v3551, 1.442695
    %v3602 = vpow.pop %v3601
    %v3603 = vmul.f32 %v3552, 1.442695
    %v3604 = vpow.pop %v3603
    %v3605 = vmul.f32 %v3553, 1.442695
    %v3606 = vpow.pop %v3605
    %v3607 = vmul.f32 %v3554, 1.442695
    %v3608 = vpow.pop %v3607
    %v3609 = vmul.f32 %v3555, 1.442695
    %v3610 = vpow.pop %v3609
    %v3611 = vmul.f32 %v3556, 1.442695
    %v3612 = vpow.pop %v3611
    %v3613 = vmul.f32 %v3557, 1.442695
    %v3614 = vpow.pop %v3613
    %v3615 = vmul.f32 %v3558, 1.442695
    %v3616 = vpow.pop %v3615
    %v3617 = vmul.f32 %v3559, 1.442695
    %v3618 = vpow.pop %v3617
    %v3619 = vmul.f32 %v3560, 1.442695
    %v3620 = vpow.pop %v3619
    %v3621 = vmul.f32 %v3561, 1.442695
    %v3622 = vpow.pop %v3621
    %v3623 = vmul.f32 %v3562, 1.442695
    %v3624 = vpow.pop %v3623
    %v3625 = vmul.f32 %v3563, 1.442695
    %v3626 = vpow.pop %v3625
    %v3627 = vmul.f32 %v3564, 1.442695
    %v3628 = vpow.pop %v3627
    %3661 = vset.pattern.permute.xlu0 0
    %3662 = vperm.xlu0 %3661, %v3566
    %v3663 = vpop.permute.xlu0 %3662
    %3664 = vset.pattern.permute.xlu0 0
    %3665 = vperm.xlu0 %3664, %v3568
    %v3666 = vpop.permute.xlu0 %3665
    %3667 = vset.pattern.permute.xlu0 0
    %3668 = vperm.xlu0 %3667, %v3570
    %v3669 = vpop.permute.xlu0 %3668
    %3670 = vset.pattern.permute.xlu0 0
    %3671 = vperm.xlu0 %3670, %v3572
    %v3672 = vpop.permute.xlu0 %3671
    %3673 = vset.pattern.permute.xlu0 0
    %3674 = vperm.xlu0 %3673, %v3574
    %v3675 = vpop.permute.xlu0 %3674
    %3676 = vset.pattern.permute.xlu0 0
    %3677 = vperm.xlu0 %3676, %v3576
    %v3678 = vpop.permute.xlu0 %3677
    %3679 = vset.pattern.permute.xlu0 0
    %3680 = vperm.xlu0 %3679, %v3578
    %v3681 = vpop.permute.xlu0 %3680
    %3682 = vset.pattern.permute.xlu0 0
    %3683 = vperm.xlu0 %3682, %v3580
    %v3684 = vpop.permute.xlu0 %3683
    %3685 = vset.pattern.permute.xlu0 0
    %3686 = vperm.xlu0 %3685, %v3582
    %v3687 = vpop.permute.xlu0 %3686
    %3688 = vset.pattern.permute.xlu0 0
    %3689 = vperm.xlu0 %3688, %v3584
    %v3690 = vpop.permute.xlu0 %3689
    %3691 = vset.pattern.permute.xlu0 0
    %3692 = vperm.xlu0 %3691, %v3586
    %v3693 = vpop.permute.xlu0 %3692
    %3694 = vset.pattern.permute.xlu0 0
    %3695 = vperm.xlu0 %3694, %v3588
    %v3696 = vpop.permute.xlu0 %3695
    %3697 = vset.pattern.permute.xlu0 0
    %3698 = vperm.xlu0 %3697, %v3590
    %v3699 = vpop.permute.xlu0 %3698
    %3700 = vset.pattern.permute.xlu0 0
    %3701 = vperm.xlu0 %3700, %v3592
    %v3702 = vpop.permute.xlu0 %3701
    %3703 = vset.pattern.permute.xlu0 0
    %3704 = vperm.xlu0 %3703, %v3594
    %v3705 = vpop.permute.xlu0 %3704
    %3706 = vset.pattern.permute.xlu0 0
    %3707 = vperm.xlu0 %3706, %v3596
    %v3708 = vpop.permute.xlu0 %3707
    %3709 = vset.pattern.permute.xlu0 0
    %3710 = vperm.xlu0 %3709, %v3598
    %v3711 = vpop.permute.xlu0 %3710
    %3712 = vset.pattern.permute.xlu0 0
    %3713 = vperm.xlu0 %3712, %v3600
    %v3714 = vpop.permute.xlu0 %3713
    %3715 = vset.pattern.permute.xlu0 0
    %3716 = vperm.xlu0 %3715, %v3602
    %v3717 = vpop.permute.xlu0 %3716
    %3718 = vset.pattern.permute.xlu0 0
    %3719 = vperm.xlu0 %3718, %v3604
    %v3720 = vpop.permute.xlu0 %3719
    %3721 = vset.pattern.permute.xlu0 0
    %3722 = vperm.xlu0 %3721, %v3606
    %v3723 = vpop.permute.xlu0 %3722
    %3724 = vset.pattern.permute.xlu0 0
    %3725 = vperm.xlu0 %3724, %v3608
    %v3726 = vpop.permute.xlu0 %3725
    %3727 = vset.pattern.permute.xlu0 0
    %3728 = vperm.xlu0 %3727, %v3610
    %v3729 = vpop.permute.xlu0 %3728
    %3730 = vset.pattern.permute.xlu0 0
    %3731 = vperm.xlu0 %3730, %v3612
    %v3732 = vpop.permute.xlu0 %3731
    %3733 = vset.pattern.permute.xlu0 0
    %3734 = vperm.xlu0 %3733, %v3614
    %v3735 = vpop.permute.xlu0 %3734
    %3736 = vset.pattern.permute.xlu0 0
    %3737 = vperm.xlu0 %3736, %v3616
    %v3738 = vpop.permute.xlu0 %3737
    %3739 = vset.pattern.permute.xlu0 0
    %3740 = vperm.xlu0 %3739, %v3618
    %v3741 = vpop.permute.xlu0 %3740
    %3742 = vset.pattern.permute.xlu0 0
    %3743 = vperm.xlu0 %3742, %v3620
    %v3744 = vpop.permute.xlu0 %3743
    %3745 = vset.pattern.permute.xlu0 0
    %3746 = vperm.xlu0 %3745, %v3622
    %v3747 = vpop.permute.xlu0 %3746
    %3748 = vset.pattern.permute.xlu0 0
    %3749 = vperm.xlu0 %3748, %v3624
    %v3750 = vpop.permute.xlu0 %3749
    %3751 = vset.pattern.permute.xlu0 0
    %3752 = vperm.xlu0 %3751, %v3626
    %v3753 = vpop.permute.xlu0 %3752
    %3754 = vset.pattern.permute.xlu0 0
    %3755 = vperm.xlu0 %3754, %v3628
    %v3756 = vpop.permute.xlu0 %3755
    %v3757 = vperm.slane %v3663, %v945
    %v3758 = vperm.slane %v3666, %v947
    %v3759 = vsel %vm949, %v3758, %v3757
    %v3760 = vperm.slane %v3669, %v945
    %v3761 = vperm.slane %v3672, %v947
    %v3762 = vsel %vm949, %v3761, %v3760
    %v3763 = vperm.slane %v3675, %v945
    %v3764 = vperm.slane %v3678, %v947
    %v3765 = vsel %vm949, %v3764, %v3763
    %v3766 = vperm.slane %v3681, %v945
    %v3767 = vperm.slane %v3684, %v947
    %v3768 = vsel %vm949, %v3767, %v3766
    %v3769 = vperm.slane %v3687, %v945
    %v3770 = vperm.slane %v3690, %v947
    %v3771 = vsel %vm949, %v3770, %v3769
    %v3772 = vperm.slane %v3693, %v945
    %v3773 = vperm.slane %v3696, %v947
    %v3774 = vsel %vm949, %v3773, %v3772
    %v3775 = vperm.slane %v3699, %v945
    %v3776 = vperm.slane %v3702, %v947
    %v3777 = vsel %vm949, %v3776, %v3775
    %v3778 = vperm.slane %v3705, %v945
    %v3779 = vperm.slane %v3708, %v947
    %v3780 = vsel %vm949, %v3779, %v3778
    %v3781 = vperm.slane %v3711, %v945
    %v3782 = vperm.slane %v3714, %v947
    %v3783 = vsel %vm949, %v3782, %v3781
    %v3784 = vperm.slane %v3717, %v945
    %v3785 = vperm.slane %v3720, %v947
    %v3786 = vsel %vm949, %v3785, %v3784
    %v3787 = vperm.slane %v3723, %v945
    %v3788 = vperm.slane %v3726, %v947
    %v3789 = vsel %vm949, %v3788, %v3787
    %v3790 = vperm.slane %v3729, %v945
    %v3791 = vperm.slane %v3732, %v947
    %v3792 = vsel %vm949, %v3791, %v3790
    %v3793 = vperm.slane %v3735, %v945
    %v3794 = vperm.slane %v3738, %v947
    %v3795 = vsel %vm949, %v3794, %v3793
    %v3796 = vperm.slane %v3741, %v945
    %v3797 = vperm.slane %v3744, %v947
    %v3798 = vsel %vm949, %v3797, %v3796
    %v3799 = vperm.slane %v3747, %v945
    %v3800 = vperm.slane %v3750, %v947
    %v3801 = vsel %vm949, %v3800, %v3799
    %v3802 = vperm.slane %v3753, %v945
    %v3803 = vperm.slane %v3756, %v947
    %v3804 = vsel %vm949, %v3803, %v3802
    %v3805 = vsel %vm996, %v3762, %v3759
    %v3806 = vsel %vm998, %v3765, %v3805
    %v3807 = vsel %vm1000, %v3768, %v3806
    %v3808 = vsel %vm1002, %v3771, %v3807
    %v3809 = vsel %vm1004, %v3774, %v3808
    %v3810 = vsel %vm1006, %v3777, %v3809
    %v3811 = vsel %vm1008, %v3780, %v3810
    %v3812 = vsel %vm996, %v3786, %v3783
    %v3813 = vsel %vm998, %v3789, %v3812
    %v3814 = vsel %vm1000, %v3792, %v3813
    %v3815 = vsel %vm1002, %v3795, %v3814
    %v3816 = vsel %vm1004, %v3798, %v3815
    %v3817 = vsel %vm1006, %v3801, %v3816
    %v3818 = vsel %vm1008, %v3804, %v3817
    %v3821 = vsel %vm445, %v3811, 0.0
    %3822 = vadd.xlane.f32.xlu0 %v3821
    %v3823 = vpop.xlane.xlu0 %3822
    %v3824 = vsel %vm445, %v3818, 0.0
    %3825 = vadd.xlane.f32.xlu0 %v3824
    %v3826 = vpop.xlane.xlu0 %3825
    %v3827 = vrcp.pop %v3823
    %v3828 = vrcp.pop %v3826
    %v3831 = vperm.slane %v3827, 0
    %v3832 = vperm.slane %v3827, 1
    %v3833 = vperm.slane %v3827, 2
    %v3834 = vperm.slane %v3827, 3
    %v3835 = vperm.slane %v3827, 4
    %v3836 = vperm.slane %v3827, 5
    %v3837 = vperm.slane %v3827, 6
    %v3838 = vperm.slane %v3827, 7
    %v3839 = vperm.slane %v3828, 0
    %v3840 = vperm.slane %v3828, 1
    %v3841 = vperm.slane %v3828, 2
    %v3842 = vperm.slane %v3828, 3
    %v3843 = vperm.slane %v3828, 4
    %v3844 = vperm.slane %v3828, 5
    %v3845 = vperm.slane %v3828, 6
    %v3846 = vperm.slane %v3828, 7
    %v3863 = vmul.f32 %v3566, %v3831
    %v3864 = vmul.f32 %v3568, %v3831
    %v3865 = vmul.f32 %v3570, %v3832
    %v3866 = vmul.f32 %v3572, %v3832
    %v3867 = vmul.f32 %v3574, %v3833
    %v3868 = vmul.f32 %v3576, %v3833
    %v3869 = vmul.f32 %v3578, %v3834
    %v3870 = vmul.f32 %v3580, %v3834
    %v3871 = vmul.f32 %v3582, %v3835
    %v3872 = vmul.f32 %v3584, %v3835
    %v3873 = vmul.f32 %v3586, %v3836
    %v3874 = vmul.f32 %v3588, %v3836
    %v3875 = vmul.f32 %v3590, %v3837
    %v3876 = vmul.f32 %v3592, %v3837
    %v3877 = vmul.f32 %v3594, %v3838
    %v3878 = vmul.f32 %v3596, %v3838
    %v3879 = vmul.f32 %v3598, %v3839
    %v3880 = vmul.f32 %v3600, %v3839
    %v3881 = vmul.f32 %v3602, %v3840
    %v3882 = vmul.f32 %v3604, %v3840
    %v3883 = vmul.f32 %v3606, %v3841
    %v3884 = vmul.f32 %v3608, %v3841
    %v3885 = vmul.f32 %v3610, %v3842
    %v3886 = vmul.f32 %v3612, %v3842
    %v3887 = vmul.f32 %v3614, %v3843
    %v3888 = vmul.f32 %v3616, %v3843
    %v3889 = vmul.f32 %v3618, %v3844
    %v3890 = vmul.f32 %v3620, %v3844
    %v3891 = vmul.f32 %v3622, %v3845
    %v3892 = vmul.f32 %v3624, %v3845
    %v3893 = vmul.f32 %v3626, %v3846
    %v3894 = vmul.f32 %v3628, %v3846
    %v3895 = vperm.slane %v2825, 1
    %3897 = vrot.lane.b32.xlu0 %v3895, 48
    %v3898 = vpop.permute.xlu0 %3897
    %v3900 = vmul.f32 %v2976, %v3898
    %v3901 = vmul.f32 %v2977, %v3898
    %v3902 = vmul.f32 %v2978, %v3898
    %v3903 = vmul.f32 %v2979, %v3898
    %v3904 = vmul.f32 %v2980, %v3898
    %v3905 = vmul.f32 %v2981, %v3898
    %v3906 = vmul.f32 %v2982, %v3898
    %v3907 = vmul.f32 %v2983, %v3898
    %v3908 = vmul.f32 %v2984, %v3898
    %v3909 = vmul.f32 %v2985, %v3898
    %v3910 = vmul.f32 %v2986, %v3898
    %v3911 = vmul.f32 %v2987, %v3898
    %v3912 = vmul.f32 %v2988, %v3898
    %v3913 = vmul.f32 %v2989, %v3898
    %v3914 = vmul.f32 %v2990, %v3898
    %v3915 = vmul.f32 %v2991, %v3898
    %v3916 = vmul.f32 %v2992, %v3898
    %v3917 = vmul.f32 %v2993, %v3898
    %v3918 = vmul.f32 %v2994, %v3898
    %v3919 = vmul.f32 %v2995, %v3898
    %v3920 = vmul.f32 %v2996, %v3898
    %v3921 = vmul.f32 %v2997, %v3898
    %v3922 = vmul.f32 %v2998, %v3898
    %v3923 = vmul.f32 %v2999, %v3898
    %v3924 = vmul.f32 %v3000, %v3898
    %v3925 = vmul.f32 %v3001, %v3898
    %v3926 = vmul.f32 %v3002, %v3898
    %v3927 = vmul.f32 %v3003, %v3898
    %v3928 = vmul.f32 %v3004, %v3898
    %v3929 = vmul.f32 %v3005, %v3898
    %v3930 = vmul.f32 %v3006, %v3898
    %v3931 = vmul.f32 %v3007, %v3898
    %3964 = vrot.lane.b32.xlu0 %v3900, 80
    %v3965 = vpop.permute.xlu0 %3964
    %3966 = vrot.lane.b32.xlu0 %v3901, 80
    %v3967 = vpop.permute.xlu0 %3966
    %3968 = vrot.lane.b32.xlu0 %v3902, 80
    %v3969 = vpop.permute.xlu0 %3968
    %3970 = vrot.lane.b32.xlu0 %v3903, 80
    %v3971 = vpop.permute.xlu0 %3970
    %3972 = vrot.lane.b32.xlu0 %v3904, 80
    %v3973 = vpop.permute.xlu0 %3972
    %3974 = vrot.lane.b32.xlu0 %v3905, 80
    %v3975 = vpop.permute.xlu0 %3974
    %3976 = vrot.lane.b32.xlu0 %v3906, 80
    %v3977 = vpop.permute.xlu0 %3976
    %3978 = vrot.lane.b32.xlu0 %v3907, 80
    %v3979 = vpop.permute.xlu0 %3978
    %3980 = vrot.lane.b32.xlu0 %v3908, 80
    %v3981 = vpop.permute.xlu0 %3980
    %3982 = vrot.lane.b32.xlu0 %v3909, 80
    %v3983 = vpop.permute.xlu0 %3982
    %3984 = vrot.lane.b32.xlu0 %v3910, 80
    %v3985 = vpop.permute.xlu0 %3984
    %3986 = vrot.lane.b32.xlu0 %v3911, 80
    %v3987 = vpop.permute.xlu0 %3986
    %3988 = vrot.lane.b32.xlu0 %v3912, 80
    %v3989 = vpop.permute.xlu0 %3988
    %3990 = vrot.lane.b32.xlu0 %v3913, 80
    %v3991 = vpop.permute.xlu0 %3990
    %3992 = vrot.lane.b32.xlu0 %v3914, 80
    %v3993 = vpop.permute.xlu0 %3992
    %3994 = vrot.lane.b32.xlu0 %v3915, 80
    %v3995 = vpop.permute.xlu0 %3994
    %3996 = vrot.lane.b32.xlu0 %v3916, 80
    %v3997 = vpop.permute.xlu0 %3996
    %3998 = vrot.lane.b32.xlu0 %v3917, 80
    %v3999 = vpop.permute.xlu0 %3998
    %4000 = vrot.lane.b32.xlu0 %v3918, 80
    %v4001 = vpop.permute.xlu0 %4000
    %4002 = vrot.lane.b32.xlu0 %v3919, 80
    %v4003 = vpop.permute.xlu0 %4002
    %4004 = vrot.lane.b32.xlu0 %v3920, 80
    %v4005 = vpop.permute.xlu0 %4004
    %4006 = vrot.lane.b32.xlu0 %v3921, 80
    %v4007 = vpop.permute.xlu0 %4006
    %4008 = vrot.lane.b32.xlu0 %v3922, 80
    %v4009 = vpop.permute.xlu0 %4008
    %4010 = vrot.lane.b32.xlu0 %v3923, 80
    %v4011 = vpop.permute.xlu0 %4010
    %4012 = vrot.lane.b32.xlu0 %v3924, 80
    %v4013 = vpop.permute.xlu0 %4012
    %4014 = vrot.lane.b32.xlu0 %v3925, 80
    %v4015 = vpop.permute.xlu0 %4014
    %4016 = vrot.lane.b32.xlu0 %v3926, 80
    %v4017 = vpop.permute.xlu0 %4016
    %4018 = vrot.lane.b32.xlu0 %v3927, 80
    %v4019 = vpop.permute.xlu0 %4018
    %4020 = vrot.lane.b32.xlu0 %v3928, 80
    %v4021 = vpop.permute.xlu0 %4020
    %4022 = vrot.lane.b32.xlu0 %v3929, 80
    %v4023 = vpop.permute.xlu0 %4022
    %4024 = vrot.lane.b32.xlu0 %v3930, 80
    %v4025 = vpop.permute.xlu0 %4024
    %4026 = vrot.lane.b32.xlu0 %v3931, 80
    %v4027 = vpop.permute.xlu0 %4026
    %v4060 = vsel %vm445, %v3965, 0.0
    %4061 = vadd.xlane.f32.xlu0 %v4060
    %v4062 = vpop.xlane.xlu0 %4061
    %v4063 = vsel %vm445, %v3967, 0.0
    %4064 = vadd.xlane.f32.xlu0 %v4063
    %v4065 = vpop.xlane.xlu0 %4064
    %v4066 = vsel %vm445, %v3969, 0.0
    %4067 = vadd.xlane.f32.xlu0 %v4066
    %v4068 = vpop.xlane.xlu0 %4067
    %v4069 = vsel %vm445, %v3971, 0.0
    %4070 = vadd.xlane.f32.xlu0 %v4069
    %v4071 = vpop.xlane.xlu0 %4070
    %v4072 = vsel %vm445, %v3973, 0.0
    %4073 = vadd.xlane.f32.xlu0 %v4072
    %v4074 = vpop.xlane.xlu0 %4073
    %v4075 = vsel %vm445, %v3975, 0.0
    %4076 = vadd.xlane.f32.xlu0 %v4075
    %v4077 = vpop.xlane.xlu0 %4076
    %v4078 = vsel %vm445, %v3977, 0.0
    %4079 = vadd.xlane.f32.xlu0 %v4078
    %v4080 = vpop.xlane.xlu0 %4079
    %v4081 = vsel %vm445, %v3979, 0.0
    %4082 = vadd.xlane.f32.xlu0 %v4081
    %v4083 = vpop.xlane.xlu0 %4082
    %v4084 = vsel %vm445, %v3981, 0.0
    %4085 = vadd.xlane.f32.xlu0 %v4084
    %v4086 = vpop.xlane.xlu0 %4085
    %v4087 = vsel %vm445, %v3983, 0.0
    %4088 = vadd.xlane.f32.xlu0 %v4087
    %v4089 = vpop.xlane.xlu0 %4088
    %v4090 = vsel %vm445, %v3985, 0.0
    %4091 = vadd.xlane.f32.xlu0 %v4090
    %v4092 = vpop.xlane.xlu0 %4091
    %v4093 = vsel %vm445, %v3987, 0.0
    %4094 = vadd.xlane.f32.xlu0 %v4093
    %v4095 = vpop.xlane.xlu0 %4094
    %v4096 = vsel %vm445, %v3989, 0.0
    %4097 = vadd.xlane.f32.xlu0 %v4096
    %v4098 = vpop.xlane.xlu0 %4097
    %v4099 = vsel %vm445, %v3991, 0.0
    %4100 = vadd.xlane.f32.xlu0 %v4099
    %v4101 = vpop.xlane.xlu0 %4100
    %v4102 = vsel %vm445, %v3993, 0.0
    %4103 = vadd.xlane.f32.xlu0 %v4102
    %v4104 = vpop.xlane.xlu0 %4103
    %v4105 = vsel %vm445, %v3995, 0.0
    %4106 = vadd.xlane.f32.xlu0 %v4105
    %v4107 = vpop.xlane.xlu0 %4106
    %v4108 = vsel %vm445, %v3997, 0.0
    %4109 = vadd.xlane.f32.xlu0 %v4108
    %v4110 = vpop.xlane.xlu0 %4109
    %v4111 = vsel %vm445, %v3999, 0.0
    %4112 = vadd.xlane.f32.xlu0 %v4111
    %v4113 = vpop.xlane.xlu0 %4112
    %v4114 = vsel %vm445, %v4001, 0.0
    %4115 = vadd.xlane.f32.xlu0 %v4114
    %v4116 = vpop.xlane.xlu0 %4115
    %v4117 = vsel %vm445, %v4003, 0.0
    %4118 = vadd.xlane.f32.xlu0 %v4117
    %v4119 = vpop.xlane.xlu0 %4118
    %v4120 = vsel %vm445, %v4005, 0.0
    %4121 = vadd.xlane.f32.xlu0 %v4120
    %v4122 = vpop.xlane.xlu0 %4121
    %v4123 = vsel %vm445, %v4007, 0.0
    %4124 = vadd.xlane.f32.xlu0 %v4123
    %v4125 = vpop.xlane.xlu0 %4124
    %v4126 = vsel %vm445, %v4009, 0.0
    %4127 = vadd.xlane.f32.xlu0 %v4126
    %v4128 = vpop.xlane.xlu0 %4127
    %v4129 = vsel %vm445, %v4011, 0.0
    %4130 = vadd.xlane.f32.xlu0 %v4129
    %v4131 = vpop.xlane.xlu0 %4130
    %v4132 = vsel %vm445, %v4013, 0.0
    %4133 = vadd.xlane.f32.xlu0 %v4132
    %v4134 = vpop.xlane.xlu0 %4133
    %v4135 = vsel %vm445, %v4015, 0.0
    %4136 = vadd.xlane.f32.xlu0 %v4135
    %v4137 = vpop.xlane.xlu0 %4136
    %v4138 = vsel %vm445, %v4017, 0.0
    %4139 = vadd.xlane.f32.xlu0 %v4138
    %v4140 = vpop.xlane.xlu0 %4139
    %v4141 = vsel %vm445, %v4019, 0.0
    %4142 = vadd.xlane.f32.xlu0 %v4141
    %v4143 = vpop.xlane.xlu0 %4142
    %v4144 = vsel %vm445, %v4021, 0.0
    %4145 = vadd.xlane.f32.xlu0 %v4144
    %v4146 = vpop.xlane.xlu0 %4145
    %v4147 = vsel %vm445, %v4023, 0.0
    %4148 = vadd.xlane.f32.xlu0 %v4147
    %v4149 = vpop.xlane.xlu0 %4148
    %v4150 = vsel %vm445, %v4025, 0.0
    %4151 = vadd.xlane.f32.xlu0 %v4150
    %v4152 = vpop.xlane.xlu0 %4151
    %v4153 = vsel %vm445, %v4027, 0.0
    %4154 = vadd.xlane.f32.xlu0 %v4153
    %v4155 = vpop.xlane.xlu0 %4154
    %v4156 = vadd.f32 %v4062, %v550
    %v4157 = vadd.f32 %v4065, %v556
    %v4158 = vadd.f32 %v4068, %v563
    %v4159 = vadd.f32 %v4071, %v569
    %v4160 = vadd.f32 %v4074, %v576
    %v4161 = vadd.f32 %v4077, %v582
    %v4162 = vadd.f32 %v4080, %v589
    %v4163 = vadd.f32 %v4083, %v595
    %v4164 = vadd.f32 %v4086, %v602
    %v4165 = vadd.f32 %v4089, %v608
    %v4166 = vadd.f32 %v4092, %v615
    %v4167 = vadd.f32 %v4095, %v621
    %v4168 = vadd.f32 %v4098, %v628
    %v4169 = vadd.f32 %v4101, %v634
    %v4170 = vadd.f32 %v4104, %v641
    %v4171 = vadd.f32 %v4107, %v647
    %v4172 = vadd.f32 %v4110, %v654
    %v4173 = vadd.f32 %v4113, %v660
    %v4174 = vadd.f32 %v4116, %v667
    %v4175 = vadd.f32 %v4119, %v673
    %v4176 = vadd.f32 %v4122, %v680
    %v4177 = vadd.f32 %v4125, %v686
    %v4178 = vadd.f32 %v4128, %v693
    %v4179 = vadd.f32 %v4131, %v699
    %v4180 = vadd.f32 %v4134, %v706
    %v4181 = vadd.f32 %v4137, %v712
    %v4182 = vadd.f32 %v4140, %v719
    %v4183 = vadd.f32 %v4143, %v725
    %v4184 = vadd.f32 %v4146, %v732
    %v4185 = vadd.f32 %v4149, %v738
    %v4186 = vadd.f32 %v4152, %v745
    %v4187 = vadd.f32 %v4155, %v751
    %4220 = vset.pattern.permute.xlu0 0
    %4221 = vperm.xlu0 %4220, %v4156
    %v4222 = vpop.permute.xlu0 %4221
    %4223 = vset.pattern.permute.xlu0 0
    %4224 = vperm.xlu0 %4223, %v4157
    %v4225 = vpop.permute.xlu0 %4224
    %4226 = vset.pattern.permute.xlu0 0
    %4227 = vperm.xlu0 %4226, %v4158
    %v4228 = vpop.permute.xlu0 %4227
    %4229 = vset.pattern.permute.xlu0 0
    %4230 = vperm.xlu0 %4229, %v4159
    %v4231 = vpop.permute.xlu0 %4230
    %4232 = vset.pattern.permute.xlu0 0
    %4233 = vperm.xlu0 %4232, %v4160
    %v4234 = vpop.permute.xlu0 %4233
    %4235 = vset.pattern.permute.xlu0 0
    %4236 = vperm.xlu0 %4235, %v4161
    %v4237 = vpop.permute.xlu0 %4236
    %4238 = vset.pattern.permute.xlu0 0
    %4239 = vperm.xlu0 %4238, %v4162
    %v4240 = vpop.permute.xlu0 %4239
    %4241 = vset.pattern.permute.xlu0 0
    %4242 = vperm.xlu0 %4241, %v4163
    %v4243 = vpop.permute.xlu0 %4242
    %4244 = vset.pattern.permute.xlu0 0
    %4245 = vperm.xlu0 %4244, %v4164
    %v4246 = vpop.permute.xlu0 %4245
    %4247 = vset.pattern.permute.xlu0 0
    %4248 = vperm.xlu0 %4247, %v4165
    %v4249 = vpop.permute.xlu0 %4248
    %4250 = vset.pattern.permute.xlu0 0
    %4251 = vperm.xlu0 %4250, %v4166
    %v4252 = vpop.permute.xlu0 %4251
    %4253 = vset.pattern.permute.xlu0 0
    %4254 = vperm.xlu0 %4253, %v4167
    %v4255 = vpop.permute.xlu0 %4254
    %4256 = vset.pattern.permute.xlu0 0
    %4257 = vperm.xlu0 %4256, %v4168
    %v4258 = vpop.permute.xlu0 %4257
    %4259 = vset.pattern.permute.xlu0 0
    %4260 = vperm.xlu0 %4259, %v4169
    %v4261 = vpop.permute.xlu0 %4260
    %4262 = vset.pattern.permute.xlu0 0
    %4263 = vperm.xlu0 %4262, %v4170
    %v4264 = vpop.permute.xlu0 %4263
    %4265 = vset.pattern.permute.xlu0 0
    %4266 = vperm.xlu0 %4265, %v4171
    %v4267 = vpop.permute.xlu0 %4266
    %4268 = vset.pattern.permute.xlu0 0
    %4269 = vperm.xlu0 %4268, %v4172
    %v4270 = vpop.permute.xlu0 %4269
    %4271 = vset.pattern.permute.xlu0 0
    %4272 = vperm.xlu0 %4271, %v4173
    %v4273 = vpop.permute.xlu0 %4272
    %4274 = vset.pattern.permute.xlu0 0
    %4275 = vperm.xlu0 %4274, %v4174
    %v4276 = vpop.permute.xlu0 %4275
    %4277 = vset.pattern.permute.xlu0 0
    %4278 = vperm.xlu0 %4277, %v4175
    %v4279 = vpop.permute.xlu0 %4278
    %4280 = vset.pattern.permute.xlu0 0
    %4281 = vperm.xlu0 %4280, %v4176
    %v4282 = vpop.permute.xlu0 %4281
    %4283 = vset.pattern.permute.xlu0 0
    %4284 = vperm.xlu0 %4283, %v4177
    %v4285 = vpop.permute.xlu0 %4284
    %4286 = vset.pattern.permute.xlu0 0
    %4287 = vperm.xlu0 %4286, %v4178
    %v4288 = vpop.permute.xlu0 %4287
    %4289 = vset.pattern.permute.xlu0 0
    %4290 = vperm.xlu0 %4289, %v4179
    %v4291 = vpop.permute.xlu0 %4290
    %4292 = vset.pattern.permute.xlu0 0
    %4293 = vperm.xlu0 %4292, %v4180
    %v4294 = vpop.permute.xlu0 %4293
    %4295 = vset.pattern.permute.xlu0 0
    %4296 = vperm.xlu0 %4295, %v4181
    %v4297 = vpop.permute.xlu0 %4296
    %4298 = vset.pattern.permute.xlu0 0
    %4299 = vperm.xlu0 %4298, %v4182
    %v4300 = vpop.permute.xlu0 %4299
    %4301 = vset.pattern.permute.xlu0 0
    %4302 = vperm.xlu0 %4301, %v4183
    %v4303 = vpop.permute.xlu0 %4302
    %4304 = vset.pattern.permute.xlu0 0
    %4305 = vperm.xlu0 %4304, %v4184
    %v4306 = vpop.permute.xlu0 %4305
    %4307 = vset.pattern.permute.xlu0 0
    %4308 = vperm.xlu0 %4307, %v4185
    %v4309 = vpop.permute.xlu0 %4308
    %4310 = vset.pattern.permute.xlu0 0
    %4311 = vperm.xlu0 %4310, %v4186
    %v4312 = vpop.permute.xlu0 %4311
    %4313 = vset.pattern.permute.xlu0 0
    %4314 = vperm.xlu0 %4313, %v4187
    %v4315 = vpop.permute.xlu0 %4314
    %v4316 = vperm.slane %v4222, %v945
    %v4317 = vperm.slane %v4225, %v947
    %v4318 = vsel %vm949, %v4317, %v4316
    %v4319 = vperm.slane %v4228, %v945
    %v4320 = vperm.slane %v4231, %v947
    %v4321 = vsel %vm949, %v4320, %v4319
    %v4322 = vperm.slane %v4234, %v945
    %v4323 = vperm.slane %v4237, %v947
    %v4324 = vsel %vm949, %v4323, %v4322
    %v4325 = vperm.slane %v4240, %v945
    %v4326 = vperm.slane %v4243, %v947
    %v4327 = vsel %vm949, %v4326, %v4325
    %v4328 = vperm.slane %v4246, %v945
    %v4329 = vperm.slane %v4249, %v947
    %v4330 = vsel %vm949, %v4329, %v4328
    %v4331 = vperm.slane %v4252, %v945
    %v4332 = vperm.slane %v4255, %v947
    %v4333 = vsel %vm949, %v4332, %v4331
    %v4334 = vperm.slane %v4258, %v945
    %v4335 = vperm.slane %v4261, %v947
    %v4336 = vsel %vm949, %v4335, %v4334
    %v4337 = vperm.slane %v4264, %v945
    %v4338 = vperm.slane %v4267, %v947
    %v4339 = vsel %vm949, %v4338, %v4337
    %v4340 = vperm.slane %v4270, %v945
    %v4341 = vperm.slane %v4273, %v947
    %v4342 = vsel %vm949, %v4341, %v4340
    %v4343 = vperm.slane %v4276, %v945
    %v4344 = vperm.slane %v4279, %v947
    %v4345 = vsel %vm949, %v4344, %v4343
    %v4346 = vperm.slane %v4282, %v945
    %v4347 = vperm.slane %v4285, %v947
    %v4348 = vsel %vm949, %v4347, %v4346
    %v4349 = vperm.slane %v4288, %v945
    %v4350 = vperm.slane %v4291, %v947
    %v4351 = vsel %vm949, %v4350, %v4349
    %v4352 = vperm.slane %v4294, %v945
    %v4353 = vperm.slane %v4297, %v947
    %v4354 = vsel %vm949, %v4353, %v4352
    %v4355 = vperm.slane %v4300, %v945
    %v4356 = vperm.slane %v4303, %v947
    %v4357 = vsel %vm949, %v4356, %v4355
    %v4358 = vperm.slane %v4306, %v945
    %v4359 = vperm.slane %v4309, %v947
    %v4360 = vsel %vm949, %v4359, %v4358
    %v4361 = vperm.slane %v4312, %v945
    %v4362 = vperm.slane %v4315, %v947
    %v4363 = vsel %vm949, %v4362, %v4361
    %v4364 = vsel %vm996, %v4321, %v4318
    %v4365 = vsel %vm998, %v4324, %v4364
    %v4366 = vsel %vm1000, %v4327, %v4365
    %v4367 = vsel %vm1002, %v4330, %v4366
    %v4368 = vsel %vm1004, %v4333, %v4367
    %v4369 = vsel %vm1006, %v4336, %v4368
    %v4370 = vsel %vm1008, %v4339, %v4369
    %v4371 = vsel %vm996, %v4345, %v4342
    %v4372 = vsel %vm998, %v4348, %v4371
    %v4373 = vsel %vm1000, %v4351, %v4372
    %v4374 = vsel %vm1002, %v4354, %v4373
    %v4375 = vsel %vm1004, %v4357, %v4374
    %v4376 = vsel %vm1006, %v4360, %v4375
    %v4377 = vsel %vm1008, %v4363, %v4376
    %v4380 = vsel %vm445, %v4370, -inf
    %4381 = vmax.xlane.f32.xlu0 %v4380
    %v4382 = vpop.xlane.xlu0 %4381
    %v4383 = vsel %vm445, %v4377, -inf
    %4384 = vmax.xlane.f32.xlu0 %v4383
    %v4385 = vpop.xlane.xlu0 %4384
    %v4388 = vperm.slane %v4382, 0
    %v4389 = vperm.slane %v4382, 1
    %v4390 = vperm.slane %v4382, 2
    %v4391 = vperm.slane %v4382, 3
    %v4392 = vperm.slane %v4382, 4
    %v4393 = vperm.slane %v4382, 5
    %v4394 = vperm.slane %v4382, 6
    %v4395 = vperm.slane %v4382, 7
    %v4396 = vperm.slane %v4385, 0
    %v4397 = vperm.slane %v4385, 1
    %v4398 = vperm.slane %v4385, 2
    %v4399 = vperm.slane %v4385, 3
    %v4400 = vperm.slane %v4385, 4
    %v4401 = vperm.slane %v4385, 5
    %v4402 = vperm.slane %v4385, 6
    %v4403 = vperm.slane %v4385, 7
    %v4420 = vsub.f32 %v4156, %v4388
    %v4421 = vsub.f32 %v4157, %v4388
    %v4422 = vsub.f32 %v4158, %v4389
    %v4423 = vsub.f32 %v4159, %v4389
    %v4424 = vsub.f32 %v4160, %v4390
    %v4425 = vsub.f32 %v4161, %v4390
    %v4426 = vsub.f32 %v4162, %v4391
    %v4427 = vsub.f32 %v4163, %v4391
    %v4428 = vsub.f32 %v4164, %v4392
    %v4429 = vsub.f32 %v4165, %v4392
    %v4430 = vsub.f32 %v4166, %v4393
    %v4431 = vsub.f32 %v4167, %v4393
    %v4432 = vsub.f32 %v4168, %v4394
    %v4433 = vsub.f32 %v4169, %v4394
    %v4434 = vsub.f32 %v4170, %v4395
    %v4435 = vsub.f32 %v4171, %v4395
    %v4436 = vsub.f32 %v4172, %v4396
    %v4437 = vsub.f32 %v4173, %v4396
    %v4438 = vsub.f32 %v4174, %v4397
    %v4439 = vsub.f32 %v4175, %v4397
    %v4440 = vsub.f32 %v4176, %v4398
    %v4441 = vsub.f32 %v4177, %v4398
    %v4442 = vsub.f32 %v4178, %v4399
    %v4443 = vsub.f32 %v4179, %v4399
    %v4444 = vsub.f32 %v4180, %v4400
    %v4445 = vsub.f32 %v4181, %v4400
    %v4446 = vsub.f32 %v4182, %v4401
    %v4447 = vsub.f32 %v4183, %v4401
    %v4448 = vsub.f32 %v4184, %v4402
    %v4449 = vsub.f32 %v4185, %v4402
    %v4450 = vsub.f32 %v4186, %v4403
    %v4451 = vsub.f32 %v4187, %v4403
    %v4452 = vmul.f32 %v4420, 1.442695
    %v4453 = vpow.pop %v4452
    %v4454 = vmul.f32 %v4421, 1.442695
    %v4455 = vpow.pop %v4454
    %v4456 = vmul.f32 %v4422, 1.442695
    %v4457 = vpow.pop %v4456
    %v4458 = vmul.f32 %v4423, 1.442695
    %v4459 = vpow.pop %v4458
    %v4460 = vmul.f32 %v4424, 1.442695
    %v4461 = vpow.pop %v4460
    %v4462 = vmul.f32 %v4425, 1.442695
    %v4463 = vpow.pop %v4462
    %v4464 = vmul.f32 %v4426, 1.442695
    %v4465 = vpow.pop %v4464
    %v4466 = vmul.f32 %v4427, 1.442695
    %v4467 = vpow.pop %v4466
    %v4468 = vmul.f32 %v4428, 1.442695
    %v4469 = vpow.pop %v4468
    %v4470 = vmul.f32 %v4429, 1.442695
    %v4471 = vpow.pop %v4470
    %v4472 = vmul.f32 %v4430, 1.442695
    %v4473 = vpow.pop %v4472
    %v4474 = vmul.f32 %v4431, 1.442695
    %v4475 = vpow.pop %v4474
    %v4476 = vmul.f32 %v4432, 1.442695
    %v4477 = vpow.pop %v4476
    %v4478 = vmul.f32 %v4433, 1.442695
    %v4479 = vpow.pop %v4478
    %v4480 = vmul.f32 %v4434, 1.442695
    %v4481 = vpow.pop %v4480
    %v4482 = vmul.f32 %v4435, 1.442695
    %v4483 = vpow.pop %v4482
    %v4484 = vmul.f32 %v4436, 1.442695
    %v4485 = vpow.pop %v4484
    %v4486 = vmul.f32 %v4437, 1.442695
    %v4487 = vpow.pop %v4486
    %v4488 = vmul.f32 %v4438, 1.442695
    %v4489 = vpow.pop %v4488
    %v4490 = vmul.f32 %v4439, 1.442695
    %v4491 = vpow.pop %v4490
    %v4492 = vmul.f32 %v4440, 1.442695
    %v4493 = vpow.pop %v4492
    %v4494 = vmul.f32 %v4441, 1.442695
    %v4495 = vpow.pop %v4494
    %v4496 = vmul.f32 %v4442, 1.442695
    %v4497 = vpow.pop %v4496
    %v4498 = vmul.f32 %v4443, 1.442695
    %v4499 = vpow.pop %v4498
    %v4500 = vmul.f32 %v4444, 1.442695
    %v4501 = vpow.pop %v4500
    %v4502 = vmul.f32 %v4445, 1.442695
    %v4503 = vpow.pop %v4502
    %v4504 = vmul.f32 %v4446, 1.442695
    %v4505 = vpow.pop %v4504
    %v4506 = vmul.f32 %v4447, 1.442695
    %v4507 = vpow.pop %v4506
    %v4508 = vmul.f32 %v4448, 1.442695
    %v4509 = vpow.pop %v4508
    %v4510 = vmul.f32 %v4449, 1.442695
    %v4511 = vpow.pop %v4510
    %v4512 = vmul.f32 %v4450, 1.442695
    %v4513 = vpow.pop %v4512
    %v4514 = vmul.f32 %v4451, 1.442695
    %v4515 = vpow.pop %v4514
    %4548 = vset.pattern.permute.xlu0 0
    %4549 = vperm.xlu0 %4548, %v4453
    %v4550 = vpop.permute.xlu0 %4549
    %4551 = vset.pattern.permute.xlu0 0
    %4552 = vperm.xlu0 %4551, %v4455
    %v4553 = vpop.permute.xlu0 %4552
    %4554 = vset.pattern.permute.xlu0 0
    %4555 = vperm.xlu0 %4554, %v4457
    %v4556 = vpop.permute.xlu0 %4555
    %4557 = vset.pattern.permute.xlu0 0
    %4558 = vperm.xlu0 %4557, %v4459
    %v4559 = vpop.permute.xlu0 %4558
    %4560 = vset.pattern.permute.xlu0 0
    %4561 = vperm.xlu0 %4560, %v4461
    %v4562 = vpop.permute.xlu0 %4561
    %4563 = vset.pattern.permute.xlu0 0
    %4564 = vperm.xlu0 %4563, %v4463
    %v4565 = vpop.permute.xlu0 %4564
    %4566 = vset.pattern.permute.xlu0 0
    %4567 = vperm.xlu0 %4566, %v4465
    %v4568 = vpop.permute.xlu0 %4567
    %4569 = vset.pattern.permute.xlu0 0
    %4570 = vperm.xlu0 %4569, %v4467
    %v4571 = vpop.permute.xlu0 %4570
    %4572 = vset.pattern.permute.xlu0 0
    %4573 = vperm.xlu0 %4572, %v4469
    %v4574 = vpop.permute.xlu0 %4573
    %4575 = vset.pattern.permute.xlu0 0
    %4576 = vperm.xlu0 %4575, %v4471
    %v4577 = vpop.permute.xlu0 %4576
    %4578 = vset.pattern.permute.xlu0 0
    %4579 = vperm.xlu0 %4578, %v4473
    %v4580 = vpop.permute.xlu0 %4579
    %4581 = vset.pattern.permute.xlu0 0
    %4582 = vperm.xlu0 %4581, %v4475
    %v4583 = vpop.permute.xlu0 %4582
    %4584 = vset.pattern.permute.xlu0 0
    %4585 = vperm.xlu0 %4584, %v4477
    %v4586 = vpop.permute.xlu0 %4585
    %4587 = vset.pattern.permute.xlu0 0
    %4588 = vperm.xlu0 %4587, %v4479
    %v4589 = vpop.permute.xlu0 %4588
    %4590 = vset.pattern.permute.xlu0 0
    %4591 = vperm.xlu0 %4590, %v4481
    %v4592 = vpop.permute.xlu0 %4591
    %4593 = vset.pattern.permute.xlu0 0
    %4594 = vperm.xlu0 %4593, %v4483
    %v4595 = vpop.permute.xlu0 %4594
    %4596 = vset.pattern.permute.xlu0 0
    %4597 = vperm.xlu0 %4596, %v4485
    %v4598 = vpop.permute.xlu0 %4597
    %4599 = vset.pattern.permute.xlu0 0
    %4600 = vperm.xlu0 %4599, %v4487
    %v4601 = vpop.permute.xlu0 %4600
    %4602 = vset.pattern.permute.xlu0 0
    %4603 = vperm.xlu0 %4602, %v4489
    %v4604 = vpop.permute.xlu0 %4603
    %4605 = vset.pattern.permute.xlu0 0
    %4606 = vperm.xlu0 %4605, %v4491
    %v4607 = vpop.permute.xlu0 %4606
    %4608 = vset.pattern.permute.xlu0 0
    %4609 = vperm.xlu0 %4608, %v4493
    %v4610 = vpop.permute.xlu0 %4609
    %4611 = vset.pattern.permute.xlu0 0
    %4612 = vperm.xlu0 %4611, %v4495
    %v4613 = vpop.permute.xlu0 %4612
    %4614 = vset.pattern.permute.xlu0 0
    %4615 = vperm.xlu0 %4614, %v4497
    %v4616 = vpop.permute.xlu0 %4615
    %4617 = vset.pattern.permute.xlu0 0
    %4618 = vperm.xlu0 %4617, %v4499
    %v4619 = vpop.permute.xlu0 %4618
    %4620 = vset.pattern.permute.xlu0 0
    %4621 = vperm.xlu0 %4620, %v4501
    %v4622 = vpop.permute.xlu0 %4621
    %4623 = vset.pattern.permute.xlu0 0
    %4624 = vperm.xlu0 %4623, %v4503
    %v4625 = vpop.permute.xlu0 %4624
    %4626 = vset.pattern.permute.xlu0 0
    %4627 = vperm.xlu0 %4626, %v4505
    %v4628 = vpop.permute.xlu0 %4627
    %4629 = vset.pattern.permute.xlu0 0
    %4630 = vperm.xlu0 %4629, %v4507
    %v4631 = vpop.permute.xlu0 %4630
    %4632 = vset.pattern.permute.xlu0 0
    %4633 = vperm.xlu0 %4632, %v4509
    %v4634 = vpop.permute.xlu0 %4633
    %4635 = vset.pattern.permute.xlu0 0
    %4636 = vperm.xlu0 %4635, %v4511
    %v4637 = vpop.permute.xlu0 %4636
    %4638 = vset.pattern.permute.xlu0 0
    %4639 = vperm.xlu0 %4638, %v4513
    %v4640 = vpop.permute.xlu0 %4639
    %4641 = vset.pattern.permute.xlu0 0
    %4642 = vperm.xlu0 %4641, %v4515
    %v4643 = vpop.permute.xlu0 %4642
    %v4644 = vperm.slane %v4550, %v945
    %v4645 = vperm.slane %v4553, %v947
    %v4646 = vsel %vm949, %v4645, %v4644
    %v4647 = vperm.slane %v4556, %v945
    %v4648 = vperm.slane %v4559, %v947
    %v4649 = vsel %vm949, %v4648, %v4647
    %v4650 = vperm.slane %v4562, %v945
    %v4651 = vperm.slane %v4565, %v947
    %v4652 = vsel %vm949, %v4651, %v4650
    %v4653 = vperm.slane %v4568, %v945
    %v4654 = vperm.slane %v4571, %v947
    %v4655 = vsel %vm949, %v4654, %v4653
    %v4656 = vperm.slane %v4574, %v945
    %v4657 = vperm.slane %v4577, %v947
    %v4658 = vsel %vm949, %v4657, %v4656
    %v4659 = vperm.slane %v4580, %v945
    %v4660 = vperm.slane %v4583, %v947
    %v4661 = vsel %vm949, %v4660, %v4659
    %v4662 = vperm.slane %v4586, %v945
    %v4663 = vperm.slane %v4589, %v947
    %v4664 = vsel %vm949, %v4663, %v4662
    %v4665 = vperm.slane %v4592, %v945
    %v4666 = vperm.slane %v4595, %v947
    %v4667 = vsel %vm949, %v4666, %v4665
    %v4668 = vperm.slane %v4598, %v945
    %v4669 = vperm.slane %v4601, %v947
    %v4670 = vsel %vm949, %v4669, %v4668
    %v4671 = vperm.slane %v4604, %v945
    %v4672 = vperm.slane %v4607, %v947
    %v4673 = vsel %vm949, %v4672, %v4671
    %v4674 = vperm.slane %v4610, %v945
    %v4675 = vperm.slane %v4613, %v947
    %v4676 = vsel %vm949, %v4675, %v4674
    %v4677 = vperm.slane %v4616, %v945
    %v4678 = vperm.slane %v4619, %v947
    %v4679 = vsel %vm949, %v4678, %v4677
    %v4680 = vperm.slane %v4622, %v945
    %v4681 = vperm.slane %v4625, %v947
    %v4682 = vsel %vm949, %v4681, %v4680
    %v4683 = vperm.slane %v4628, %v945
    %v4684 = vperm.slane %v4631, %v947
    %v4685 = vsel %vm949, %v4684, %v4683
    %v4686 = vperm.slane %v4634, %v945
    %v4687 = vperm.slane %v4637, %v947
    %v4688 = vsel %vm949, %v4687, %v4686
    %v4689 = vperm.slane %v4640, %v945
    %v4690 = vperm.slane %v4643, %v947
    %v4691 = vsel %vm949, %v4690, %v4689
    %v4692 = vsel %vm996, %v4649, %v4646
    %v4693 = vsel %vm998, %v4652, %v4692
    %v4694 = vsel %vm1000, %v4655, %v4693
    %v4695 = vsel %vm1002, %v4658, %v4694
    %v4696 = vsel %vm1004, %v4661, %v4695
    %v4697 = vsel %vm1006, %v4664, %v4696
    %v4698 = vsel %vm1008, %v4667, %v4697
    %v4699 = vsel %vm996, %v4673, %v4670
    %v4700 = vsel %vm998, %v4676, %v4699
    %v4701 = vsel %vm1000, %v4679, %v4700
    %v4702 = vsel %vm1002, %v4682, %v4701
    %v4703 = vsel %vm1004, %v4685, %v4702
    %v4704 = vsel %vm1006, %v4688, %v4703
    %v4705 = vsel %vm1008, %v4691, %v4704
    %v4708 = vsel %vm445, %v4698, 0.0
    %4709 = vadd.xlane.f32.xlu0 %v4708
    %v4710 = vpop.xlane.xlu0 %4709
    %v4711 = vsel %vm445, %v4705, 0.0
    %4712 = vadd.xlane.f32.xlu0 %v4711
    %v4713 = vpop.xlane.xlu0 %4712
    %v4714 = vrcp.pop %v4710
    %v4715 = vrcp.pop %v4713
    %v4718 = vperm.slane %v4714, 0
    %v4719 = vperm.slane %v4714, 1
    %v4720 = vperm.slane %v4714, 2
    %v4721 = vperm.slane %v4714, 3
    %v4722 = vperm.slane %v4714, 4
    %v4723 = vperm.slane %v4714, 5
    %v4724 = vperm.slane %v4714, 6
    %v4725 = vperm.slane %v4714, 7
    %v4726 = vperm.slane %v4715, 0
    %v4727 = vperm.slane %v4715, 1
    %v4728 = vperm.slane %v4715, 2
    %v4729 = vperm.slane %v4715, 3
    %v4730 = vperm.slane %v4715, 4
    %v4731 = vperm.slane %v4715, 5
    %v4732 = vperm.slane %v4715, 6
    %v4733 = vperm.slane %v4715, 7
    %v4750 = vmul.f32 %v4453, %v4718
    %v4751 = vmul.f32 %v4455, %v4718
    %v4752 = vmul.f32 %v4457, %v4719
    %v4753 = vmul.f32 %v4459, %v4719
    %v4754 = vmul.f32 %v4461, %v4720
    %v4755 = vmul.f32 %v4463, %v4720
    %v4756 = vmul.f32 %v4465, %v4721
    %v4757 = vmul.f32 %v4467, %v4721
    %v4758 = vmul.f32 %v4469, %v4722
    %v4759 = vmul.f32 %v4471, %v4722
    %v4760 = vmul.f32 %v4473, %v4723
    %v4761 = vmul.f32 %v4475, %v4723
    %v4762 = vmul.f32 %v4477, %v4724
    %v4763 = vmul.f32 %v4479, %v4724
    %v4764 = vmul.f32 %v4481, %v4725
    %v4765 = vmul.f32 %v4483, %v4725
    %v4766 = vmul.f32 %v4485, %v4726
    %v4767 = vmul.f32 %v4487, %v4726
    %v4768 = vmul.f32 %v4489, %v4727
    %v4769 = vmul.f32 %v4491, %v4727
    %v4770 = vmul.f32 %v4493, %v4728
    %v4771 = vmul.f32 %v4495, %v4728
    %v4772 = vmul.f32 %v4497, %v4729
    %v4773 = vmul.f32 %v4499, %v4729
    %v4774 = vmul.f32 %v4501, %v4730
    %v4775 = vmul.f32 %v4503, %v4730
    %v4776 = vmul.f32 %v4505, %v4731
    %v4777 = vmul.f32 %v4507, %v4731
    %v4778 = vmul.f32 %v4509, %v4732
    %v4779 = vmul.f32 %v4511, %v4732
    %v4780 = vmul.f32 %v4513, %v4733
    %v4781 = vmul.f32 %v4515, %v4733
    %4814 = vset.pattern.permute.xlu0 0
    %4815 = vperm.xlu0 %4814, %v4750
    %v4816 = vpop.permute.xlu0 %4815
    %4817 = vset.pattern.permute.xlu0 0
    %4818 = vperm.xlu0 %4817, %v4751
    %v4819 = vpop.permute.xlu0 %4818
    %4820 = vset.pattern.permute.xlu0 0
    %4821 = vperm.xlu0 %4820, %v4752
    %v4822 = vpop.permute.xlu0 %4821
    %4823 = vset.pattern.permute.xlu0 0
    %4824 = vperm.xlu0 %4823, %v4753
    %v4825 = vpop.permute.xlu0 %4824
    %4826 = vset.pattern.permute.xlu0 0
    %4827 = vperm.xlu0 %4826, %v4754
    %v4828 = vpop.permute.xlu0 %4827
    %4829 = vset.pattern.permute.xlu0 0
    %4830 = vperm.xlu0 %4829, %v4755
    %v4831 = vpop.permute.xlu0 %4830
    %4832 = vset.pattern.permute.xlu0 0
    %4833 = vperm.xlu0 %4832, %v4756
    %v4834 = vpop.permute.xlu0 %4833
    %4835 = vset.pattern.permute.xlu0 0
    %4836 = vperm.xlu0 %4835, %v4757
    %v4837 = vpop.permute.xlu0 %4836
    %4838 = vset.pattern.permute.xlu0 0
    %4839 = vperm.xlu0 %4838, %v4758
    %v4840 = vpop.permute.xlu0 %4839
    %4841 = vset.pattern.permute.xlu0 0
    %4842 = vperm.xlu0 %4841, %v4759
    %v4843 = vpop.permute.xlu0 %4842
    %4844 = vset.pattern.permute.xlu0 0
    %4845 = vperm.xlu0 %4844, %v4760
    %v4846 = vpop.permute.xlu0 %4845
    %4847 = vset.pattern.permute.xlu0 0
    %4848 = vperm.xlu0 %4847, %v4761
    %v4849 = vpop.permute.xlu0 %4848
    %4850 = vset.pattern.permute.xlu0 0
    %4851 = vperm.xlu0 %4850, %v4762
    %v4852 = vpop.permute.xlu0 %4851
    %4853 = vset.pattern.permute.xlu0 0
    %4854 = vperm.xlu0 %4853, %v4763
    %v4855 = vpop.permute.xlu0 %4854
    %4856 = vset.pattern.permute.xlu0 0
    %4857 = vperm.xlu0 %4856, %v4764
    %v4858 = vpop.permute.xlu0 %4857
    %4859 = vset.pattern.permute.xlu0 0
    %4860 = vperm.xlu0 %4859, %v4765
    %v4861 = vpop.permute.xlu0 %4860
    %4862 = vset.pattern.permute.xlu0 0
    %4863 = vperm.xlu0 %4862, %v4766
    %v4864 = vpop.permute.xlu0 %4863
    %4865 = vset.pattern.permute.xlu0 0
    %4866 = vperm.xlu0 %4865, %v4767
    %v4867 = vpop.permute.xlu0 %4866
    %4868 = vset.pattern.permute.xlu0 0
    %4869 = vperm.xlu0 %4868, %v4768
    %v4870 = vpop.permute.xlu0 %4869
    %4871 = vset.pattern.permute.xlu0 0
    %4872 = vperm.xlu0 %4871, %v4769
    %v4873 = vpop.permute.xlu0 %4872
    %4874 = vset.pattern.permute.xlu0 0
    %4875 = vperm.xlu0 %4874, %v4770
    %v4876 = vpop.permute.xlu0 %4875
    %4877 = vset.pattern.permute.xlu0 0
    %4878 = vperm.xlu0 %4877, %v4771
    %v4879 = vpop.permute.xlu0 %4878
    %4880 = vset.pattern.permute.xlu0 0
    %4881 = vperm.xlu0 %4880, %v4772
    %v4882 = vpop.permute.xlu0 %4881
    %4883 = vset.pattern.permute.xlu0 0
    %4884 = vperm.xlu0 %4883, %v4773
    %v4885 = vpop.permute.xlu0 %4884
    %4886 = vset.pattern.permute.xlu0 0
    %4887 = vperm.xlu0 %4886, %v4774
    %v4888 = vpop.permute.xlu0 %4887
    %4889 = vset.pattern.permute.xlu0 0
    %4890 = vperm.xlu0 %4889, %v4775
    %v4891 = vpop.permute.xlu0 %4890
    %4892 = vset.pattern.permute.xlu0 0
    %4893 = vperm.xlu0 %4892, %v4776
    %v4894 = vpop.permute.xlu0 %4893
    %4895 = vset.pattern.permute.xlu0 0
    %4896 = vperm.xlu0 %4895, %v4777
    %v4897 = vpop.permute.xlu0 %4896
    %4898 = vset.pattern.permute.xlu0 0
    %4899 = vperm.xlu0 %4898, %v4778
    %v4900 = vpop.permute.xlu0 %4899
    %4901 = vset.pattern.permute.xlu0 0
    %4902 = vperm.xlu0 %4901, %v4779
    %v4903 = vpop.permute.xlu0 %4902
    %4904 = vset.pattern.permute.xlu0 0
    %4905 = vperm.xlu0 %4904, %v4780
    %v4906 = vpop.permute.xlu0 %4905
    %4907 = vset.pattern.permute.xlu0 0
    %4908 = vperm.xlu0 %4907, %v4781
    %v4909 = vpop.permute.xlu0 %4908
    %v4910 = vperm.slane %v4816, %v945
    %v4911 = vperm.slane %v4819, %v947
    %v4912 = vsel %vm949, %v4911, %v4910
    %v4913 = vperm.slane %v4822, %v945
    %v4914 = vperm.slane %v4825, %v947
    %v4915 = vsel %vm949, %v4914, %v4913
    %v4916 = vperm.slane %v4828, %v945
    %v4917 = vperm.slane %v4831, %v947
    %v4918 = vsel %vm949, %v4917, %v4916
    %v4919 = vperm.slane %v4834, %v945
    %v4920 = vperm.slane %v4837, %v947
    %v4921 = vsel %vm949, %v4920, %v4919
    %v4922 = vperm.slane %v4840, %v945
    %v4923 = vperm.slane %v4843, %v947
    %v4924 = vsel %vm949, %v4923, %v4922
    %v4925 = vperm.slane %v4846, %v945
    %v4926 = vperm.slane %v4849, %v947
    %v4927 = vsel %vm949, %v4926, %v4925
    %v4928 = vperm.slane %v4852, %v945
    %v4929 = vperm.slane %v4855, %v947
    %v4930 = vsel %vm949, %v4929, %v4928
    %v4931 = vperm.slane %v4858, %v945
    %v4932 = vperm.slane %v4861, %v947
    %v4933 = vsel %vm949, %v4932, %v4931
    %v4934 = vperm.slane %v4864, %v945
    %v4935 = vperm.slane %v4867, %v947
    %v4936 = vsel %vm949, %v4935, %v4934
    %v4937 = vperm.slane %v4870, %v945
    %v4938 = vperm.slane %v4873, %v947
    %v4939 = vsel %vm949, %v4938, %v4937
    %v4940 = vperm.slane %v4876, %v945
    %v4941 = vperm.slane %v4879, %v947
    %v4942 = vsel %vm949, %v4941, %v4940
    %v4943 = vperm.slane %v4882, %v945
    %v4944 = vperm.slane %v4885, %v947
    %v4945 = vsel %vm949, %v4944, %v4943
    %v4946 = vperm.slane %v4888, %v945
    %v4947 = vperm.slane %v4891, %v947
    %v4948 = vsel %vm949, %v4947, %v4946
    %v4949 = vperm.slane %v4894, %v945
    %v4950 = vperm.slane %v4897, %v947
    %v4951 = vsel %vm949, %v4950, %v4949
    %v4952 = vperm.slane %v4900, %v945
    %v4953 = vperm.slane %v4903, %v947
    %v4954 = vsel %vm949, %v4953, %v4952
    %v4955 = vperm.slane %v4906, %v945
    %v4956 = vperm.slane %v4909, %v947
    %v4957 = vsel %vm949, %v4956, %v4955
    %v4958 = vsel %vm996, %v4915, %v4912
    %v4959 = vsel %vm998, %v4918, %v4958
    %v4960 = vsel %vm1000, %v4921, %v4959
    %v4961 = vsel %vm1002, %v4924, %v4960
    %v4962 = vsel %vm1004, %v4927, %v4961
    %v4963 = vsel %vm1006, %v4930, %v4962
    %v4964 = vsel %vm1008, %v4933, %v4963
    %v4965 = vsel %vm996, %v4939, %v4936
    %v4966 = vsel %vm998, %v4942, %v4965
    %v4967 = vsel %vm1000, %v4945, %v4966
    %v4968 = vsel %vm1002, %v4948, %v4967
    %v4969 = vsel %vm1004, %v4951, %v4968
    %v4970 = vsel %vm1006, %v4954, %v4969
    %v4971 = vsel %vm1008, %v4957, %v4970
    %4972 = vrot.lane.b32.xlu0 %v2823, 112
    %v4973 = vpop.permute.xlu0 %4972
    %4974 = vrot.lane.b32.xlu0 %v2824, 112
    %v4975 = vpop.permute.xlu0 %4974
    %v4978 = vsel %vm445, %v4964, 0
    %v4980 = vsel %vm445, %v4971, 0
    %4982 = vmatpush.msra.mxu0 0.0
    %4983 = vmatpush.msra.mxu0 0.0
    %4984 = vmatpush.msra.mxu0 0.0
    %4985 = vmatpush.msra.mxu0 0.0
    %4986 = vmatpush.msra.mxu0 0.0
    %4987 = vmatpush.msra.mxu0 0.0
    %4988 = vmatpush.msra.mxu0 0.0
    %4989 = vmatpush.msra.mxu0 0.0
    %4990 = vmatpush.msra.mxu0 0.0
    %4991 = vmatpush.msra.mxu0 0.0
    %4992 = vmatpush.msra.mxu0 0.0
    %4993 = vmatpush.msra.mxu0 0.0
    %4994 = vmatpush.msra.mxu0 0.0
    %4995 = vmatpush.msra.mxu0 0.0
    %4996 = vmatpush.msra.mxu0 %v4975
    %4997 = vmatpush.msra.mxu0 %v4973
    %4998 = vmatmul.f32.gmra.mxu0 %v4978
    %v4999 = vpop.f32.mrf.mxu0
    %v5000 = vadd.f32 0.0, %v4999
    %5001 = vmatmul.f32.gmra.mxu0 %v4980
    %v5002 = vpop.f32.mrf.mxu0
    %v5003 = vadd.f32 0.0, %v5002
    %5004 = vdwg.mxu0
    %5037 = vset.pattern.permute.xlu0 0
    %5038 = vperm.xlu0 %5037, %v3863
    %v5039 = vpop.permute.xlu0 %5038
    %5040 = vset.pattern.permute.xlu0 0
    %5041 = vperm.xlu0 %5040, %v3864
    %v5042 = vpop.permute.xlu0 %5041
    %5043 = vset.pattern.permute.xlu0 0
    %5044 = vperm.xlu0 %5043, %v3865
    %v5045 = vpop.permute.xlu0 %5044
    %5046 = vset.pattern.permute.xlu0 0
    %5047 = vperm.xlu0 %5046, %v3866
    %v5048 = vpop.permute.xlu0 %5047
    %5049 = vset.pattern.permute.xlu0 0
    %5050 = vperm.xlu0 %5049, %v3867
    %v5051 = vpop.permute.xlu0 %5050
    %5052 = vset.pattern.permute.xlu0 0
    %5053 = vperm.xlu0 %5052, %v3868
    %v5054 = vpop.permute.xlu0 %5053
    %5055 = vset.pattern.permute.xlu0 0
    %5056 = vperm.xlu0 %5055, %v3869
    %v5057 = vpop.permute.xlu0 %5056
    %5058 = vset.pattern.permute.xlu0 0
    %5059 = vperm.xlu0 %5058, %v3870
    %v5060 = vpop.permute.xlu0 %5059
    %5061 = vset.pattern.permute.xlu0 0
    %5062 = vperm.xlu0 %5061, %v3871
    %v5063 = vpop.permute.xlu0 %5062
    %5064 = vset.pattern.permute.xlu0 0
    %5065 = vperm.xlu0 %5064, %v3872
    %v5066 = vpop.permute.xlu0 %5065
    %5067 = vset.pattern.permute.xlu0 0
    %5068 = vperm.xlu0 %5067, %v3873
    %v5069 = vpop.permute.xlu0 %5068
    %5070 = vset.pattern.permute.xlu0 0
    %5071 = vperm.xlu0 %5070, %v3874
    %v5072 = vpop.permute.xlu0 %5071
    %5073 = vset.pattern.permute.xlu0 0
    %5074 = vperm.xlu0 %5073, %v3875
    %v5075 = vpop.permute.xlu0 %5074
    %5076 = vset.pattern.permute.xlu0 0
    %5077 = vperm.xlu0 %5076, %v3876
    %v5078 = vpop.permute.xlu0 %5077
    %5079 = vset.pattern.permute.xlu0 0
    %5080 = vperm.xlu0 %5079, %v3877
    %v5081 = vpop.permute.xlu0 %5080
    %5082 = vset.pattern.permute.xlu0 0
    %5083 = vperm.xlu0 %5082, %v3878
    %v5084 = vpop.permute.xlu0 %5083
    %5085 = vset.pattern.permute.xlu0 0
    %5086 = vperm.xlu0 %5085, %v3879
    %v5087 = vpop.permute.xlu0 %5086
    %5088 = vset.pattern.permute.xlu0 0
    %5089 = vperm.xlu0 %5088, %v3880
    %v5090 = vpop.permute.xlu0 %5089
    %5091 = vset.pattern.permute.xlu0 0
    %5092 = vperm.xlu0 %5091, %v3881
    %v5093 = vpop.permute.xlu0 %5092
    %5094 = vset.pattern.permute.xlu0 0
    %5095 = vperm.xlu0 %5094, %v3882
    %v5096 = vpop.permute.xlu0 %5095
    %5097 = vset.pattern.permute.xlu0 0
    %5098 = vperm.xlu0 %5097, %v3883
    %v5099 = vpop.permute.xlu0 %5098
    %5100 = vset.pattern.permute.xlu0 0
    %5101 = vperm.xlu0 %5100, %v3884
    %v5102 = vpop.permute.xlu0 %5101
    %5103 = vset.pattern.permute.xlu0 0
    %5104 = vperm.xlu0 %5103, %v3885
    %v5105 = vpop.permute.xlu0 %5104
    %5106 = vset.pattern.permute.xlu0 0
    %5107 = vperm.xlu0 %5106, %v3886
    %v5108 = vpop.permute.xlu0 %5107
    %5109 = vset.pattern.permute.xlu0 0
    %5110 = vperm.xlu0 %5109, %v3887
    %v5111 = vpop.permute.xlu0 %5110
    %5112 = vset.pattern.permute.xlu0 0
    %5113 = vperm.xlu0 %5112, %v3888
    %v5114 = vpop.permute.xlu0 %5113
    %5115 = vset.pattern.permute.xlu0 0
    %5116 = vperm.xlu0 %5115, %v3889
    %v5117 = vpop.permute.xlu0 %5116
    %5118 = vset.pattern.permute.xlu0 0
    %5119 = vperm.xlu0 %5118, %v3890
    %v5120 = vpop.permute.xlu0 %5119
    %5121 = vset.pattern.permute.xlu0 0
    %5122 = vperm.xlu0 %5121, %v3891
    %v5123 = vpop.permute.xlu0 %5122
    %5124 = vset.pattern.permute.xlu0 0
    %5125 = vperm.xlu0 %5124, %v3892
    %v5126 = vpop.permute.xlu0 %5125
    %5127 = vset.pattern.permute.xlu0 0
    %5128 = vperm.xlu0 %5127, %v3893
    %v5129 = vpop.permute.xlu0 %5128
    %5130 = vset.pattern.permute.xlu0 0
    %5131 = vperm.xlu0 %5130, %v3894
    %v5132 = vpop.permute.xlu0 %5131
    %v5133 = vperm.slane %v5039, %v945
    %v5134 = vperm.slane %v5042, %v947
    %v5135 = vsel %vm949, %v5134, %v5133
    %v5136 = vperm.slane %v5045, %v945
    %v5137 = vperm.slane %v5048, %v947
    %v5138 = vsel %vm949, %v5137, %v5136
    %v5139 = vperm.slane %v5051, %v945
    %v5140 = vperm.slane %v5054, %v947
    %v5141 = vsel %vm949, %v5140, %v5139
    %v5142 = vperm.slane %v5057, %v945
    %v5143 = vperm.slane %v5060, %v947
    %v5144 = vsel %vm949, %v5143, %v5142
    %v5145 = vperm.slane %v5063, %v945
    %v5146 = vperm.slane %v5066, %v947
    %v5147 = vsel %vm949, %v5146, %v5145
    %v5148 = vperm.slane %v5069, %v945
    %v5149 = vperm.slane %v5072, %v947
    %v5150 = vsel %vm949, %v5149, %v5148
    %v5151 = vperm.slane %v5075, %v945
    %v5152 = vperm.slane %v5078, %v947
    %v5153 = vsel %vm949, %v5152, %v5151
    %v5154 = vperm.slane %v5081, %v945
    %v5155 = vperm.slane %v5084, %v947
    %v5156 = vsel %vm949, %v5155, %v5154
    %v5157 = vperm.slane %v5087, %v945
    %v5158 = vperm.slane %v5090, %v947
    %v5159 = vsel %vm949, %v5158, %v5157
    %v5160 = vperm.slane %v5093, %v945
    %v5161 = vperm.slane %v5096, %v947
    %v5162 = vsel %vm949, %v5161, %v5160
    %v5163 = vperm.slane %v5099, %v945
    %v5164 = vperm.slane %v5102, %v947
    %v5165 = vsel %vm949, %v5164, %v5163
    %v5166 = vperm.slane %v5105, %v945
    %v5167 = vperm.slane %v5108, %v947
    %v5168 = vsel %vm949, %v5167, %v5166
    %v5169 = vperm.slane %v5111, %v945
    %v5170 = vperm.slane %v5114, %v947
    %v5171 = vsel %vm949, %v5170, %v5169
    %v5172 = vperm.slane %v5117, %v945
    %v5173 = vperm.slane %v5120, %v947
    %v5174 = vsel %vm949, %v5173, %v5172
    %v5175 = vperm.slane %v5123, %v945
    %v5176 = vperm.slane %v5126, %v947
    %v5177 = vsel %vm949, %v5176, %v5175
    %v5178 = vperm.slane %v5129, %v945
    %v5179 = vperm.slane %v5132, %v947
    %v5180 = vsel %vm949, %v5179, %v5178
    %v5181 = vsel %vm996, %v5138, %v5135
    %v5182 = vsel %vm998, %v5141, %v5181
    %v5183 = vsel %vm1000, %v5144, %v5182
    %v5184 = vsel %vm1002, %v5147, %v5183
    %v5185 = vsel %vm1004, %v5150, %v5184
    %v5186 = vsel %vm1006, %v5153, %v5185
    %v5187 = vsel %vm1008, %v5156, %v5186
    %v5188 = vsel %vm996, %v5162, %v5159
    %v5189 = vsel %vm998, %v5165, %v5188
    %v5190 = vsel %vm1000, %v5168, %v5189
    %v5191 = vsel %vm1002, %v5171, %v5190
    %v5192 = vsel %vm1004, %v5174, %v5191
    %v5193 = vsel %vm1006, %v5177, %v5192
    %v5194 = vsel %vm1008, %v5180, %v5193
    %v5195 = vsel %vm445, %v5187, 0
    %v5197 = vsel %vm445, %v5194, 0
    %5199 = vmatpush.msra.mxu0 0.0
    %5200 = vmatpush.msra.mxu0 0.0
    %5201 = vmatpush.msra.mxu0 0.0
    %5202 = vmatpush.msra.mxu0 0.0
    %5203 = vmatpush.msra.mxu0 0.0
    %5204 = vmatpush.msra.mxu0 0.0
    %5205 = vmatpush.msra.mxu0 0.0
    %5206 = vmatpush.msra.mxu0 0.0
    %5207 = vmatpush.msra.mxu0 0.0
    %5208 = vmatpush.msra.mxu0 0.0
    %5209 = vmatpush.msra.mxu0 0.0
    %5210 = vmatpush.msra.mxu0 0.0
    %5211 = vmatpush.msra.mxu0 0.0
    %5212 = vmatpush.msra.mxu0 0.0
    %5213 = vmatpush.msra.mxu0 %v2824
    %5214 = vmatpush.msra.mxu0 %v2823
    %5215 = vmatmul.f32.gmra.mxu0 %v5195
    %v5216 = vpop.f32.mrf.mxu0
    %v5217 = vadd.f32 %v5000, %v5216
    %5218 = vmatmul.f32.gmra.mxu0 %v5197
    %v5219 = vpop.f32.mrf.mxu0
    %v5220 = vadd.f32 %v5003, %v5219
    %5221 = vdwg.mxu0
    %v5222 = vmul.f32 %v5217, 0.5
    %v5223 = vmul.f32 %v5220, 0.5
    %v5224 = vld [vmem:[%s10] sm:$0x1]
    %v5226 = vperm.slane %v5224, 0
    %v5228 = vadd.f32 %v5222, %v5226
    %v5229 = vadd.f32 %v5223, %v5226
    %v5230 = vsel %vm67, %v58, 0.0
    %v5231 = vsel %vm67, %v59, 0.0
    %v5232 = vadd.f32 %v5230, %v5231
    %v5233 = vrot.slane %v5232, 4
    %v5234 = vadd.f32 %v5232, %v5233
    %v5235 = vrot.slane %v5234, 2
    %v5236 = vadd.f32 %v5234, %v5235
    %v5237 = vrot.slane %v5236, 1
    %v5238 = vadd.f32 %v5236, %v5237
    %v5239 = vmul.f32 %v5238, 0.0625
    %v5240 = vmul.f32 %v58, %v58
    %v5241 = vmul.f32 %v59, %v59
    %v5242 = vsel %vm67, %v5240, 0.0
    %v5243 = vsel %vm67, %v5241, 0.0
    %v5244 = vadd.f32 %v5242, %v5243
    %v5245 = vrot.slane %v5244, 4
    %v5246 = vadd.f32 %v5244, %v5245
    %v5247 = vrot.slane %v5246, 2
    %v5248 = vadd.f32 %v5246, %v5247
    %v5249 = vrot.slane %v5248, 1
    %v5250 = vadd.f32 %v5248, %v5249
    %v5251 = vmul.f32 %v5250, 0.0625
    %v5252 = vmul.f32 %v5239, %v5239
    %v5253 = vsub.f32 %v5251, %v5252
    %v5254 = vmax.f32 %v5253, 1e-05
    %v5255 = vrsqrt.pop %v5254
    %v5256 = vmul.f32 %v5255, %v5254
    %v5257 = vmul.f32 %v5256, %v5255
    %v5258 = vmul.f32 0.5, %v5257
    %v5259 = vsub.f32 1.5, %v5258
    %v5260 = vmul.f32 %v5255, %v5259
    %v5261 = vmul.f32 %v5254, %v5260
    %vm5262 = vcmp.eq.f32.partialorder %v5254, inf
    %v5263 = vsel %vm5262, %v5254, %v5261
    %vm5264 = vcmp.eq.f32.partialorder %v5254, 0.0
    %v5265 = vand.u32 %v5254, 2147483648
    %v5266 = vsel %vm5264, %v5265, %v5263
    %vm5267 = vcmp.le.f32.partialorder %v5266, 0.0031622776
    %v5268 = vsel %vm5267, 0.0, %v5266
    %v5269 = vsel %vm67, %v58, inf
    %v5270 = vsel %vm67, %v59, inf
    %v5271 = vmin.f32 %v5269, %v5270
    %v5272 = vrot.slane %v5271, 4
    %v5273 = vmin.f32 %v5271, %v5272
    %v5274 = vrot.slane %v5273, 2
    %v5275 = vmin.f32 %v5273, %v5274
    %v5276 = vrot.slane %v5275, 1
    %v5277 = vmin.f32 %v5275, %v5276
    %v5278 = vsel %vm67, %v58, -inf
    %v5279 = vsel %vm67, %v59, -inf
    %v5280 = vmax.f32 %v5278, %v5279
    %v5281 = vrot.slane %v5280, 4
    %v5282 = vmax.f32 %v5280, %v5281
    %v5283 = vrot.slane %v5282, 2
    %v5284 = vmax.f32 %v5282, %v5283
    %v5285 = vrot.slane %v5284, 1
    %v5286 = vmax.f32 %v5284, %v5285
    %vm5287 = vcmp.ne.f32.partialorder %v5238, %v5238
    %v5288 = vsel %vm5287, 1.0, %v5238
    %v5289 = vand.u32 2147483647, %v5288
    %vm5290 = vcmp.eq.f32.partialorder %v5289, inf
    %v5291 = vsel %vm5290, 1.0, %v5288
    %vm5292 = vcmp.ne.f32.partialorder %v5239, %v5239
    %v5293 = vsel %vm5292, 1.0, %v5239
    %v5294 = vand.u32 2147483647, %v5293
    %vm5295 = vcmp.eq.f32.partialorder %v5294, inf
    %v5296 = vsel %vm5295, 1.0, %v5293
    %vm5297 = vcmp.ne.f32.partialorder %v5268, %v5268
    %v5298 = vsel %vm5297, 1.0, %v5268
    %v5299 = vand.u32 2147483647, %v5298
    %vm5300 = vcmp.eq.f32.partialorder %v5299, inf
    %v5301 = vsel %vm5300, 1.0, %v5298
    %vm5302 = vcmp.ne.f32.partialorder %v5277, %v5277
    %v5303 = vsel %vm5302, 1.0, %v5277
    %v5304 = vand.u32 2147483647, %v5303
    %vm5305 = vcmp.eq.f32.partialorder %v5304, inf
    %v5306 = vsel %vm5305, 1.0, %v5303
    %vm5307 = vcmp.ne.f32.partialorder %v5286, %v5286
    %v5308 = vsel %vm5307, 1.0, %v5286
    %v5309 = vand.u32 2147483647, %v5308
    %vm5310 = vcmp.eq.f32.partialorder %v5309, inf
    %v5311 = vsel %vm5310, 1.0, %v5308
    %v5312 = vsel %vm445, %v5228, 0.0
    %v5313 = vsel %vm445, %v5229, 0.0
    %v5314 = vadd.f32 %v5312, %v5313
    %v5315 = vrot.slane %v5314, 4
    %v5316 = vadd.f32 %v5314, %v5315
    %v5317 = vrot.slane %v5316, 2
    %v5318 = vadd.f32 %v5316, %v5317
    %v5319 = vrot.slane %v5318, 1
    %v5320 = vadd.f32 %v5318, %v5319
    %v5321 = vmul.f32 %v5320, 0.0625
    %v5322 = vmul.f32 %v5228, %v5228
    %v5323 = vmul.f32 %v5229, %v5229
    %v5324 = vsel %vm445, %v5322, 0.0
    %v5325 = vsel %vm445, %v5323, 0.0
    %v5326 = vadd.f32 %v5324, %v5325
    %v5327 = vrot.slane %v5326, 4
    %v5328 = vadd.f32 %v5326, %v5327
    %v5329 = vrot.slane %v5328, 2
    %v5330 = vadd.f32 %v5328, %v5329
    %v5331 = vrot.slane %v5330, 1
    %v5332 = vadd.f32 %v5330, %v5331
    %v5333 = vmul.f32 %v5332, 0.0625
    %v5334 = vmul.f32 %v5321, %v5321
    %v5335 = vsub.f32 %v5333, %v5334
    %v5336 = vmax.f32 %v5335, 1e-05
    %v5337 = vrsqrt.pop %v5336
    %v5338 = vmul.f32 %v5337, %v5336
    %v5339 = vmul.f32 %v5338, %v5337
    %v5340 = vmul.f32 0.5, %v5339
    %v5341 = vsub.f32 1.5, %v5340
    %v5342 = vmul.f32 %v5337, %v5341
    %v5343 = vmul.f32 %v5336, %v5342
    %vm5344 = vcmp.eq.f32.partialorder %v5336, inf
    %v5345 = vsel %vm5344, %v5336, %v5343
    %vm5346 = vcmp.eq.f32.partialorder %v5336, 0.0
    %v5347 = vand.u32 %v5336, 2147483648
    %v5348 = vsel %vm5346, %v5347, %v5345
    %vm5349 = vcmp.le.f32.partialorder %v5348, 0.0031622776
    %v5350 = vsel %vm5349, 0.0, %v5348
    %v5351 = vsel %vm445, %v5228, inf
    %v5352 = vsel %vm445, %v5229, inf
    %v5353 = vmin.f32 %v5351, %v5352
    %v5354 = vrot.slane %v5353, 4
    %v5355 = vmin.f32 %v5353, %v5354
    %v5356 = vrot.slane %v5355, 2
    %v5357 = vmin.f32 %v5355, %v5356
    %v5358 = vrot.slane %v5357, 1
    %v5359 = vmin.f32 %v5357, %v5358
    %v5360 = vsel %vm445, %v5228, -inf
    %v5361 = vsel %vm445, %v5229, -inf
    %v5362 = vmax.f32 %v5360, %v5361
    %v5363 = vrot.slane %v5362, 4
    %v5364 = vmax.f32 %v5362, %v5363
    %v5365 = vrot.slane %v5364, 2
    %v5366 = vmax.f32 %v5364, %v5365
    %v5367 = vrot.slane %v5366, 1
    %v5368 = vmax.f32 %v5366, %v5367
    %s5369 = sld [smem:[#allocation2]]
    %v5370 = vstv %s5369
    %v5371 = vmul.f32 %v5228, %v5370
    %v5372 = vmul.f32 %v5229, %v5370
    %v5373 = vsel %vm445, %v5371, -inf
    %v5374 = vsel %vm445, %v5372, -inf
    %v5375 = vmax.f32 %v5373, %v5374
    %v5376 = vrot.slane %v5375, 4
    %v5377 = vmax.f32 %v5375, %v5376
    %v5378 = vrot.slane %v5377, 2
    %v5379 = vmax.f32 %v5377, %v5378
    %v5380 = vrot.slane %v5379, 1
    %v5381 = vmax.f32 %v5379, %v5380
    %v5382 = vsub.f32 %v5371, %v5381
    %v5383 = vsub.f32 %v5372, %v5381
    %v5384 = vmul.f32 %v5382, 1.442695
    %v5385 = vpow.pop %v5384
    %v5386 = vmul.f32 %v5383, 1.442695
    %v5387 = vpow.pop %v5386
    %v5388 = vsel %vm445, %v5385, 0.0
    %v5389 = vsel %vm445, %v5387, 0.0
    %v5390 = vadd.f32 %v5388, %v5389
    %v5391 = vrot.slane %v5390, 4
    %v5392 = vadd.f32 %v5390, %v5391
    %v5393 = vrot.slane %v5392, 2
    %v5394 = vadd.f32 %v5392, %v5393
    %v5395 = vrot.slane %v5394, 1
    %v5396 = vadd.f32 %v5394, %v5395
    %v5397 = vrcp.pop %v5396
    %v5398 = vmul.f32 %v5385, %v5397
    %v5399 = vmul.f32 %v5387, %v5397
    %v5400 = vmul.f32 %v5228, %v5398
    %v5401 = vmul.f32 %v5229, %v5399
    %v5402 = vsel %vm445, %v5400, 0.0
    %v5403 = vsel %vm445, %v5401, 0.0
    %v5404 = vadd.f32 %v5402, %v5403
    %v5405 = vrot.slane %v5404, 4
    %v5406 = vadd.f32 %v5404, %v5405
    %v5407 = vrot.slane %v5406, 2
    %v5408 = vadd.f32 %v5406, %v5407
    %v5409 = vrot.slane %v5408, 1
    %v5410 = vadd.f32 %v5408, %v5409
    %v5411 = vld [vmem:[%s11] sm:$0xff]
    %v5412 = vld [vmem:[%s11 + $0x8] sm:$0xff]
    %v5413 = vld [vmem:[%s11 + $0x10] sm:$0xff]
    %v5414 = vld [vmem:[%s11 + $0x18] sm:$0xff]
    %v5415 = vld [vmem:[%s11 + $0x20] sm:$0xff]
    %v5416 = vld [vmem:[%s11 + $0x28] sm:$0xff]
    %v5417 = vld [vmem:[%s11 + $0x30] sm:$0xff]
    %v5418 = vld [vmem:[%s11 + $0x38] sm:$0xff]
    %v5419 = vld [vmem:[%s11 + $0x40] sm:$0xff]
    %v5420 = vld [vmem:[%s11 + $0x48] sm:$0xff]
    %v5421 = vld [vmem:[%s11 + $0x50] sm:$0xff]
    %v5422 = vld [vmem:[%s11 + $0x58] sm:$0xff]
    %v5423 = vld [vmem:[%s11 + $0x60] sm:$0xff]
    %v5424 = vld [vmem:[%s11 + $0x68] sm:$0xff]
    %v5425 = vld [vmem:[%s11 + $0x70] sm:$0xff]
    %v5426 = vld [vmem:[%s11 + $0x78] sm:$0xff]
    %v5427 = vld [vmem:[%s11 + $0x80] sm:$0xff]
    %v5428 = vld [vmem:[%s12] sm:$0x1]
    %v5430 = vsel %vm445, %v5320, 0
    %5432 = vmatpush.msra.mxu0 0.0
    %5433 = vmatpush.msra.mxu0 0.0
    %5434 = vmatpush.msra.mxu0 0.0
    %5435 = vmatpush.msra.mxu0 0.0
    %5436 = vmatpush.msra.mxu0 0.0
    %5437 = vmatpush.msra.mxu0 0.0
    %5438 = vmatpush.msra.mxu0 0.0
    %5439 = vmatpush.msra.mxu0 0.0
    %5440 = vmatpush.msra.mxu0 0.0
    %5441 = vmatpush.msra.mxu0 0.0
    %5442 = vmatpush.msra.mxu0 0.0
    %5443 = vmatpush.msra.mxu0 0.0
    %5444 = vmatpush.msra.mxu0 0.0
    %5445 = vmatpush.msra.mxu0 0.0
    %5446 = vmatpush.msra.mxu0 %v5412
    %5447 = vmatpush.msra.mxu0 %v5411
    %5448 = vmatmul.f32.gmra.mxu0 %v5430
    %v5449 = vpop.f32.mrf.mxu0
    %v5450 = vadd.f32 0.0, %v5449
    %5451 = vdwg.mxu0
    %v5452 = vadd.f32 %v5428, %v5450
    %v5454 = vsel %vm445, %v5321, 0
    %5456 = vmatpush.msra.mxu0 0.0
    %5457 = vmatpush.msra.mxu0 0.0
    %5458 = vmatpush.msra.mxu0 0.0
    %5459 = vmatpush.msra.mxu0 0.0
    %5460 = vmatpush.msra.mxu0 0.0
    %5461 = vmatpush.msra.mxu0 0.0
    %5462 = vmatpush.msra.mxu0 0.0
    %5463 = vmatpush.msra.mxu0 0.0
    %5464 = vmatpush.msra.mxu0 0.0
    %5465 = vmatpush.msra.mxu0 0.0
    %5466 = vmatpush.msra.mxu0 0.0
    %5467 = vmatpush.msra.mxu0 0.0
    %5468 = vmatpush.msra.mxu0 0.0
    %5469 = vmatpush.msra.mxu0 0.0
    %5470 = vmatpush.msra.mxu0 %v5414
    %5471 = vmatpush.msra.mxu0 %v5413
    %5472 = vmatmul.f32.gmra.mxu0 %v5454
    %v5473 = vpop.f32.mrf.mxu0
    %v5474 = vadd.f32 0.0, %v5473
    %5475 = vdwg.mxu0
    %v5476 = vadd.f32 %v5452, %v5474
    %v5478 = vsel %vm445, %v5350, 0
    %5480 = vmatpush.msra.mxu0 0.0
    %5481 = vmatpush.msra.mxu0 0.0
    %5482 = vmatpush.msra.mxu0 0.0
    %5483 = vmatpush.msra.mxu0 0.0
    %5484 = vmatpush.msra.mxu0 0.0
    %5485 = vmatpush.msra.mxu0 0.0
    %5486 = vmatpush.msra.mxu0 0.0
    %5487 = vmatpush.msra.mxu0 0.0
    %5488 = vmatpush.msra.mxu0 0.0
    %5489 = vmatpush.msra.mxu0 0.0
    %5490 = vmatpush.msra.mxu0 0.0
    %5491 = vmatpush.msra.mxu0 0.0
    %5492 = vmatpush.msra.mxu0 0.0
    %5493 = vmatpush.msra.mxu0 0.0
    %5494 = vmatpush.msra.mxu0 %v5416
    %5495 = vmatpush.msra.mxu0 %v5415
    %5496 = vmatmul.f32.gmra.mxu0 %v5478
    %v5497 = vpop.f32.mrf.mxu0
    %v5498 = vadd.f32 0.0, %v5497
    %5499 = vdwg.mxu0
    %v5500 = vadd.f32 %v5476, %v5498
    %v5502 = vsel %vm445, %v5359, 0
    %5504 = vmatpush.msra.mxu0 0.0
    %5505 = vmatpush.msra.mxu0 0.0
    %5506 = vmatpush.msra.mxu0 0.0
    %5507 = vmatpush.msra.mxu0 0.0
    %5508 = vmatpush.msra.mxu0 0.0
    %5509 = vmatpush.msra.mxu0 0.0
    %5510 = vmatpush.msra.mxu0 0.0
    %5511 = vmatpush.msra.mxu0 0.0
    %5512 = vmatpush.msra.mxu0 0.0
    %5513 = vmatpush.msra.mxu0 0.0
    %5514 = vmatpush.msra.mxu0 0.0
    %5515 = vmatpush.msra.mxu0 0.0
    %5516 = vmatpush.msra.mxu0 0.0
    %5517 = vmatpush.msra.mxu0 0.0
    %5518 = vmatpush.msra.mxu0 %v5418
    %5519 = vmatpush.msra.mxu0 %v5417
    %5520 = vmatmul.f32.gmra.mxu0 %v5502
    %v5521 = vpop.f32.mrf.mxu0
    %v5522 = vadd.f32 0.0, %v5521
    %5523 = vdwg.mxu0
    %v5524 = vadd.f32 %v5500, %v5522
    %v5526 = vsel %vm445, %v5368, 0
    %5528 = vmatpush.msra.mxu0 0.0
    %5529 = vmatpush.msra.mxu0 0.0
    %5530 = vmatpush.msra.mxu0 0.0
    %5531 = vmatpush.msra.mxu0 0.0
    %5532 = vmatpush.msra.mxu0 0.0
    %5533 = vmatpush.msra.mxu0 0.0
    %5534 = vmatpush.msra.mxu0 0.0
    %5535 = vmatpush.msra.mxu0 0.0
    %5536 = vmatpush.msra.mxu0 0.0
    %5537 = vmatpush.msra.mxu0 0.0
    %5538 = vmatpush.msra.mxu0 0.0
    %5539 = vmatpush.msra.mxu0 0.0
    %5540 = vmatpush.msra.mxu0 0.0
    %5541 = vmatpush.msra.mxu0 0.0
    %5542 = vmatpush.msra.mxu0 %v5420
    %5543 = vmatpush.msra.mxu0 %v5419
    %5544 = vmatmul.f32.gmra.mxu0 %v5526
    %v5545 = vpop.f32.mrf.mxu0
    %v5546 = vadd.f32 0.0, %v5545
    %5547 = vdwg.mxu0
    %v5548 = vadd.f32 %v5524, %v5546
    %v5550 = vsel %vm445, %v5410, 0
    %5552 = vmatpush.msra.mxu0 0.0
    %5553 = vmatpush.msra.mxu0 0.0
    %5554 = vmatpush.msra.mxu0 0.0
    %5555 = vmatpush.msra.mxu0 0.0
    %5556 = vmatpush.msra.mxu0 0.0
    %5557 = vmatpush.msra.mxu0 0.0
    %5558 = vmatpush.msra.mxu0 0.0
    %5559 = vmatpush.msra.mxu0 0.0
    %5560 = vmatpush.msra.mxu0 0.0
    %5561 = vmatpush.msra.mxu0 0.0
    %5562 = vmatpush.msra.mxu0 0.0
    %5563 = vmatpush.msra.mxu0 0.0
    %5564 = vmatpush.msra.mxu0 0.0
    %5565 = vmatpush.msra.mxu0 0.0
    %5566 = vmatpush.msra.mxu0 %v5422
    %5567 = vmatpush.msra.mxu0 %v5421
    %5568 = vmatmul.f32.gmra.mxu0 %v5550
    %v5569 = vpop.f32.mrf.mxu0
    %v5570 = vadd.f32 0.0, %v5569
    %5571 = vdwg.mxu0
    %v5572 = vadd.f32 %v5548, %v5570
    %v5574 = vsel %vm67, %v5291, 0
    %5576 = vmatpush.msra.mxu0 0.0
    %5577 = vmatpush.msra.mxu0 0.0
    %5578 = vmatpush.msra.mxu0 0.0
    %5579 = vmatpush.msra.mxu0 0.0
    %5580 = vmatpush.msra.mxu0 0.0
    %5581 = vmatpush.msra.mxu0 0.0
    %5582 = vmatpush.msra.mxu0 0.0
    %5583 = vmatpush.msra.mxu0 0.0
    %5584 = vmatpush.msra.mxu0 0.0
    %5585 = vmatpush.msra.mxu0 0.0
    %5586 = vmatpush.msra.mxu0 0.0
    %5587 = vmatpush.msra.mxu0 0.0
    %5588 = vmatpush.msra.mxu0 0.0
    %5589 = vmatpush.msra.mxu0 0.0
    %5590 = vmatpush.msra.mxu0 0.0
    %5591 = vmatpush.msra.mxu0 %v5423
    %5592 = vmatmul.f32.gmra.mxu0 %v5574
    %v5593 = vpop.f32.mrf.mxu0
    %v5594 = vadd.f32 0.0, %v5593
    %5595 = vdwg.mxu0
    %v5596 = vadd.f32 %v5572, %v5594
    %v5598 = vsel %vm67, %v5296, 0
    %5600 = vmatpush.msra.mxu0 0.0
    %5601 = vmatpush.msra.mxu0 0.0
    %5602 = vmatpush.msra.mxu0 0.0
    %5603 = vmatpush.msra.mxu0 0.0
    %5604 = vmatpush.msra.mxu0 0.0
    %5605 = vmatpush.msra.mxu0 0.0
    %5606 = vmatpush.msra.mxu0 0.0
    %5607 = vmatpush.msra.mxu0 0.0
    %5608 = vmatpush.msra.mxu0 0.0
    %5609 = vmatpush.msra.mxu0 0.0
    %5610 = vmatpush.msra.mxu0 0.0
    %5611 = vmatpush.msra.mxu0 0.0
    %5612 = vmatpush.msra.mxu0 0.0
    %5613 = vmatpush.msra.mxu0 0.0
    %5614 = vmatpush.msra.mxu0 0.0
    %5615 = vmatpush.msra.mxu0 %v5424
    %5616 = vmatmul.f32.gmra.mxu0 %v5598
    %v5617 = vpop.f32.mrf.mxu0
    %v5618 = vadd.f32 0.0, %v5617
    %5619 = vdwg.mxu0
    %v5620 = vadd.f32 %v5596, %v5618
    %v5622 = vsel %vm67, %v5301, 0
    %5624 = vmatpush.msra.mxu0 0.0
    %5625 = vmatpush.msra.mxu0 0.0
    %5626 = vmatpush.msra.mxu0 0.0
    %5627 = vmatpush.msra.mxu0 0.0
    %5628 = vmatpush.msra.mxu0 0.0
    %5629 = vmatpush.msra.mxu0 0.0
    %5630 = vmatpush.msra.mxu0 0.0
    %5631 = vmatpush.msra.mxu0 0.0
    %5632 = vmatpush.msra.mxu0 0.0
    %5633 = vmatpush.msra.mxu0 0.0
    %5634 = vmatpush.msra.mxu0 0.0
    %5635 = vmatpush.msra.mxu0 0.0
    %5636 = vmatpush.msra.mxu0 0.0
    %5637 = vmatpush.msra.mxu0 0.0
    %5638 = vmatpush.msra.mxu0 0.0
    %5639 = vmatpush.msra.mxu0 %v5425
    %5640 = vmatmul.f32.gmra.mxu0 %v5622
    %v5641 = vpop.f32.mrf.mxu0
    %v5642 = vadd.f32 0.0, %v5641
    %5643 = vdwg.mxu0
    %v5644 = vadd.f32 %v5620, %v5642
    %v5646 = vsel %vm67, %v5306, 0
    %5648 = vmatpush.msra.mxu0 0.0
    %5649 = vmatpush.msra.mxu0 0.0
    %5650 = vmatpush.msra.mxu0 0.0
    %5651 = vmatpush.msra.mxu0 0.0
    %5652 = vmatpush.msra.mxu0 0.0
    %5653 = vmatpush.msra.mxu0 0.0
    %5654 = vmatpush.msra.mxu0 0.0
    %5655 = vmatpush.msra.mxu0 0.0
    %5656 = vmatpush.msra.mxu0 0.0
    %5657 = vmatpush.msra.mxu0 0.0
    %5658 = vmatpush.msra.mxu0 0.0
    %5659 = vmatpush.msra.mxu0 0.0
    %5660 = vmatpush.msra.mxu0 0.0
    %5661 = vmatpush.msra.mxu0 0.0
    %5662 = vmatpush.msra.mxu0 0.0
    %5663 = vmatpush.msra.mxu0 %v5426
    %5664 = vmatmul.f32.gmra.mxu0 %v5646
    %v5665 = vpop.f32.mrf.mxu0
    %v5666 = vadd.f32 0.0, %v5665
    %5667 = vdwg.mxu0
    %v5668 = vadd.f32 %v5644, %v5666
    %v5670 = vsel %vm67, %v5311, 0
    %5672 = vmatpush.msra.mxu0 0.0
    %5673 = vmatpush.msra.mxu0 0.0
    %5674 = vmatpush.msra.mxu0 0.0
    %5675 = vmatpush.msra.mxu0 0.0
    %5676 = vmatpush.msra.mxu0 0.0
    %5677 = vmatpush.msra.mxu0 0.0
    %5678 = vmatpush.msra.mxu0 0.0
    %5679 = vmatpush.msra.mxu0 0.0
    %5680 = vmatpush.msra.mxu0 0.0
    %5681 = vmatpush.msra.mxu0 0.0
    %5682 = vmatpush.msra.mxu0 0.0
    %5683 = vmatpush.msra.mxu0 0.0
    %5684 = vmatpush.msra.mxu0 0.0
    %5685 = vmatpush.msra.mxu0 0.0
    %5686 = vmatpush.msra.mxu0 0.0
    %5687 = vmatpush.msra.mxu0 %v5427
    %5688 = vmatmul.f32.gmra.mxu0 %v5670
    %v5689 = vpop.f32.mrf.mxu0
    %v5690 = vadd.f32 0.0, %v5689
    %5691 = vdwg.mxu0
    %v5692 = vadd.f32 %v5668, %v5690
    %v5693 = vmax.f32 %v5692, 0.0
    %v5694 = vld [vmem:[%s13] sm:$0xff]
    %v5695 = vld [vmem:[%s13 + $0x8] sm:$0xff]
    %v5696 = vld [vmem:[%s13 + $0x10] sm:$0xff]
    %v5697 = vld [vmem:[%s13 + $0x18] sm:$0xff]
    %v5698 = vld [vmem:[%s14] sm:$0x1]
    %vm5699 = vcmask 261120
    %v5701 = vsel %vm5699, %v5693, 0
    %5703 = vmatpush.msra.mxu0 0.0
    %5704 = vmatpush.msra.mxu0 0.0
    %5705 = vmatpush.msra.mxu0 0.0
    %5706 = vmatpush.msra.mxu0 0.0
    %5707 = vmatpush.msra.mxu0 0.0
    %5708 = vmatpush.msra.mxu0 0.0
    %5709 = vmatpush.msra.mxu0 0.0
    %5710 = vmatpush.msra.mxu0 0.0
    %5711 = vmatpush.msra.mxu0 0.0
    %5712 = vmatpush.msra.mxu0 0.0
    %5713 = vmatpush.msra.mxu0 0.0
    %5714 = vmatpush.msra.mxu0 0.0
    %5715 = vmatpush.msra.mxu0 %v5697
    %5716 = vmatpush.msra.mxu0 %v5696
    %5717 = vmatpush.msra.mxu0 %v5695
    %5718 = vmatpush.msra.mxu0 %v5694
    %5719 = vmatmul.f32.gmra.mxu0 %v5701
    %v5720 = vpop.f32.mrf.mxu0
    %v5721 = vadd.f32 %v5698, %v5720
    %5722 = vdwg.mxu0
    %v5723 = vmax.f32 %v5721, 0.0
    %v5724 = vld [vmem:[%s15] sm:$0xff]
    %v5725 = vld [vmem:[%s15 + $0x8] sm:$0xff]
    %v5726 = vld [vmem:[%s15 + $0x10] sm:$0xff]
    %v5727 = vld [vmem:[%s15 + $0x18] sm:$0xff]
    %v5728 = vld [vmem:[%s16] sm:$0x1]
    %v5730 = vsel %vm5699, %v5723, 0
    %5732 = vmatpush.msra.mxu0 0.0
    %5733 = vmatpush.msra.mxu0 0.0
    %5734 = vmatpush.msra.mxu0 0.0
    %5735 = vmatpush.msra.mxu0 0.0
    %5736 = vmatpush.msra.mxu0 0.0
    %5737 = vmatpush.msra.mxu0 0.0
    %5738 = vmatpush.msra.mxu0 0.0
    %5739 = vmatpush.msra.mxu0 0.0
    %5740 = vmatpush.msra.mxu0 0.0
    %5741 = vmatpush.msra.mxu0 0.0
    %5742 = vmatpush.msra.mxu0 0.0
    %5743 = vmatpush.msra.mxu0 0.0
    %5744 = vmatpush.msra.mxu0 %v5727
    %5745 = vmatpush.msra.mxu0 %v5726
    %5746 = vmatpush.msra.mxu0 %v5725
    %5747 = vmatpush.msra.mxu0 %v5724
    %5748 = vmatmul.f32.gmra.mxu0 %v5730
    %v5749 = vpop.f32.mrf.mxu0
    %v5750 = vadd.f32 %v5728, %v5749
    %5751 = vdwg.mxu0
    %vm5752 = vcmask 24576
    %5753 = vst.msk [vmem:[#allocation3] sm:$0x1] %vm5752, %v5750
    // Predicated region
    $region70: #{gat_network_forward.1} parent=1 // pred_check
      _
    $region71: #{gat_network_forward.1} parent=1 // pred_check_branch
      %5755 = sbr.rel (0) target = $region73
    $region72: #{gat_network_forward.1} parent=1 // pred_region
      %5757 = vsyncadd [#allocation4], 0
      %s5759 = sshll.u32 [#allocation3], 4
      %s5760 = int_to_ptr.vmem [resolvable:$true] %s5759
      %s5761 = sshll.u32 %s17, 4
      %s5762 = int_to_ptr.hbm [resolvable:$true] %s5761
      %5764 = dma.vmem_to_hbm [thread:$0]  %s5760, 16, %s5762, [#allocation4]
    $region73: #{gat_network_forward.1} parent=1 // pred_fallthru
      _
    // Predicated region
    $region74: #{gat_network_forward.1} parent=1 // pred_check
      _
    $region75: #{gat_network_forward.1} parent=1 // pred_check_branch
      %5766 = sbr.rel (0) target = $region77
    $region76: #{gat_network_forward.1} parent=1 // pred_region
      %5768 = dma.done [#allocation4], 16
    $region77: #{gat_network_forward.1} parent=1 // pred_fallthru
      _
    %5769 = vsyncpa [#allocation4], 1

</llo_original>
